<compile_context>
chip_gen: v6e
topology: v6e:2x2x1
jax: 0.10.0
libtpu: 0.0.40
codegen_flags: <defaults>
</compile_context>

<pallas_src>
import jax
import jax.numpy as jnp
import numpy as np
from jax.experimental import pallas as pl
from jax.experimental.pallas import tpu as pltpu


# ---------------------------------------------------------------------------
# Kernels
# ---------------------------------------------------------------------------
def _enc1_kernel(x_ref, w1_ref, b1_ref, w2_ref, b2_ref, f_ref, max1_ref):
    """mlp_conv_1 over a tile of points + fused running max over tiles.

    x_ref: (1, T, 3) point tile, f_ref: (1, T, C2), max1_ref: (1, 1, C2)
    (revisited across the tile axis -> accumulator).
    """
    x = x_ref[0]                                                           # (T, 3)
    h = jnp.dot(x, w1_ref[...], preferred_element_type=jnp.float32) + b1_ref[...]
    h = jnp.maximum(h, 0.0)                                                # ReLU_0
    f = jnp.dot(h, w2_ref[...], preferred_element_type=jnp.float32) + b2_ref[...]
    f_ref[0] = f                                                           # (T, C2)

    tile_max = jnp.max(f, axis=0, keepdims=True)                           # (1, C2)

    @pl.when(pl.program_id(1) == 0)
    def _():
        max1_ref[0] = tile_max

    @pl.when(pl.program_id(1) > 0)
    def _():
        max1_ref[0] = jnp.maximum(max1_ref[0], tile_max)


def _enc2_kernel(f_ref, gb_ref, w3_ref, w4_ref, b4_ref, max2_ref):
    """mlp_conv_2 over a tile of per-point features + fused running max.

    The global-feature half of the first conv (x_max @ W3_glob + b3) was hoisted
    to the wrapper and arrives as gb_ref (1, 1, H3), one row per batch element.
    """
    h = jnp.dot(f_ref[0], w3_ref[...], preferred_element_type=jnp.float32) + gb_ref[0]
    h = jnp.maximum(h, 0.0)                                                # ReLU_0
    y = jnp.dot(h, w4_ref[...], preferred_element_type=jnp.float32) + b4_ref[...]

    tile_max = jnp.max(y, axis=0, keepdims=True)                           # (1, OUT_C)

    @pl.when(pl.program_id(1) == 0)
    def _():
        max2_ref[0] = tile_max

    @pl.when(pl.program_id(1) > 0)
    def _():
        max2_ref[0] = jnp.maximum(max2_ref[0], tile_max)


# ---------------------------------------------------------------------------
# Wrapper
# ---------------------------------------------------------------------------
def _round_up(v, m):
    return ((v + m - 1) // m) * m


def pcn_encoder_forward(x, params, *, tile_n=1024):
    """x: (B, N, 3) float32.  Returns (B, out_c, 1) like PcnEncoder.forward."""
    B, N, Cin = x.shape
    w1, b1 = params["w1"], params["b1"]            # (3, C1), (1, C1)
    w2, b2 = params["w2"], params["b2"]            # (C1, C2), (1, C2)
    w3l, w3g, b3 = params["w3l"], params["w3g"], params["b3"]   # (C2,H3),(C2,H3),(1,H3)
    w4, b4 = params["w4"], params["b4"]            # (H3, OUT_C), (1, OUT_C)
    C1, C2 = w1.shape[1], w2.shape[1]
    H3, OUT_C = w4.shape[0], w4.shape[1]

    # --- tile / pad the point dimension (max-pool neutral padding) ---------
    tile_eff = _round_up(min(tile_n, _round_up(N, 8)), 8)
    Np = _round_up(N, tile_eff)
    n_tiles = Np // tile_eff
    if Np != N:
        # repeat the last point: pointwise convs give identical features for
        # the duplicates, so every max over N is unchanged.
        pad = jnp.broadcast_to(x[:, N - 1:N, :], (B, Np - N, Cin))
        xp = jnp.concatenate([x, pad], axis=1)
    else:
        xp = x

    cparams = pltpu.CompilerParams(
        dimension_semantics=("parallel", "arbitrary"),
        vmem_limit_bytes=32 * 1024 * 1024,
    )

    # --- pass 1: mlp_conv_1 + global max over points ------------------------
    f, max1 = pl.pallas_call(
        _enc1_kernel,
        out_shape=(
            jax.ShapeDtypeStruct((B, Np, C2), jnp.float32),
            jax.ShapeDtypeStruct((B, 1, C2), jnp.float32),
        ),
        grid=(B, n_tiles),
        in_specs=[
            pl.BlockSpec((1, tile_eff, Cin), lambda b, j: (b, j, 0)),
            pl.BlockSpec(w1.shape, lambda b, j: (0, 0)),
            pl.BlockSpec(b1.shape, lambda b, j: (0, 0)),
            pl.BlockSpec(w2.shape, lambda b, j: (0, 0)),
            pl.BlockSpec(b2.shape, lambda b, j: (0, 0)),
        ],
        out_specs=(
            pl.BlockSpec((1, tile_eff, C2), lambda b, j: (b, j, 0)),
            pl.BlockSpec((1, 1, C2), lambda b, j: (b, 0, 0)),   # accumulator over j
        ),
        compiler_params=cparams,
    )(xp, w1, b1, w2, b2)

    # --- glue: hoist the global-feature half of mlp_conv_2's first conv -----
    # (tiny (B,C2)@(C2,H3) GEMM; left to XLA on purpose -- no point in a
    #  Pallas call and it removes redundant per-tile M=1 matmuls.)
    glob_bias = jnp.dot(max1[:, 0, :], w3g) + b3               # (B, H3)
    glob_bias = glob_bias[:, None, :].astype(jnp.float32)      # (B, 1, H3)

    # --- pass 2: mlp_conv_2 + global max over points -------------------------
    max2 = pl.pallas_call(
        _enc2_kernel,
        out_shape=jax.ShapeDtypeStruct((B, 1, OUT_C), jnp.float32),
        grid=(B, n_tiles),
        in_specs=[
            pl.BlockSpec((1, tile_eff, C2), lambda b, j: (b, j, 0)),
            pl.BlockSpec((1, 1, H3), lambda b, j: (b, 0, 0)),
            pl.BlockSpec(w3l.shape, lambda b, j: (0, 0)),
            pl.BlockSpec(w4.shape, lambda b, j: (0, 0)),
            pl.BlockSpec(b4.shape, lambda b, j: (0, 0)),
        ],
        out_specs=pl.BlockSpec((1, 1, OUT_C), lambda b, j: (b, 0, 0)),  # accumulator
        compiler_params=cparams,
    )(f, glob_bias, w3l, w4, b4)

    # PyTorch returns (B, out_c, 1)
    return jnp.transpose(max2, (0, 2, 1))


# ---------------------------------------------------------------------------
# Deterministic parameter init (synthetic; shapes follow the module structure)
# ---------------------------------------------------------------------------
def init_params(key, *, in_c=3, c1=128, c2=256, h3=512, out_c=1024):
    def dense(k, fan_in, fan_out):
        kw, kb = jax.random.split(k)
        w = jax.random.normal(kw, (fan_in, fan_out), jnp.float32) / np.sqrt(fan_in)
        b = 0.1 * jax.random.normal(kb, (1, fan_out), jnp.float32)
        return w, b

    ks = jax.random.split(key, 4)
    p = {}
    # mlp_conv_1: Conv1d(3->c1), ReLU, Conv1d(c1->c2)
    p["w1"], p["b1"] = dense(ks[0], in_c, c1)
    p["w2"], p["b2"] = dense(ks[1], c1, c2)
    # mlp_conv_2: Conv1d(2*c2->h3), ReLU, Conv1d(h3->out_c)
    w3, p["b3"] = dense(ks[2], 2 * c2, h3)
    p["w3l"] = w3[:c2, :]      # channels that multiply the per-point features
    p["w3g"] = w3[c2:, :]      # channels that multiply the broadcast x_max
    p["w4"], p["b4"] = dense(ks[3], h3, out_c)
    return p


# ---------------------------------------------------------------------------
# Pure-JAX reference (mirrors the PyTorch forward literally) for validation
# ---------------------------------------------------------------------------
def reference_forward(x, params):
    B, N, _ = x.shape
    h = jnp.maximum(x @ params["w1"] + params["b1"], 0.0)
    f = h @ params["w2"] + params["b2"]                                # (B, N, C2)
    f_max = jnp.max(f, axis=1, keepdims=True)                          # (B, 1, C2)
    feat = jnp.concatenate(
        [f, jnp.broadcast_to(f_max, f.shape)], axis=-1)                # (B, N, 2*C2)
    w3 = jnp.concatenate([params["w3l"], params["w3g"]], axis=0)
    h2 = jnp.maximum(feat @ w3 + params["b3"], 0.0)
    y = h2 @ params["w4"] + params["b4"]                               # (B, N, OUT_C)
    y_max = jnp.max(y, axis=1, keepdims=True)                          # (B, 1, OUT_C)
    return jnp.transpose(y_max, (0, 2, 1))                             # (B, OUT_C, 1)


if __name__ == "__main__":
    # Small test consistent with the module: default channel widths
    # (3 -> 128 -> 256, cat 512 -> 512 -> 1024) but few points / small batch.
    B, N, IN_C = 2, 2000, 3          # N deliberately NOT a tile multiple
    C1, C2, H3, OUT_C = 128, 256, 512, 1024

    key = jax.random.PRNGKey(0)
    kx, kp = jax.random.split(key)
    x = jax.random.normal(kx, (B, N, IN_C), jnp.float32)
    params = init_params(kp, in_c=IN_C, c1=C1, c2=C2, h3=H3, out_c=OUT_C)

    ref = reference_forward(x, params)

    # default tiling (tile_n=1024 -> pads 2000 -> 2048, 2 tiles per batch elem)
    out = pcn_encoder_forward(x, params)
    jax.block_until_ready(out)
    assert out.shape == (B, OUT_C, 1)
    np.testing.assert_allclose(np.asarray(out), np.asarray(ref), rtol=1e-2, atol=1e-2)

    # smaller tiles (exercises multi-tile max accumulation + padding path)
    out_small = pcn_encoder_forward(x, params, tile_n=512)
    jax.block_until_ready(out_small)
    np.testing.assert_allclose(np.asarray(out_small), np.asarray(ref), rtol=1e-2, atol=1e-2)

    print("KERNEL_OK")
</pallas_src>

<mosaic_0001>
module attributes {stable_mosaic.version = 11 : i64} {
  func.func @_enc1_kernel(%arg0: i32, %arg1: i32, %arg2: memref<1x1024x3xf32, #tpu.memory_space<vmem>>, %arg3: memref<3x128xf32, #tpu.memory_space<vmem>>, %arg4: memref<1x128xf32, #tpu.memory_space<vmem>>, %arg5: memref<128x256xf32, #tpu.memory_space<vmem>>, %arg6: memref<1x256xf32, #tpu.memory_space<vmem>>, %arg7: memref<1x1024x256xf32, #tpu.memory_space<vmem>>, %arg8: memref<1x1x256xf32, #tpu.memory_space<vmem>>) attributes {dimension_semantics = [#tpu.dimension_semantics<parallel>, #tpu.dimension_semantics<arbitrary>], iteration_bounds = array<i64: 2, 2>, scalar_prefetch = 0 : i64, scratch_operands = 0 : i64, tpu.core_type = #tpu.core_type<tc>, window_params = [{transform_indices = @transform_0, window_bounds = array<i64: 1, 1024, 3>}, {pipeline_mode = #tpu.pipeline_mode<synchronous>, transform_indices = @transform_1, window_bounds = array<i64: 3, 128>}, {pipeline_mode = #tpu.pipeline_mode<synchronous>, transform_indices = @transform_2, window_bounds = array<i64: 1, 128>}, {pipeline_mode = #tpu.pipeline_mode<synchronous>, transform_indices = @transform_3, window_bounds = array<i64: 128, 256>}, {pipeline_mode = #tpu.pipeline_mode<synchronous>, transform_indices = @transform_4, window_bounds = array<i64: 1, 256>}, {transform_indices = @transform_5, window_bounds = array<i64: 1, 1024, 256>}, {transform_indices = @transform_6, window_bounds = array<i64: 1, 1, 256>}]} {
    %c0 = arith.constant 0 : index
    %c0_0 = arith.constant 0 : index
    %c0_1 = arith.constant 0 : index
    %0 = vector.load %arg2[%c0, %c0_0, %c0_1] : memref<1x1024x3xf32, #tpu.memory_space<vmem>>, vector<1x1024x3xf32>
    %1 = vector.shape_cast %0 : vector<1x1024x3xf32> to vector<1024x3xf32>
    %c0_2 = arith.constant 0 : index
    %c0_3 = arith.constant 0 : index
    %2 = vector.load %arg3[%c0_2, %c0_3] : memref<3x128xf32, #tpu.memory_space<vmem>>, vector<3x128xf32>
    %cst = arith.constant dense<0.000000e+00> : vector<1024x128xf32>
    %3 = tpu.matmul %1, %2, %cst {dimension_numbers = #tpu.dot_dimension_numbers<[1], [0], [0], [1], [0, 0, 1, 1], [], []>} : vector<1024x3xf32>, vector<3x128xf32>, vector<1024x128xf32> -> vector<1024x128xf32>
    %c0_4 = arith.constant 0 : index
    %c0_5 = arith.constant 0 : index
    %4 = vector.load %arg4[%c0_4, %c0_5] : memref<1x128xf32, #tpu.memory_space<vmem>>, vector<1x128xf32>
    %5 = vector.broadcast %4 : vector<1x128xf32> to vector<1024x128xf32>
    %6 = arith.addf %3, %5 : vector<1024x128xf32>
    %cst_6 = arith.constant 0.000000e+00 : f32
    %7 = vector.broadcast %cst_6 : f32 to vector<1024x128xf32>
    %8 = arith.maximumf %6, %7 : vector<1024x128xf32>
    %c0_7 = arith.constant 0 : index
    %c0_8 = arith.constant 0 : index
    %9 = vector.load %arg5[%c0_7, %c0_8] : memref<128x256xf32, #tpu.memory_space<vmem>>, vector<128x256xf32>
    %cst_9 = arith.constant dense<0.000000e+00> : vector<1024x256xf32>
    %10 = tpu.matmul %8, %9, %cst_9 {dimension_numbers = #tpu.dot_dimension_numbers<[1], [0], [0], [1], [0, 0, 1, 1], [], []>} : vector<1024x128xf32>, vector<128x256xf32>, vector<1024x256xf32> -> vector<1024x256xf32>
    %c0_10 = arith.constant 0 : index
    %c0_11 = arith.constant 0 : index
    %11 = vector.load %arg6[%c0_10, %c0_11] : memref<1x256xf32, #tpu.memory_space<vmem>>, vector<1x256xf32>
    %12 = vector.broadcast %11 : vector<1x256xf32> to vector<1024x256xf32>
    %13 = arith.addf %10, %12 : vector<1024x256xf32>
    %c0_12 = arith.constant 0 : index
    %c0_13 = arith.constant 0 : index
    %c0_14 = arith.constant 0 : index
    %14 = vector.load %arg7[%c0_12, %c0_13, %c0_14] : memref<1x1024x256xf32, #tpu.memory_space<vmem>>, vector<1x1024x256xf32>
    %15 = vector.shape_cast %14 : vector<1x1024x256xf32> to vector<1024x256xf32>
    %16 = vector.shape_cast %13 : vector<1024x256xf32> to vector<1x1024x256xf32>
    tpu.vector_store %arg7[%c0_12, %c0_13, %c0_14], %16 {strides = array<i32>} : memref<1x1024x256xf32, #tpu.memory_space<vmem>>, vector<1x1024x256xf32>,
    %cst_15 = arith.constant dense<0xFF800000> : vector<256xf32>
    %17 = vector.multi_reduction <maximumf>, %13, %cst_15 [0] : vector<1024x256xf32> to vector<256xf32>
    %18 = vector.shape_cast %17 : vector<256xf32> to vector<1x256xf32>
    %c0_i32 = arith.constant 0 : i32
    %19 = arith.cmpi eq, %arg1, %c0_i32 : i32
    %20 = arith.extui %19 : i1 to i32
    %c0_i32_16 = arith.constant 0 : i32
    %21 = arith.cmpi ne, %20, %c0_i32_16 : i32
    scf.if %21 {
      %c0_19 = arith.constant 0 : index
      %c0_20 = arith.constant 0 : index
      %c0_21 = arith.constant 0 : index
      %25 = vector.load %arg8[%c0_19, %c0_20, %c0_21] : memref<1x1x256xf32, #tpu.memory_space<vmem>>, vector<1x1x256xf32>
      %26 = vector.shape_cast %25 : vector<1x1x256xf32> to vector<1x256xf32>
      %27 = vector.shape_cast %18 : vector<1x256xf32> to vector<1x1x256xf32>
      tpu.vector_store %arg8[%c0_19, %c0_20, %c0_21], %27 {strides = array<i32>} : memref<1x1x256xf32, #tpu.memory_space<vmem>>, vector<1x1x256xf32>,
    } else {
    }
    %c0_i32_17 = arith.constant 0 : i32
    %22 = arith.cmpi sgt, %arg1, %c0_i32_17 : i32
    %23 = arith.extui %22 : i1 to i32
    %c0_i32_18 = arith.constant 0 : i32
    %24 = arith.cmpi ne, %23, %c0_i32_18 : i32
    scf.if %24 {
      %c0_19 = arith.constant 0 : index
      %c0_20 = arith.constant 0 : index
      %c0_21 = arith.constant 0 : index
      %25 = vector.load %arg8[%c0_19, %c0_20, %c0_21] : memref<1x1x256xf32, #tpu.memory_space<vmem>>, vector<1x1x256xf32>
      %26 = vector.shape_cast %25 : vector<1x1x256xf32> to vector<1x256xf32>
      %27 = arith.maximumf %26, %18 : vector<1x256xf32>
      %c0_22 = arith.constant 0 : index
      %c0_23 = arith.constant 0 : index
      %c0_24 = arith.constant 0 : index
      %28 = vector.load %arg8[%c0_22, %c0_23, %c0_24] : memref<1x1x256xf32, #tpu.memory_space<vmem>>, vector<1x1x256xf32>
      %29 = vector.shape_cast %28 : vector<1x1x256xf32> to vector<1x256xf32>
      %30 = vector.shape_cast %27 : vector<1x256xf32> to vector<1x1x256xf32>
      tpu.vector_store %arg8[%c0_22, %c0_23, %c0_24], %30 {strides = array<i32>} : memref<1x1x256xf32, #tpu.memory_space<vmem>>, vector<1x1x256xf32>,
    } else {
    }
    return
  }
  func.func @transform_0(%arg0: i32, %arg1: i32) -> (i32, i32, i32) {
    %c0_i32 = arith.constant 0 : i32
    %c0_i32_0 = arith.constant 0 : i32
    return %arg0, %arg1, %c0_i32 : i32, i32, i32
  }
  func.func @transform_1(%arg0: i32, %arg1: i32) -> (i32, i32) {
    %c0_i32 = arith.constant 0 : i32
    %c0_i32_0 = arith.constant 0 : i32
    %c0_i32_1 = arith.constant 0 : i32
    return %c0_i32, %c0_i32_0 : i32, i32
  }
  func.func @transform_2(%arg0: i32, %arg1: i32) -> (i32, i32) {
    %c0_i32 = arith.constant 0 : i32
    %c0_i32_0 = arith.constant 0 : i32
    %c0_i32_1 = arith.constant 0 : i32
    return %c0_i32, %c0_i32_0 : i32, i32
  }
  func.func @transform_3(%arg0: i32, %arg1: i32) -> (i32, i32) {
    %c0_i32 = arith.constant 0 : i32
    %c0_i32_0 = arith.constant 0 : i32
    %c0_i32_1 = arith.constant 0 : i32
    return %c0_i32, %c0_i32_0 : i32, i32
  }
  func.func @transform_4(%arg0: i32, %arg1: i32) -> (i32, i32) {
    %c0_i32 = arith.constant 0 : i32
    %c0_i32_0 = arith.constant 0 : i32
    %c0_i32_1 = arith.constant 0 : i32
    return %c0_i32, %c0_i32_0 : i32, i32
  }
  func.func @transform_5(%arg0: i32, %arg1: i32) -> (i32, i32, i32) {
    %c0_i32 = arith.constant 0 : i32
    %c0_i32_0 = arith.constant 0 : i32
    return %arg0, %arg1, %c0_i32 : i32, i32, i32
  }
  func.func @transform_6(%arg0: i32, %arg1: i32) -> (i32, i32, i32) {
    %c0_i32 = arith.constant 0 : i32
    %c0_i32_0 = arith.constant 0 : i32
    %c0_i32_1 = arith.constant 0 : i32
    return %arg0, %c0_i32, %c0_i32_0 : i32, i32, i32
  }
}

</mosaic_0001>

<llo_original>
// kernel: tpu_custom_call.1
$region0: #{tpu_custom_call.1}
  #allocation0 [shape = 'u32[]', space=smem, size = 0x4, offset = 0x4, fixed_abs, tag = 'smem constant byte address 0x4 - core index']
  #allocation1 [shape = 'u32[144,128]{1,0:T(1,128)}', space=vmem, size = 0x12000, scoped, tag = 'internal scratch']
  %s0 = inlined_call_operand.vmem [shape: f32[2,2048,3], index: 0, kind: input, shape index: {}]
  %s1 = inlined_call_operand.hbm [shape: f32[3,128], index: 1, kind: input, shape index: {}]
  %s2 = inlined_call_operand.hbm [shape: f32[1,128], index: 2, kind: input, shape index: {}]
  %s3 = inlined_call_operand.hbm [shape: f32[128,256], index: 3, kind: input, shape index: {}]
  %s4 = inlined_call_operand.hbm [shape: f32[1,256], index: 4, kind: input, shape index: {}]
  %s5 = inlined_call_operand.hbm [shape: f32[2,2048,256], index: 5, kind: output, shape index: {0}]
  %s6 = inlined_call_operand.hbm [shape: f32[2,1,256], index: 6, kind: output, shape index: {1}]
  %7 = xla_tuple %s5, %s6
  %s8 = sld [smem:[#allocation0]]
  $region85: #{tpu_custom_call.1} parent=0
    _
  %s10 = ssub.s32 1, %s8
  %s11 = scalar_select 0, %s10, %s8
  $region1: #{tpu_custom_call.1} parent=0
    #allocation2 [shape = 'u8[2048]{0}', space=vmem, size = 0x800, scoped, tag = 'input window, operand 1, single buffered']
    #allocation3 [shape = 's32[2]{0}', space=sflag, size = 0x8, scoped, tag = 'scoped memory for tpu_custom_call.1']
    #allocation4 [shape = 's32[2]{0}', space=sflag, size = 0x8, scoped, tag = 'scoped memory for tpu_custom_call.1']
    #allocation5 [shape = 'u8[512]{0}', space=vmem, size = 0x400, scoped, tag = 'input window, operand 2, single buffered']
    #allocation6 [shape = 's32[1]{0}', space=sflag, size = 0x4, scoped, tag = 'scoped memory for tpu_custom_call.1']
    #allocation7 [shape = 'u8[131072]{0}', space=vmem, size = 0x20000, scoped, tag = 'input window, operand 3, single buffered']
    #allocation8 [shape = 'u8[1024]{0}', space=vmem, size = 0x400, scoped, tag = 'input window, operand 4, single buffered']
    #allocation9 [shape = 's32[1]{0}', space=sflag, size = 0x4, scoped, tag = 'scoped memory for tpu_custom_call.1']
    #allocation10 [shape = 'u8[2097152]{0}', space=vmem, size = 0x200000, scoped, tag = 'output window, operand 0']
    #allocation11 [shape = 'u8[2048]{0}', space=vmem, size = 0x800, scoped, tag = 'output window, operand 1']
    #allocation12 [shape = 's32[2]{0}', space=sflag, size = 0x8, scoped, tag = 'scoped memory for tpu_custom_call.1']
    %12 = vsyncpa [#allocation3], 0
    %13 = vsyncpa [#allocation6], 0
    %14 = vsyncpa [#allocation9], 0
    %15 = vsyncpa [#allocation4], 0
    %s16 = scalar_lea.sflag [#allocation4], 1
    %17 = vsyncpa %s16, 0
    %18 = vsyncpa [#allocation12], 0
    %s19 = scalar_lea.sflag [#allocation12], 1
    %20 = vsyncpa %s19, 0
    loop: start=0, step=1, limit=6
    $region2: #{tpu_custom_call.1} parent=1 // loop_pre_header
      _
    $region3: #{tpu_custom_call.1} parent=1 // loop_header
      %s22 = sphi 0, %s26
      %p23 = scmp.ge.s32.totalorder %s22, 6
      %s29 = sphi 0, %s41
      %s30 = sphi 0, %s37
      %s31 = sphi 0, %s29
      %s32 = sphi 0, %s30
      %s33 = sphi 0, %s31
      %s34 = sphi 0, %s32
      %s46 = sphi 0, %s48
      %s49 = sphi 0, %s46
      %s50 = sphi 0, %s49
      %s66 = sphi 0, %s50
      %s70 = sphi 0, %s70
      %s72 = sphi 0, %s70
      %s73 = sphi 0, %s72
      %s87 = sphi 0, %s73
      %s91 = sphi 0, %s91
      %s93 = sphi 0, %s91
      %s94 = sphi 0, %s93
      %s108 = sphi 0, %s94
      %s112 = sphi 0, %s112
      %s114 = sphi 0, %s112
      %s115 = sphi 0, %s114
      %s129 = sphi 0, %s115
      %s133 = sphi 0, %s133
      %s135 = sphi 0, %s133
      %s136 = sphi 0, %s135
      %s150 = sphi 0, %s136
      %s158 = sphi 0, %s160
      %s161 = sphi 0, %s158
      %s162 = sphi 0, %s161
      %s178 = sphi 0, %s162
      %s184 = sphi 0, %s186
      %s187 = sphi 0, %s184
      %s188 = sphi 0, %s187
      %s204 = sphi 0, %s188
    $region4: #{tpu_custom_call.1} parent=1 // loop_header_branch
      %25 = sbr.rel (%p23) target = $region8
    $region5: #{tpu_custom_call.1} parent=1 // loop_body
      %s27 = ssub.s32 %s22, 1
      %s28 = ssub.s32 %s22, 2
      %s35 = sadd.s32 1, %s30
      %p36 = scmp.ge.s32.totalorder %s35, 2
      %s37 = scalar_select %p36, 0, %s35
      %s38 = sadd.s32 1, %s29
      %s39 = scalar_select %p36, %s38, %s29
      %p40 = scmp.ge.s32.totalorder %s39, 2
      %s41 = scalar_select %p40, 0, %s39
      %s42 = ssub.s32 %s29, %s41
      %s43 = ssub.s32 %s30, %s37
      %s44 = sor.u32 %s42, %s43
      %p45 = scmp.eq.s32.totalorder %s44, 0
      %s47 = sadd.s32 %s46, 1
      %s48 = scalar_select %p45, %s46, %s47
      %p51 = pneg %p45
      %p52 = scmp.eq.s32.totalorder %s22, 3
      %p53 = por %p51, %p52
      %p54 = scmp.ne.s32.totalorder %s46, %s49
      %p55 = scmp.eq.s32.totalorder %s22, 0
      %p56 = por %p54, %p55
      %p57 = scmp.ne.s32.totalorder %s46, %s49
      %p58 = scmp.eq.s32.totalorder %s27, 3
      %p59 = por %p57, %p58
      %p60 = scmp.ne.s32.totalorder %s49, %s50
      %p61 = scmp.eq.s32.totalorder %s27, 0
      %p62 = por %p60, %p61
      %p63 = scmp.ne.s32.totalorder %s49, %s50
      %p64 = scmp.eq.s32.totalorder %s28, 3
      %p65 = por %p63, %p64
      %p67 = scmp.ne.s32.totalorder %s50, %s66
      %p68 = scmp.eq.s32.totalorder %s28, 0
      %p69 = por %p67, %p68
      %s71 = sadd.s32 %s70, 1
      %p74 = scmp.eq.s32.totalorder %s22, 3
      %p75 = scmp.ne.s32.totalorder %s70, %s72
      %p76 = scmp.eq.s32.totalorder %s22, 0
      %p77 = por %p75, %p76
      %p78 = scmp.ne.s32.totalorder %s70, %s72
      %p79 = scmp.eq.s32.totalorder %s27, 3
      %p80 = por %p78, %p79
      %p81 = scmp.ne.s32.totalorder %s72, %s73
      %p82 = scmp.eq.s32.totalorder %s27, 0
      %p83 = por %p81, %p82
      %p84 = scmp.ne.s32.totalorder %s72, %s73
      %p85 = scmp.eq.s32.totalorder %s28, 3
      %p86 = por %p84, %p85
      %p88 = scmp.ne.s32.totalorder %s73, %s87
      %p89 = scmp.eq.s32.totalorder %s28, 0
      %p90 = por %p88, %p89
      %s92 = sadd.s32 %s91, 1
      %p95 = scmp.eq.s32.totalorder %s22, 3
      %p96 = scmp.ne.s32.totalorder %s91, %s93
      %p97 = scmp.eq.s32.totalorder %s22, 0
      %p98 = por %p96, %p97
      %p99 = scmp.ne.s32.totalorder %s91, %s93
      %p100 = scmp.eq.s32.totalorder %s27, 3
      %p101 = por %p99, %p100
      %p102 = scmp.ne.s32.totalorder %s93, %s94
      %p103 = scmp.eq.s32.totalorder %s27, 0
      %p104 = por %p102, %p103
      %p105 = scmp.ne.s32.totalorder %s93, %s94
      %p106 = scmp.eq.s32.totalorder %s28, 3
      %p107 = por %p105, %p106
      %p109 = scmp.ne.s32.totalorder %s94, %s108
      %p110 = scmp.eq.s32.totalorder %s28, 0
      %p111 = por %p109, %p110
      %s113 = sadd.s32 %s112, 1
      %p116 = scmp.eq.s32.totalorder %s22, 3
      %p117 = scmp.ne.s32.totalorder %s112, %s114
      %p118 = scmp.eq.s32.totalorder %s22, 0
      %p119 = por %p117, %p118
      %p120 = scmp.ne.s32.totalorder %s112, %s114
      %p121 = scmp.eq.s32.totalorder %s27, 3
      %p122 = por %p120, %p121
      %p123 = scmp.ne.s32.totalorder %s114, %s115
      %p124 = scmp.eq.s32.totalorder %s27, 0
      %p125 = por %p123, %p124
      %p126 = scmp.ne.s32.totalorder %s114, %s115
      %p127 = scmp.eq.s32.totalorder %s28, 3
      %p128 = por %p126, %p127
      %p130 = scmp.ne.s32.totalorder %s115, %s129
      %p131 = scmp.eq.s32.totalorder %s28, 0
      %p132 = por %p130, %p131
      %s134 = sadd.s32 %s133, 1
      %p137 = scmp.eq.s32.totalorder %s22, 3
      %p138 = scmp.ne.s32.totalorder %s133, %s135
      %p139 = scmp.eq.s32.totalorder %s22, 0
      %p140 = por %p138, %p139
      %p141 = scmp.ne.s32.totalorder %s133, %s135
      %p142 = scmp.eq.s32.totalorder %s27, 3
      %p143 = por %p141, %p142
      %p144 = scmp.ne.s32.totalorder %s135, %s136
      %p145 = scmp.eq.s32.totalorder %s27, 0
      %p146 = por %p144, %p145
      %p147 = scmp.ne.s32.totalorder %s135, %s136
      %p148 = scmp.eq.s32.totalorder %s28, 3
      %p149 = por %p147, %p148
      %p151 = scmp.ne.s32.totalorder %s136, %s150
      %p152 = scmp.eq.s32.totalorder %s28, 0
      %p153 = por %p151, %p152
      %s154 = ssub.s32 %s29, %s41
      %s155 = ssub.s32 %s30, %s37
      %s156 = sor.u32 %s154, %s155
      %p157 = scmp.eq.s32.totalorder %s156, 0
      %s159 = sadd.s32 %s158, 1
      %s160 = scalar_select %p157, %s158, %s159
      %p163 = pneg %p157
      %p164 = scmp.eq.s32.totalorder %s22, 3
      %p165 = por %p163, %p164
      %p166 = scmp.ne.s32.totalorder %s158, %s161
      %p167 = scmp.eq.s32.totalorder %s22, 0
      %p168 = por %p166, %p167
      %p169 = scmp.ne.s32.totalorder %s158, %s161
      %p170 = scmp.eq.s32.totalorder %s27, 3
      %p171 = por %p169, %p170
      %p172 = scmp.ne.s32.totalorder %s161, %s162
      %p173 = scmp.eq.s32.totalorder %s27, 0
      %p174 = por %p172, %p173
      %p175 = scmp.ne.s32.totalorder %s161, %s162
      %p176 = scmp.eq.s32.totalorder %s28, 3
      %p177 = por %p175, %p176
      %p179 = scmp.ne.s32.totalorder %s162, %s178
      %p180 = scmp.eq.s32.totalorder %s28, 0
      %p181 = por %p179, %p180
      %s182 = ssub.s32 %s29, %s41
      %p183 = scmp.eq.s32.totalorder %s182, 0
      %s185 = sadd.s32 %s184, 1
      %s186 = scalar_select %p183, %s184, %s185
      %p189 = pneg %p183
      %p190 = scmp.eq.s32.totalorder %s22, 3
      %p191 = por %p189, %p190
      %p192 = scmp.ne.s32.totalorder %s184, %s187
      %p193 = scmp.eq.s32.totalorder %s22, 0
      %p194 = por %p192, %p193
      %p195 = scmp.ne.s32.totalorder %s184, %s187
      %p196 = scmp.eq.s32.totalorder %s27, 3
      %p197 = por %p195, %p196
      %p198 = scmp.ne.s32.totalorder %s187, %s188
      %p199 = scmp.eq.s32.totalorder %s27, 0
      %p200 = por %p198, %p199
      %p201 = scmp.ne.s32.totalorder %s187, %s188
      %p202 = scmp.eq.s32.totalorder %s28, 3
      %p203 = por %p201, %p202
      %p205 = scmp.ne.s32.totalorder %s188, %s204
      %p206 = scmp.eq.s32.totalorder %s28, 0
      %p207 = por %p205, %p206
      %p208 = scmp.le.s32.totalorder 1, %s22
      %p209 = scmp.lt.s32.totalorder %s22, 5
      %p210 = pnand %p208, %p209
      %p211 = pneg %p210
      // Predicated region
      $region9: #{tpu_custom_call.1} parent=5 // pred_check
        _
      $region10: #{tpu_custom_call.1} parent=5 // pred_check_branch
        %213 = sbr.rel (%p210) target = $region12
      $region11: #{tpu_custom_call.1} parent=5 // pred_region
        %s214 = ssub.s32 %s22, 1
        // Predicated region
        $region13: #{tpu_custom_call.1} parent=11 // pred_check
          %p215 = pneg %p83
        $region14: #{tpu_custom_call.1} parent=11 // pred_check_branch
          %217 = sbr.rel (%p215) target = $region16
        $region15: #{tpu_custom_call.1} parent=11 // pred_region
          %s219 = ssub.s32 64, 64
          %220 = vsyncadd [#allocation3], %s219
          %s222 = sshll.u32 [#allocation2], 4
          %s223 = int_to_ptr.vmem [resolvable:$true] %s222
          %225 = dma.hbm_to_vmem [thread:$0]  %s1, 64, %s223, [#allocation3]
        $region16: #{tpu_custom_call.1} parent=11 // pred_fallthru
          _
        // Predicated region
        $region17: #{tpu_custom_call.1} parent=11 // pred_check
          %p226 = pneg %p104
        $region18: #{tpu_custom_call.1} parent=11 // pred_check_branch
          %228 = sbr.rel (%p226) target = $region20
        $region19: #{tpu_custom_call.1} parent=11 // pred_region
          %s230 = ssub.s32 16, 16
          %231 = vsyncadd [#allocation6], %s230
          %s233 = sshll.u32 [#allocation5], 4
          %s234 = int_to_ptr.vmem [resolvable:$true] %s233
          %236 = dma.hbm_to_vmem [thread:$0]  %s2, 16, %s234, [#allocation6]
        $region20: #{tpu_custom_call.1} parent=11 // pred_fallthru
          _
        // Predicated region
        $region21: #{tpu_custom_call.1} parent=11 // pred_check
          %p237 = pneg %p125
        $region22: #{tpu_custom_call.1} parent=11 // pred_check_branch
          %239 = sbr.rel (%p237) target = $region24
        $region23: #{tpu_custom_call.1} parent=11 // pred_region
          %s241 = ssub.s32 4096, 4096
          %242 = vsyncadd [#allocation6], %s241
          %s243 = sshll.u32 [#allocation7], 4
          %s244 = int_to_ptr.vmem [resolvable:$true] %s243
          %249 = dma.hbm_to_vmem [thread:$0]  %s3, 4096, %s244, [#allocation6], 256, 256, 16
        $region24: #{tpu_custom_call.1} parent=11 // pred_fallthru
          _
        // Predicated region
        $region25: #{tpu_custom_call.1} parent=11 // pred_check
          %p250 = pneg %p146
        $region26: #{tpu_custom_call.1} parent=11 // pred_check_branch
          %252 = sbr.rel (%p250) target = $region28
        $region27: #{tpu_custom_call.1} parent=11 // pred_region
          %s254 = ssub.s32 32, 32
          %255 = vsyncadd [#allocation9], %s254
          %s257 = sshll.u32 [#allocation8], 4
          %s258 = int_to_ptr.vmem [resolvable:$true] %s257
          %260 = dma.hbm_to_vmem [thread:$0]  %s4, 32, %s258, [#allocation9]
        $region28: #{tpu_custom_call.1} parent=11 // pred_fallthru
          _
      $region12: #{tpu_custom_call.1} parent=5 // pred_fallthru
        _
      %p261 = scmp.lt.s32.totalorder %s22, 4
      // Predicated region
      $region29: #{tpu_custom_call.1} parent=5 // pred_check
        %p262 = pneg %p261
      $region30: #{tpu_custom_call.1} parent=5 // pred_check_branch
        %264 = sbr.rel (%p262) target = $region32
      $region31: #{tpu_custom_call.1} parent=5 // pred_region
        // Predicated region
        $region33: #{tpu_custom_call.1} parent=31 // pred_check
          %p265 = pneg %p56
        $region34: #{tpu_custom_call.1} parent=31 // pred_check_branch
          %267 = sbr.rel (%p265) target = $region36
        $region35: #{tpu_custom_call.1} parent=31 // pred_region
          %s268 = smul.u32 128, %s30
          %p269 = scmp.lt.s32.totalorder %s29, 1
          %s270 = scalar_select %p269, %s29, 1
          %p271 = scmp.lt.s32.totalorder %s268, 255
          %s272 = scalar_select %p271, %s268, 255
          %s273 = smul.addr %s270, 256
          %s274 = sadd.s32 %s272, %s273
          %s275 = smul.addr %s274, 8
          %s276 = scalar_lea.vmem %s0, %s275
          %s277 = smul.u32 128, %s30
        $region36: #{tpu_custom_call.1} parent=31 // pred_fallthru
          _
      $region32: #{tpu_custom_call.1} parent=5 // pred_fallthru
        _
      %p278 = scmp.le.s32.totalorder 1, %s22
      %p279 = scmp.lt.s32.totalorder %s22, 5
      %p280 = pnand %p278, %p279
      %p281 = pneg %p280
      // Predicated region
      $region37: #{tpu_custom_call.1} parent=5 // pred_check
        _
      $region38: #{tpu_custom_call.1} parent=5 // pred_check_branch
        %283 = sbr.rel (%p280) target = $region40
      $region39: #{tpu_custom_call.1} parent=5 // pred_region
        %s284 = ssub.s32 %s22, 1
        // Predicated region
        $region41: #{tpu_custom_call.1} parent=39 // pred_check
          %p285 = pneg %p83
        $region42: #{tpu_custom_call.1} parent=39 // pred_check_branch
          %287 = sbr.rel (%p285) target = $region44
        $region43: #{tpu_custom_call.1} parent=39 // pred_region
          %288 = dma.done [#allocation3], 64
        $region44: #{tpu_custom_call.1} parent=39 // pred_fallthru
          _
        // Predicated region
        $region45: #{tpu_custom_call.1} parent=39 // pred_check
          %p289 = pneg %p104
        $region46: #{tpu_custom_call.1} parent=39 // pred_check_branch
          %291 = sbr.rel (%p289) target = $region48
        $region47: #{tpu_custom_call.1} parent=39 // pred_region
          %292 = dma.done [#allocation6], 16
        $region48: #{tpu_custom_call.1} parent=39 // pred_fallthru
          _
        // Predicated region
        $region49: #{tpu_custom_call.1} parent=39 // pred_check
          %p293 = pneg %p125
        $region50: #{tpu_custom_call.1} parent=39 // pred_check_branch
          %295 = sbr.rel (%p293) target = $region52
        $region51: #{tpu_custom_call.1} parent=39 // pred_region
          %296 = dma.done [#allocation6], 4096
        $region52: #{tpu_custom_call.1} parent=39 // pred_fallthru
          _
        // Predicated region
        $region53: #{tpu_custom_call.1} parent=39 // pred_check
          %p297 = pneg %p146
        $region54: #{tpu_custom_call.1} parent=39 // pred_check_branch
          %299 = sbr.rel (%p297) target = $region56
        $region55: #{tpu_custom_call.1} parent=39 // pred_region
          %300 = dma.done [#allocation9], 32
        $region56: #{tpu_custom_call.1} parent=39 // pred_fallthru
          _
        %s301 = smul.u32 128, %s32
        %p302 = scmp.lt.s32.totalorder %s31, 1
        %s303 = scalar_select %p302, %s31, 1
        %p304 = scmp.lt.s32.totalorder %s301, 255
        %s305 = scalar_select %p304, %s301, 255
        %s306 = smul.addr %s303, 256
        %s307 = sadd.s32 %s305, %s306
        %s308 = smul.addr %s307, 8
        %s309 = scalar_lea.vmem %s0, %s308
        %p310 = pneg %p62
        %p311 = pneg %p59
        %p312 = pneg %p83
        %p313 = pneg %p80
        %p314 = pneg %p104
        %p315 = pneg %p101
        %p316 = pneg %p125
        %p317 = pneg %p122
        %p318 = pneg %p146
        %p319 = pneg %p143
        %p320 = pneg %p174
        %p321 = pneg %p171
        %s322 = sand.u32 %s161, 1
        %s323 = scalar_lea.sflag [#allocation4], %s322
        %s324 = sand.u32 %s161, 1
        %s325 = smul.addr %s324, 2048
        %s326 = scalar_lea.vmem [#allocation10], %s325
        %p327 = pneg %p200
        %p328 = pneg %p197
        %s329 = sand.u32 %s187, 1
        %s330 = scalar_lea.sflag [#allocation12], %s329
        %s331 = sand.u32 %s187, 1
        %s332 = smul.addr %s331, 2
        %s333 = scalar_lea.vmem [#allocation11], %s332
        %s334 = smul.u32 128, %s32
        %p335 = scmp.lt.s32.totalorder %s31, 1
        %s336 = scalar_select %p335, %s31, 1
        %p337 = scmp.lt.s32.totalorder %s334, 255
        %s338 = scalar_select %p337, %s334, 255
        %s339 = smul.addr %s336, 256
        %s340 = sadd.s32 %s338, %s339
        %s341 = smul.addr %s340, 8
        %s342 = scalar_lea.vmem %s0, %s341
        %s343 = smul.u32 128, %s32
        %s344 = smul.u32 128, %s32
        %v345 = vld [vmem:[%s342] sm:$0xff]
        %v346 = vld [vmem:[%s342 + $0x8] sm:$0xff]
        %v347 = vld [vmem:[%s342 + $0x10] sm:$0xff]
        %v348 = vld [vmem:[%s342 + $0x18] sm:$0xff]
        %v349 = vld [vmem:[%s342 + $0x20] sm:$0xff]
        %v350 = vld [vmem:[%s342 + $0x28] sm:$0xff]
        %v351 = vld [vmem:[%s342 + $0x30] sm:$0xff]
        %v352 = vld [vmem:[%s342 + $0x38] sm:$0xff]
        %v353 = vld [vmem:[%s342 + $0x40] sm:$0xff]
        %v354 = vld [vmem:[%s342 + $0x48] sm:$0xff]
        %v355 = vld [vmem:[%s342 + $0x50] sm:$0xff]
        %v356 = vld [vmem:[%s342 + $0x58] sm:$0xff]
        %v357 = vld [vmem:[%s342 + $0x60] sm:$0xff]
        %v358 = vld [vmem:[%s342 + $0x68] sm:$0xff]
        %v359 = vld [vmem:[%s342 + $0x70] sm:$0xff]
        %v360 = vld [vmem:[%s342 + $0x78] sm:$0xff]
        %v361 = vld [vmem:[%s342 + $0x80] sm:$0xff]
        %v362 = vld [vmem:[%s342 + $0x88] sm:$0xff]
        %v363 = vld [vmem:[%s342 + $0x90] sm:$0xff]
        %v364 = vld [vmem:[%s342 + $0x98] sm:$0xff]
        %v365 = vld [vmem:[%s342 + $0xa0] sm:$0xff]
        %v366 = vld [vmem:[%s342 + $0xa8] sm:$0xff]
        %v367 = vld [vmem:[%s342 + $0xb0] sm:$0xff]
        %v368 = vld [vmem:[%s342 + $0xb8] sm:$0xff]
        %v369 = vld [vmem:[%s342 + $0xc0] sm:$0xff]
        %v370 = vld [vmem:[%s342 + $0xc8] sm:$0xff]
        %v371 = vld [vmem:[%s342 + $0xd0] sm:$0xff]
        %v372 = vld [vmem:[%s342 + $0xd8] sm:$0xff]
        %v373 = vld [vmem:[%s342 + $0xe0] sm:$0xff]
        %v374 = vld [vmem:[%s342 + $0xe8] sm:$0xff]
        %v375 = vld [vmem:[%s342 + $0xf0] sm:$0xff]
        %v376 = vld [vmem:[%s342 + $0xf8] sm:$0xff]
        %v377 = vld [vmem:[%s342 + $0x100] sm:$0xff]
        %v378 = vld [vmem:[%s342 + $0x108] sm:$0xff]
        %v379 = vld [vmem:[%s342 + $0x110] sm:$0xff]
        %v380 = vld [vmem:[%s342 + $0x118] sm:$0xff]
        %v381 = vld [vmem:[%s342 + $0x120] sm:$0xff]
        %v382 = vld [vmem:[%s342 + $0x128] sm:$0xff]
        %v383 = vld [vmem:[%s342 + $0x130] sm:$0xff]
        %v384 = vld [vmem:[%s342 + $0x138] sm:$0xff]
        %v385 = vld [vmem:[%s342 + $0x140] sm:$0xff]
        %v386 = vld [vmem:[%s342 + $0x148] sm:$0xff]
        %v387 = vld [vmem:[%s342 + $0x150] sm:$0xff]
        %v388 = vld [vmem:[%s342 + $0x158] sm:$0xff]
        %v389 = vld [vmem:[%s342 + $0x160] sm:$0xff]
        %v390 = vld [vmem:[%s342 + $0x168] sm:$0xff]
        %v391 = vld [vmem:[%s342 + $0x170] sm:$0xff]
        %v392 = vld [vmem:[%s342 + $0x178] sm:$0xff]
        %v393 = vld [vmem:[%s342 + $0x180] sm:$0xff]
        %v394 = vld [vmem:[%s342 + $0x188] sm:$0xff]
        %v395 = vld [vmem:[%s342 + $0x190] sm:$0xff]
        %v396 = vld [vmem:[%s342 + $0x198] sm:$0xff]
        %v397 = vld [vmem:[%s342 + $0x1a0] sm:$0xff]
        %v398 = vld [vmem:[%s342 + $0x1a8] sm:$0xff]
        %v399 = vld [vmem:[%s342 + $0x1b0] sm:$0xff]
        %v400 = vld [vmem:[%s342 + $0x1b8] sm:$0xff]
        %v401 = vld [vmem:[%s342 + $0x1c0] sm:$0xff]
        %v402 = vld [vmem:[%s342 + $0x1c8] sm:$0xff]
        %v403 = vld [vmem:[%s342 + $0x1d0] sm:$0xff]
        %v404 = vld [vmem:[%s342 + $0x1d8] sm:$0xff]
        %v405 = vld [vmem:[%s342 + $0x1e0] sm:$0xff]
        %v406 = vld [vmem:[%s342 + $0x1e8] sm:$0xff]
        %v407 = vld [vmem:[%s342 + $0x1f0] sm:$0xff]
        %v408 = vld [vmem:[%s342 + $0x1f8] sm:$0xff]
        %v409 = vld [vmem:[%s342 + $0x200] sm:$0xff]
        %v410 = vld [vmem:[%s342 + $0x208] sm:$0xff]
        %v411 = vld [vmem:[%s342 + $0x210] sm:$0xff]
        %v412 = vld [vmem:[%s342 + $0x218] sm:$0xff]
        %v413 = vld [vmem:[%s342 + $0x220] sm:$0xff]
        %v414 = vld [vmem:[%s342 + $0x228] sm:$0xff]
        %v415 = vld [vmem:[%s342 + $0x230] sm:$0xff]
        %v416 = vld [vmem:[%s342 + $0x238] sm:$0xff]
        %v417 = vld [vmem:[%s342 + $0x240] sm:$0xff]
        %v418 = vld [vmem:[%s342 + $0x248] sm:$0xff]
        %v419 = vld [vmem:[%s342 + $0x250] sm:$0xff]
        %v420 = vld [vmem:[%s342 + $0x258] sm:$0xff]
        %v421 = vld [vmem:[%s342 + $0x260] sm:$0xff]
        %v422 = vld [vmem:[%s342 + $0x268] sm:$0xff]
        %v423 = vld [vmem:[%s342 + $0x270] sm:$0xff]
        %v424 = vld [vmem:[%s342 + $0x278] sm:$0xff]
        %v425 = vld [vmem:[%s342 + $0x280] sm:$0xff]
        %v426 = vld [vmem:[%s342 + $0x288] sm:$0xff]
        %v427 = vld [vmem:[%s342 + $0x290] sm:$0xff]
        %v428 = vld [vmem:[%s342 + $0x298] sm:$0xff]
        %v429 = vld [vmem:[%s342 + $0x2a0] sm:$0xff]
        %v430 = vld [vmem:[%s342 + $0x2a8] sm:$0xff]
        %v431 = vld [vmem:[%s342 + $0x2b0] sm:$0xff]
        %v432 = vld [vmem:[%s342 + $0x2b8] sm:$0xff]
        %v433 = vld [vmem:[%s342 + $0x2c0] sm:$0xff]
        %v434 = vld [vmem:[%s342 + $0x2c8] sm:$0xff]
        %v435 = vld [vmem:[%s342 + $0x2d0] sm:$0xff]
        %v436 = vld [vmem:[%s342 + $0x2d8] sm:$0xff]
        %v437 = vld [vmem:[%s342 + $0x2e0] sm:$0xff]
        %v438 = vld [vmem:[%s342 + $0x2e8] sm:$0xff]
        %v439 = vld [vmem:[%s342 + $0x2f0] sm:$0xff]
        %v440 = vld [vmem:[%s342 + $0x2f8] sm:$0xff]
        %v441 = vld [vmem:[%s342 + $0x300] sm:$0xff]
        %v442 = vld [vmem:[%s342 + $0x308] sm:$0xff]
        %v443 = vld [vmem:[%s342 + $0x310] sm:$0xff]
        %v444 = vld [vmem:[%s342 + $0x318] sm:$0xff]
        %v445 = vld [vmem:[%s342 + $0x320] sm:$0xff]
        %v446 = vld [vmem:[%s342 + $0x328] sm:$0xff]
        %v447 = vld [vmem:[%s342 + $0x330] sm:$0xff]
        %v448 = vld [vmem:[%s342 + $0x338] sm:$0xff]
        %v449 = vld [vmem:[%s342 + $0x340] sm:$0xff]
        %v450 = vld [vmem:[%s342 + $0x348] sm:$0xff]
        %v451 = vld [vmem:[%s342 + $0x350] sm:$0xff]
        %v452 = vld [vmem:[%s342 + $0x358] sm:$0xff]
        %v453 = vld [vmem:[%s342 + $0x360] sm:$0xff]
        %v454 = vld [vmem:[%s342 + $0x368] sm:$0xff]
        %v455 = vld [vmem:[%s342 + $0x370] sm:$0xff]
        %v456 = vld [vmem:[%s342 + $0x378] sm:$0xff]
        %v457 = vld [vmem:[%s342 + $0x380] sm:$0xff]
        %v458 = vld [vmem:[%s342 + $0x388] sm:$0xff]
        %v459 = vld [vmem:[%s342 + $0x390] sm:$0xff]
        %v460 = vld [vmem:[%s342 + $0x398] sm:$0xff]
        %v461 = vld [vmem:[%s342 + $0x3a0] sm:$0xff]
        %v462 = vld [vmem:[%s342 + $0x3a8] sm:$0xff]
        %v463 = vld [vmem:[%s342 + $0x3b0] sm:$0xff]
        %v464 = vld [vmem:[%s342 + $0x3b8] sm:$0xff]
        %v465 = vld [vmem:[%s342 + $0x3c0] sm:$0xff]
        %v466 = vld [vmem:[%s342 + $0x3c8] sm:$0xff]
        %v467 = vld [vmem:[%s342 + $0x3d0] sm:$0xff]
        %v468 = vld [vmem:[%s342 + $0x3d8] sm:$0xff]
        %v469 = vld [vmem:[%s342 + $0x3e0] sm:$0xff]
        %v470 = vld [vmem:[%s342 + $0x3e8] sm:$0xff]
        %v471 = vld [vmem:[%s342 + $0x3f0] sm:$0xff]
        %v472 = vld [vmem:[%s342 + $0x3f8] sm:$0xff]
        %v473 = vld [vmem:[#allocation2] sm:$0x7]
        %v474 = vld [vmem:[#allocation5] sm:$0x1]
        %v476 = vlaneseq
        %v477 = vshrl.u32 %v476, 7
        %v478 = vsub.s32 0, %v477
        %v479 = vrot.slane %v474, %v478
        %vm481 = vcmask 23552
        %v483 = vsel %vm481, %v345, 0
        %v486 = vsel %vm481, %v346, 0
        %v489 = vsel %vm481, %v347, 0
        %v492 = vsel %vm481, %v348, 0
        %v495 = vsel %vm481, %v349, 0
        %v498 = vsel %vm481, %v350, 0
        %v501 = vsel %vm481, %v351, 0
        %v504 = vsel %vm481, %v352, 0
        %v507 = vsel %vm481, %v353, 0
        %v510 = vsel %vm481, %v354, 0
        %v513 = vsel %vm481, %v355, 0
        %v516 = vsel %vm481, %v356, 0
        %v519 = vsel %vm481, %v357, 0
        %v522 = vsel %vm481, %v358, 0
        %v525 = vsel %vm481, %v359, 0
        %v528 = vsel %vm481, %v360, 0
        %v531 = vsel %vm481, %v361, 0
        %v534 = vsel %vm481, %v362, 0
        %v537 = vsel %vm481, %v363, 0
        %v540 = vsel %vm481, %v364, 0
        %v543 = vsel %vm481, %v365, 0
        %v546 = vsel %vm481, %v366, 0
        %v549 = vsel %vm481, %v367, 0
        %v552 = vsel %vm481, %v368, 0
        %v555 = vsel %vm481, %v369, 0
        %v558 = vsel %vm481, %v370, 0
        %v561 = vsel %vm481, %v371, 0
        %v564 = vsel %vm481, %v372, 0
        %v567 = vsel %vm481, %v373, 0
        %v570 = vsel %vm481, %v374, 0
        %v573 = vsel %vm481, %v375, 0
        %v576 = vsel %vm481, %v376, 0
        %v579 = vsel %vm481, %v377, 0
        %v582 = vsel %vm481, %v378, 0
        %v585 = vsel %vm481, %v379, 0
        %v588 = vsel %vm481, %v380, 0
        %v591 = vsel %vm481, %v381, 0
        %v594 = vsel %vm481, %v382, 0
        %v597 = vsel %vm481, %v383, 0
        %v600 = vsel %vm481, %v384, 0
        %v603 = vsel %vm481, %v385, 0
        %v606 = vsel %vm481, %v386, 0
        %v609 = vsel %vm481, %v387, 0
        %v612 = vsel %vm481, %v388, 0
        %v615 = vsel %vm481, %v389, 0
        %v618 = vsel %vm481, %v390, 0
        %v621 = vsel %vm481, %v391, 0
        %v624 = vsel %vm481, %v392, 0
        %v627 = vsel %vm481, %v393, 0
        %v630 = vsel %vm481, %v394, 0
        %v633 = vsel %vm481, %v395, 0
        %v636 = vsel %vm481, %v396, 0
        %v639 = vsel %vm481, %v397, 0
        %v642 = vsel %vm481, %v398, 0
        %v645 = vsel %vm481, %v399, 0
        %v648 = vsel %vm481, %v400, 0
        %v651 = vsel %vm481, %v401, 0
        %v654 = vsel %vm481, %v402, 0
        %v657 = vsel %vm481, %v403, 0
        %v660 = vsel %vm481, %v404, 0
        %v663 = vsel %vm481, %v405, 0
        %v666 = vsel %vm481, %v406, 0
        %v669 = vsel %vm481, %v407, 0
        %v672 = vsel %vm481, %v408, 0
        %v675 = vsel %vm481, %v409, 0
        %v678 = vsel %vm481, %v410, 0
        %v681 = vsel %vm481, %v411, 0
        %v684 = vsel %vm481, %v412, 0
        %v687 = vsel %vm481, %v413, 0
        %v690 = vsel %vm481, %v414, 0
        %v693 = vsel %vm481, %v415, 0
        %v696 = vsel %vm481, %v416, 0
        %v699 = vsel %vm481, %v417, 0
        %v702 = vsel %vm481, %v418, 0
        %v705 = vsel %vm481, %v419, 0
        %v708 = vsel %vm481, %v420, 0
        %v711 = vsel %vm481, %v421, 0
        %v714 = vsel %vm481, %v422, 0
        %v717 = vsel %vm481, %v423, 0
        %v720 = vsel %vm481, %v424, 0
        %v723 = vsel %vm481, %v425, 0
        %v726 = vsel %vm481, %v426, 0
        %v729 = vsel %vm481, %v427, 0
        %v732 = vsel %vm481, %v428, 0
        %v735 = vsel %vm481, %v429, 0
        %v738 = vsel %vm481, %v430, 0
        %v741 = vsel %vm481, %v431, 0
        %v744 = vsel %vm481, %v432, 0
        %v747 = vsel %vm481, %v433, 0
        %v750 = vsel %vm481, %v434, 0
        %v753 = vsel %vm481, %v435, 0
        %v756 = vsel %vm481, %v436, 0
        %v759 = vsel %vm481, %v437, 0
        %v762 = vsel %vm481, %v438, 0
        %v765 = vsel %vm481, %v439, 0
        %v768 = vsel %vm481, %v440, 0
        %v771 = vsel %vm481, %v441, 0
        %v774 = vsel %vm481, %v442, 0
        %v777 = vsel %vm481, %v443, 0
        %v780 = vsel %vm481, %v444, 0
        %v783 = vsel %vm481, %v445, 0
        %v786 = vsel %vm481, %v446, 0
        %v789 = vsel %vm481, %v447, 0
        %v792 = vsel %vm481, %v448, 0
        %v795 = vsel %vm481, %v449, 0
        %v798 = vsel %vm481, %v450, 0
        %v801 = vsel %vm481, %v451, 0
        %v804 = vsel %vm481, %v452, 0
        %v807 = vsel %vm481, %v453, 0
        %v810 = vsel %vm481, %v454, 0
        %v813 = vsel %vm481, %v455, 0
        %v816 = vsel %vm481, %v456, 0
        %v819 = vsel %vm481, %v457, 0
        %v822 = vsel %vm481, %v458, 0
        %v825 = vsel %vm481, %v459, 0
        %v828 = vsel %vm481, %v460, 0
        %v831 = vsel %vm481, %v461, 0
        %v834 = vsel %vm481, %v462, 0
        %v837 = vsel %vm481, %v463, 0
        %v840 = vsel %vm481, %v464, 0
        %v843 = vsel %vm481, %v465, 0
        %v846 = vsel %vm481, %v466, 0
        %v849 = vsel %vm481, %v467, 0
        %v852 = vsel %vm481, %v468, 0
        %v855 = vsel %vm481, %v469, 0
        %v858 = vsel %vm481, %v470, 0
        %v861 = vsel %vm481, %v471, 0
        %v864 = vsel %vm481, %v472, 0
        %vm866 = vcmask 1042432
        %v868 = vsel %vm866, %v473, 0
        %870 = vmatprep.subr.mxu0 0.0
        %871 = vmatpush1.msra.mxu0 0.0
        %872 = vmatprep.subr.mxu0 0.0
        %873 = vmatpush1.msra.mxu0 0.0
        %874 = vmatprep.subr.mxu0 0.0
        %875 = vmatpush1.msra.mxu0 0.0
        %876 = vmatprep.subr.mxu0 0.0
        %877 = vmatpush1.msra.mxu0 0.0
        %878 = vmatprep.subr.mxu0 0.0
        %879 = vmatpush1.msra.mxu0 0.0
        %880 = vmatprep.subr.mxu0 0.0
        %881 = vmatpush1.msra.mxu0 0.0
        %882 = vmatprep.subr.mxu0 0.0
        %883 = vmatpush1.msra.mxu0 0.0
        %884 = vmatprep.subr.mxu0 0.0
        %885 = vmatpush1.msra.mxu0 0.0
        %886 = vmatprep.subr.mxu0 0.0
        %887 = vmatpush1.msra.mxu0 0.0
        %888 = vmatprep.subr.mxu0 0.0
        %889 = vmatpush1.msra.mxu0 0.0
        %890 = vmatprep.subr.mxu0 0.0
        %891 = vmatpush1.msra.mxu0 0.0
        %892 = vmatprep.subr.mxu0 0.0
        %893 = vmatpush1.msra.mxu0 0.0
        %894 = vmatprep.subr.mxu0 0.0
        %895 = vmatpush1.msra.mxu0 0.0
        %896 = vmatprep.subr.mxu0 0.0
        %897 = vmatpush1.msra.mxu0 0.0
        %898 = vmatprep.subr.mxu0 0.0
        %899 = vmatpush1.msra.mxu0 0.0
        %900 = vmatprep.subr.mxu0 0.0
        %901 = vmatpush1.msra.mxu0 %v868
        %902 = vmatprep.subr.mxu0 0.0
        %903 = vmatpush2.msra.mxu0 0.0
        %904 = vmatprep.subr.mxu0 0.0
        %905 = vmatpush2.msra.mxu0 0.0
        %906 = vmatprep.subr.mxu0 0.0
        %907 = vmatpush2.msra.mxu0 0.0
        %908 = vmatprep.subr.mxu0 0.0
        %909 = vmatpush2.msra.mxu0 0.0
        %910 = vmatprep.subr.mxu0 0.0
        %911 = vmatpush2.msra.mxu0 0.0
        %912 = vmatprep.subr.mxu0 0.0
        %913 = vmatpush2.msra.mxu0 0.0
        %914 = vmatprep.subr.mxu0 0.0
        %915 = vmatpush2.msra.mxu0 0.0
        %916 = vmatprep.subr.mxu0 0.0
        %917 = vmatpush2.msra.mxu0 0.0
        %918 = vmatprep.subr.mxu0 0.0
        %919 = vmatpush2.msra.mxu0 0.0
        %920 = vmatprep.subr.mxu0 0.0
        %921 = vmatpush2.msra.mxu0 0.0
        %922 = vmatprep.subr.mxu0 0.0
        %923 = vmatpush2.msra.mxu0 0.0
        %924 = vmatprep.subr.mxu0 0.0
        %925 = vmatpush2.msra.mxu0 0.0
        %926 = vmatprep.subr.mxu0 0.0
        %927 = vmatpush2.msra.mxu0 0.0
        %928 = vmatprep.subr.mxu0 0.0
        %929 = vmatpush2.msra.mxu0 0.0
        %930 = vmatprep.subr.mxu0 0.0
        %931 = vmatpush2.msra.mxu0 0.0
        %932 = vmatprep.subr.mxu0 0.0
        %933 = vmatpush2.msra.mxu0 0.0
        %934 = vmatprep.mubr.f32.mxu0 0.0
        %935 = vmatmul.mubr.f32.gmra.mxu0 %v483
        %v936 = vpop.f32.mrf.mxu0
        %v937 = vadd.f32 %v479, %v936
        %v938 = vpop.f32.mrf.mxu0
        %939 = vmatprep.mubr.f32.mxu0 0.0
        %940 = vmatmul.mubr.f32.gmra.mxu0 %v486
        %v941 = vpop.f32.mrf.mxu0
        %v942 = vadd.f32 %v479, %v941
        %v943 = vpop.f32.mrf.mxu0
        %944 = vmatprep.mubr.f32.mxu0 0.0
        %945 = vmatmul.mubr.f32.gmra.mxu0 %v489
        %v946 = vpop.f32.mrf.mxu0
        %v947 = vadd.f32 %v479, %v946
        %v948 = vpop.f32.mrf.mxu0
        %949 = vmatprep.mubr.f32.mxu0 0.0
        %950 = vmatmul.mubr.f32.gmra.mxu0 %v492
        %v951 = vpop.f32.mrf.mxu0
        %v952 = vadd.f32 %v479, %v951
        %v953 = vpop.f32.mrf.mxu0
        %954 = vmatprep.mubr.f32.mxu0 0.0
        %955 = vmatmul.mubr.f32.gmra.mxu0 %v495
        %v956 = vpop.f32.mrf.mxu0
        %v957 = vadd.f32 %v479, %v956
        %v958 = vpop.f32.mrf.mxu0
        %959 = vmatprep.mubr.f32.mxu0 0.0
        %960 = vmatmul.mubr.f32.gmra.mxu0 %v498
        %v961 = vpop.f32.mrf.mxu0
        %v962 = vadd.f32 %v479, %v961
        %v963 = vpop.f32.mrf.mxu0
        %964 = vmatprep.mubr.f32.mxu0 0.0
        %965 = vmatmul.mubr.f32.gmra.mxu0 %v501
        %v966 = vpop.f32.mrf.mxu0
        %v967 = vadd.f32 %v479, %v966
        %v968 = vpop.f32.mrf.mxu0
        %969 = vmatprep.mubr.f32.mxu0 0.0
        %970 = vmatmul.mubr.f32.gmra.mxu0 %v504
        %v971 = vpop.f32.mrf.mxu0
        %v972 = vadd.f32 %v479, %v971
        %v973 = vpop.f32.mrf.mxu0
        %974 = vmatprep.mubr.f32.mxu0 0.0
        %975 = vmatmul.mubr.f32.gmra.mxu0 %v507
        %v976 = vpop.f32.mrf.mxu0
        %v977 = vadd.f32 %v479, %v976
        %v978 = vpop.f32.mrf.mxu0
        %979 = vmatprep.mubr.f32.mxu0 0.0
        %980 = vmatmul.mubr.f32.gmra.mxu0 %v510
        %v981 = vpop.f32.mrf.mxu0
        %v982 = vadd.f32 %v479, %v981
        %v983 = vpop.f32.mrf.mxu0
        %984 = vmatprep.mubr.f32.mxu0 0.0
        %985 = vmatmul.mubr.f32.gmra.mxu0 %v513
        %v986 = vpop.f32.mrf.mxu0
        %v987 = vadd.f32 %v479, %v986
        %v988 = vpop.f32.mrf.mxu0
        %989 = vmatprep.mubr.f32.mxu0 0.0
        %990 = vmatmul.mubr.f32.gmra.mxu0 %v516
        %v991 = vpop.f32.mrf.mxu0
        %v992 = vadd.f32 %v479, %v991
        %v993 = vpop.f32.mrf.mxu0
        %994 = vmatprep.mubr.f32.mxu0 0.0
        %995 = vmatmul.mubr.f32.gmra.mxu0 %v519
        %v996 = vpop.f32.mrf.mxu0
        %v997 = vadd.f32 %v479, %v996
        %v998 = vpop.f32.mrf.mxu0
        %999 = vmatprep.mubr.f32.mxu0 0.0
        %1000 = vmatmul.mubr.f32.gmra.mxu0 %v522
        %v1001 = vpop.f32.mrf.mxu0
        %v1002 = vadd.f32 %v479, %v1001
        %v1003 = vpop.f32.mrf.mxu0
        %1004 = vmatprep.mubr.f32.mxu0 0.0
        %1005 = vmatmul.mubr.f32.gmra.mxu0 %v525
        %v1006 = vpop.f32.mrf.mxu0
        %v1007 = vadd.f32 %v479, %v1006
        %v1008 = vpop.f32.mrf.mxu0
        %1009 = vmatprep.mubr.f32.mxu0 0.0
        %1010 = vmatmul.mubr.f32.gmra.mxu0 %v528
        %v1011 = vpop.f32.mrf.mxu0
        %v1012 = vadd.f32 %v479, %v1011
        %v1013 = vpop.f32.mrf.mxu0
        %1014 = vmatprep.mubr.f32.mxu0 0.0
        %1015 = vmatmul.mubr.f32.gmra.mxu0 %v531
        %v1016 = vpop.f32.mrf.mxu0
        %v1017 = vadd.f32 %v479, %v1016
        %v1018 = vpop.f32.mrf.mxu0
        %1019 = vmatprep.mubr.f32.mxu0 0.0
        %1020 = vmatmul.mubr.f32.gmra.mxu0 %v534
        %v1021 = vpop.f32.mrf.mxu0
        %v1022 = vadd.f32 %v479, %v1021
        %v1023 = vpop.f32.mrf.mxu0
        %1024 = vmatprep.mubr.f32.mxu0 0.0
        %1025 = vmatmul.mubr.f32.gmra.mxu0 %v537
        %v1026 = vpop.f32.mrf.mxu0
        %v1027 = vadd.f32 %v479, %v1026
        %v1028 = vpop.f32.mrf.mxu0
        %1029 = vmatprep.mubr.f32.mxu0 0.0
        %1030 = vmatmul.mubr.f32.gmra.mxu0 %v540
        %v1031 = vpop.f32.mrf.mxu0
        %v1032 = vadd.f32 %v479, %v1031
        %v1033 = vpop.f32.mrf.mxu0
        %1034 = vmatprep.mubr.f32.mxu0 0.0
        %1035 = vmatmul.mubr.f32.gmra.mxu0 %v543
        %v1036 = vpop.f32.mrf.mxu0
        %v1037 = vadd.f32 %v479, %v1036
        %v1038 = vpop.f32.mrf.mxu0
        %1039 = vmatprep.mubr.f32.mxu0 0.0
        %1040 = vmatmul.mubr.f32.gmra.mxu0 %v546
        %v1041 = vpop.f32.mrf.mxu0
        %v1042 = vadd.f32 %v479, %v1041
        %v1043 = vpop.f32.mrf.mxu0
        %1044 = vmatprep.mubr.f32.mxu0 0.0
        %1045 = vmatmul.mubr.f32.gmra.mxu0 %v549
        %v1046 = vpop.f32.mrf.mxu0
        %v1047 = vadd.f32 %v479, %v1046
        %v1048 = vpop.f32.mrf.mxu0
        %1049 = vmatprep.mubr.f32.mxu0 0.0
        %1050 = vmatmul.mubr.f32.gmra.mxu0 %v552
        %v1051 = vpop.f32.mrf.mxu0
        %v1052 = vadd.f32 %v479, %v1051
        %v1053 = vpop.f32.mrf.mxu0
        %1054 = vmatprep.mubr.f32.mxu0 0.0
        %1055 = vmatmul.mubr.f32.gmra.mxu0 %v555
        %v1056 = vpop.f32.mrf.mxu0
        %v1057 = vadd.f32 %v479, %v1056
        %v1058 = vpop.f32.mrf.mxu0
        %1059 = vmatprep.mubr.f32.mxu0 0.0
        %1060 = vmatmul.mubr.f32.gmra.mxu0 %v558
        %v1061 = vpop.f32.mrf.mxu0
        %v1062 = vadd.f32 %v479, %v1061
        %v1063 = vpop.f32.mrf.mxu0
        %1064 = vmatprep.mubr.f32.mxu0 0.0
        %1065 = vmatmul.mubr.f32.gmra.mxu0 %v561
        %v1066 = vpop.f32.mrf.mxu0
        %v1067 = vadd.f32 %v479, %v1066
        %v1068 = vpop.f32.mrf.mxu0
        %1069 = vmatprep.mubr.f32.mxu0 0.0
        %1070 = vmatmul.mubr.f32.gmra.mxu0 %v564
        %v1071 = vpop.f32.mrf.mxu0
        %v1072 = vadd.f32 %v479, %v1071
        %v1073 = vpop.f32.mrf.mxu0
        %1074 = vmatprep.mubr.f32.mxu0 0.0
        %1075 = vmatmul.mubr.f32.gmra.mxu0 %v567
        %v1076 = vpop.f32.mrf.mxu0
        %v1077 = vadd.f32 %v479, %v1076
        %v1078 = vpop.f32.mrf.mxu0
        %1079 = vmatprep.mubr.f32.mxu0 0.0
        %1080 = vmatmul.mubr.f32.gmra.mxu0 %v570
        %v1081 = vpop.f32.mrf.mxu0
        %v1082 = vadd.f32 %v479, %v1081
        %v1083 = vpop.f32.mrf.mxu0
        %1084 = vmatprep.mubr.f32.mxu0 0.0
        %1085 = vmatmul.mubr.f32.gmra.mxu0 %v573
        %v1086 = vpop.f32.mrf.mxu0
        %v1087 = vadd.f32 %v479, %v1086
        %v1088 = vpop.f32.mrf.mxu0
        %1089 = vmatprep.mubr.f32.mxu0 0.0
        %1090 = vmatmul.mubr.f32.gmra.mxu0 %v576
        %v1091 = vpop.f32.mrf.mxu0
        %v1092 = vadd.f32 %v479, %v1091
        %v1093 = vpop.f32.mrf.mxu0
        %1094 = vmatprep.mubr.f32.mxu0 0.0
        %1095 = vmatmul.mubr.f32.gmra.mxu0 %v579
        %v1096 = vpop.f32.mrf.mxu0
        %v1097 = vadd.f32 %v479, %v1096
        %v1098 = vpop.f32.mrf.mxu0
        %1099 = vmatprep.mubr.f32.mxu0 0.0
        %1100 = vmatmul.mubr.f32.gmra.mxu0 %v582
        %v1101 = vpop.f32.mrf.mxu0
        %v1102 = vadd.f32 %v479, %v1101
        %v1103 = vpop.f32.mrf.mxu0
        %1104 = vmatprep.mubr.f32.mxu0 0.0
        %1105 = vmatmul.mubr.f32.gmra.mxu0 %v585
        %v1106 = vpop.f32.mrf.mxu0
        %v1107 = vadd.f32 %v479, %v1106
        %v1108 = vpop.f32.mrf.mxu0
        %1109 = vmatprep.mubr.f32.mxu0 0.0
        %1110 = vmatmul.mubr.f32.gmra.mxu0 %v588
        %v1111 = vpop.f32.mrf.mxu0
        %v1112 = vadd.f32 %v479, %v1111
        %v1113 = vpop.f32.mrf.mxu0
        %1114 = vmatprep.mubr.f32.mxu0 0.0
        %1115 = vmatmul.mubr.f32.gmra.mxu0 %v591
        %v1116 = vpop.f32.mrf.mxu0
        %v1117 = vadd.f32 %v479, %v1116
        %v1118 = vpop.f32.mrf.mxu0
        %1119 = vmatprep.mubr.f32.mxu0 0.0
        %1120 = vmatmul.mubr.f32.gmra.mxu0 %v594
        %v1121 = vpop.f32.mrf.mxu0
        %v1122 = vadd.f32 %v479, %v1121
        %v1123 = vpop.f32.mrf.mxu0
        %1124 = vmatprep.mubr.f32.mxu0 0.0
        %1125 = vmatmul.mubr.f32.gmra.mxu0 %v597
        %v1126 = vpop.f32.mrf.mxu0
        %v1127 = vadd.f32 %v479, %v1126
        %v1128 = vpop.f32.mrf.mxu0
        %1129 = vmatprep.mubr.f32.mxu0 0.0
        %1130 = vmatmul.mubr.f32.gmra.mxu0 %v600
        %v1131 = vpop.f32.mrf.mxu0
        %v1132 = vadd.f32 %v479, %v1131
        %v1133 = vpop.f32.mrf.mxu0
        %1134 = vmatprep.mubr.f32.mxu0 0.0
        %1135 = vmatmul.mubr.f32.gmra.mxu0 %v603
        %v1136 = vpop.f32.mrf.mxu0
        %v1137 = vadd.f32 %v479, %v1136
        %v1138 = vpop.f32.mrf.mxu0
        %1139 = vmatprep.mubr.f32.mxu0 0.0
        %1140 = vmatmul.mubr.f32.gmra.mxu0 %v606
        %v1141 = vpop.f32.mrf.mxu0
        %v1142 = vadd.f32 %v479, %v1141
        %v1143 = vpop.f32.mrf.mxu0
        %1144 = vmatprep.mubr.f32.mxu0 0.0
        %1145 = vmatmul.mubr.f32.gmra.mxu0 %v609
        %v1146 = vpop.f32.mrf.mxu0
        %v1147 = vadd.f32 %v479, %v1146
        %v1148 = vpop.f32.mrf.mxu0
        %1149 = vmatprep.mubr.f32.mxu0 0.0
        %1150 = vmatmul.mubr.f32.gmra.mxu0 %v612
        %v1151 = vpop.f32.mrf.mxu0
        %v1152 = vadd.f32 %v479, %v1151
        %v1153 = vpop.f32.mrf.mxu0
        %1154 = vmatprep.mubr.f32.mxu0 0.0
        %1155 = vmatmul.mubr.f32.gmra.mxu0 %v615
        %v1156 = vpop.f32.mrf.mxu0
        %v1157 = vadd.f32 %v479, %v1156
        %v1158 = vpop.f32.mrf.mxu0
        %1159 = vmatprep.mubr.f32.mxu0 0.0
        %1160 = vmatmul.mubr.f32.gmra.mxu0 %v618
        %v1161 = vpop.f32.mrf.mxu0
        %v1162 = vadd.f32 %v479, %v1161
        %v1163 = vpop.f32.mrf.mxu0
        %1164 = vmatprep.mubr.f32.mxu0 0.0
        %1165 = vmatmul.mubr.f32.gmra.mxu0 %v621
        %v1166 = vpop.f32.mrf.mxu0
        %v1167 = vadd.f32 %v479, %v1166
        %v1168 = vpop.f32.mrf.mxu0
        %1169 = vmatprep.mubr.f32.mxu0 0.0
        %1170 = vmatmul.mubr.f32.gmra.mxu0 %v624
        %v1171 = vpop.f32.mrf.mxu0
        %v1172 = vadd.f32 %v479, %v1171
        %v1173 = vpop.f32.mrf.mxu0
        %1174 = vmatprep.mubr.f32.mxu0 0.0
        %1175 = vmatmul.mubr.f32.gmra.mxu0 %v627
        %v1176 = vpop.f32.mrf.mxu0
        %v1177 = vadd.f32 %v479, %v1176
        %v1178 = vpop.f32.mrf.mxu0
        %1179 = vmatprep.mubr.f32.mxu0 0.0
        %1180 = vmatmul.mubr.f32.gmra.mxu0 %v630
        %v1181 = vpop.f32.mrf.mxu0
        %v1182 = vadd.f32 %v479, %v1181
        %v1183 = vpop.f32.mrf.mxu0
        %1184 = vmatprep.mubr.f32.mxu0 0.0
        %1185 = vmatmul.mubr.f32.gmra.mxu0 %v633
        %v1186 = vpop.f32.mrf.mxu0
        %v1187 = vadd.f32 %v479, %v1186
        %v1188 = vpop.f32.mrf.mxu0
        %1189 = vmatprep.mubr.f32.mxu0 0.0
        %1190 = vmatmul.mubr.f32.gmra.mxu0 %v636
        %v1191 = vpop.f32.mrf.mxu0
        %v1192 = vadd.f32 %v479, %v1191
        %v1193 = vpop.f32.mrf.mxu0
        %1194 = vmatprep.mubr.f32.mxu0 0.0
        %1195 = vmatmul.mubr.f32.gmra.mxu0 %v639
        %v1196 = vpop.f32.mrf.mxu0
        %v1197 = vadd.f32 %v479, %v1196
        %v1198 = vpop.f32.mrf.mxu0
        %1199 = vmatprep.mubr.f32.mxu0 0.0
        %1200 = vmatmul.mubr.f32.gmra.mxu0 %v642
        %v1201 = vpop.f32.mrf.mxu0
        %v1202 = vadd.f32 %v479, %v1201
        %v1203 = vpop.f32.mrf.mxu0
        %1204 = vmatprep.mubr.f32.mxu0 0.0
        %1205 = vmatmul.mubr.f32.gmra.mxu0 %v645
        %v1206 = vpop.f32.mrf.mxu0
        %v1207 = vadd.f32 %v479, %v1206
        %v1208 = vpop.f32.mrf.mxu0
        %1209 = vmatprep.mubr.f32.mxu0 0.0
        %1210 = vmatmul.mubr.f32.gmra.mxu0 %v648
        %v1211 = vpop.f32.mrf.mxu0
        %v1212 = vadd.f32 %v479, %v1211
        %v1213 = vpop.f32.mrf.mxu0
        %1214 = vmatprep.mubr.f32.mxu0 0.0
        %1215 = vmatmul.mubr.f32.gmra.mxu0 %v651
        %v1216 = vpop.f32.mrf.mxu0
        %v1217 = vadd.f32 %v479, %v1216
        %v1218 = vpop.f32.mrf.mxu0
        %1219 = vmatprep.mubr.f32.mxu0 0.0
        %1220 = vmatmul.mubr.f32.gmra.mxu0 %v654
        %v1221 = vpop.f32.mrf.mxu0
        %v1222 = vadd.f32 %v479, %v1221
        %v1223 = vpop.f32.mrf.mxu0
        %1224 = vmatprep.mubr.f32.mxu0 0.0
        %1225 = vmatmul.mubr.f32.gmra.mxu0 %v657
        %v1226 = vpop.f32.mrf.mxu0
        %v1227 = vadd.f32 %v479, %v1226
        %v1228 = vpop.f32.mrf.mxu0
        %1229 = vmatprep.mubr.f32.mxu0 0.0
        %1230 = vmatmul.mubr.f32.gmra.mxu0 %v660
        %v1231 = vpop.f32.mrf.mxu0
        %v1232 = vadd.f32 %v479, %v1231
        %v1233 = vpop.f32.mrf.mxu0
        %1234 = vmatprep.mubr.f32.mxu0 0.0
        %1235 = vmatmul.mubr.f32.gmra.mxu0 %v663
        %v1236 = vpop.f32.mrf.mxu0
        %v1237 = vadd.f32 %v479, %v1236
        %v1238 = vpop.f32.mrf.mxu0
        %1239 = vmatprep.mubr.f32.mxu0 0.0
        %1240 = vmatmul.mubr.f32.gmra.mxu0 %v666
        %v1241 = vpop.f32.mrf.mxu0
        %v1242 = vadd.f32 %v479, %v1241
        %v1243 = vpop.f32.mrf.mxu0
        %1244 = vmatprep.mubr.f32.mxu0 0.0
        %1245 = vmatmul.mubr.f32.gmra.mxu0 %v669
        %v1246 = vpop.f32.mrf.mxu0
        %v1247 = vadd.f32 %v479, %v1246
        %v1248 = vpop.f32.mrf.mxu0
        %1249 = vmatprep.mubr.f32.mxu0 0.0
        %1250 = vmatmul.mubr.f32.gmra.mxu0 %v672
        %v1251 = vpop.f32.mrf.mxu0
        %v1252 = vadd.f32 %v479, %v1251
        %v1253 = vpop.f32.mrf.mxu0
        %1254 = vmatprep.mubr.f32.mxu0 0.0
        %1255 = vmatmul.mubr.f32.gmra.mxu0 %v675
        %v1256 = vpop.f32.mrf.mxu0
        %v1257 = vadd.f32 %v479, %v1256
        %v1258 = vpop.f32.mrf.mxu0
        %1259 = vmatprep.mubr.f32.mxu0 0.0
        %1260 = vmatmul.mubr.f32.gmra.mxu0 %v678
        %v1261 = vpop.f32.mrf.mxu0
        %v1262 = vadd.f32 %v479, %v1261
        %v1263 = vpop.f32.mrf.mxu0
        %1264 = vmatprep.mubr.f32.mxu0 0.0
        %1265 = vmatmul.mubr.f32.gmra.mxu0 %v681
        %v1266 = vpop.f32.mrf.mxu0
        %v1267 = vadd.f32 %v479, %v1266
        %v1268 = vpop.f32.mrf.mxu0
        %1269 = vmatprep.mubr.f32.mxu0 0.0
        %1270 = vmatmul.mubr.f32.gmra.mxu0 %v684
        %v1271 = vpop.f32.mrf.mxu0
        %v1272 = vadd.f32 %v479, %v1271
        %v1273 = vpop.f32.mrf.mxu0
        %1274 = vmatprep.mubr.f32.mxu0 0.0
        %1275 = vmatmul.mubr.f32.gmra.mxu0 %v687
        %v1276 = vpop.f32.mrf.mxu0
        %v1277 = vadd.f32 %v479, %v1276
        %v1278 = vpop.f32.mrf.mxu0
        %1279 = vmatprep.mubr.f32.mxu0 0.0
        %1280 = vmatmul.mubr.f32.gmra.mxu0 %v690
        %v1281 = vpop.f32.mrf.mxu0
        %v1282 = vadd.f32 %v479, %v1281
        %v1283 = vpop.f32.mrf.mxu0
        %1284 = vmatprep.mubr.f32.mxu0 0.0
        %1285 = vmatmul.mubr.f32.gmra.mxu0 %v693
        %v1286 = vpop.f32.mrf.mxu0
        %v1287 = vadd.f32 %v479, %v1286
        %v1288 = vpop.f32.mrf.mxu0
        %1289 = vmatprep.mubr.f32.mxu0 0.0
        %1290 = vmatmul.mubr.f32.gmra.mxu0 %v696
        %v1291 = vpop.f32.mrf.mxu0
        %v1292 = vadd.f32 %v479, %v1291
        %v1293 = vpop.f32.mrf.mxu0
        %1294 = vmatprep.mubr.f32.mxu0 0.0
        %1295 = vmatmul.mubr.f32.gmra.mxu0 %v699
        %v1296 = vpop.f32.mrf.mxu0
        %v1297 = vadd.f32 %v479, %v1296
        %v1298 = vpop.f32.mrf.mxu0
        %1299 = vmatprep.mubr.f32.mxu0 0.0
        %1300 = vmatmul.mubr.f32.gmra.mxu0 %v702
        %v1301 = vpop.f32.mrf.mxu0
        %v1302 = vadd.f32 %v479, %v1301
        %v1303 = vpop.f32.mrf.mxu0
        %1304 = vmatprep.mubr.f32.mxu0 0.0
        %1305 = vmatmul.mubr.f32.gmra.mxu0 %v705
        %v1306 = vpop.f32.mrf.mxu0
        %v1307 = vadd.f32 %v479, %v1306
        %v1308 = vpop.f32.mrf.mxu0
        %1309 = vmatprep.mubr.f32.mxu0 0.0
        %1310 = vmatmul.mubr.f32.gmra.mxu0 %v708
        %v1311 = vpop.f32.mrf.mxu0
        %v1312 = vadd.f32 %v479, %v1311
        %v1313 = vpop.f32.mrf.mxu0
        %1314 = vmatprep.mubr.f32.mxu0 0.0
        %1315 = vmatmul.mubr.f32.gmra.mxu0 %v711
        %v1316 = vpop.f32.mrf.mxu0
        %v1317 = vadd.f32 %v479, %v1316
        %v1318 = vpop.f32.mrf.mxu0
        %1319 = vmatprep.mubr.f32.mxu0 0.0
        %1320 = vmatmul.mubr.f32.gmra.mxu0 %v714
        %v1321 = vpop.f32.mrf.mxu0
        %v1322 = vadd.f32 %v479, %v1321
        %v1323 = vpop.f32.mrf.mxu0
        %1324 = vmatprep.mubr.f32.mxu0 0.0
        %1325 = vmatmul.mubr.f32.gmra.mxu0 %v717
        %v1326 = vpop.f32.mrf.mxu0
        %v1327 = vadd.f32 %v479, %v1326
        %v1328 = vpop.f32.mrf.mxu0
        %1329 = vmatprep.mubr.f32.mxu0 0.0
        %1330 = vmatmul.mubr.f32.gmra.mxu0 %v720
        %v1331 = vpop.f32.mrf.mxu0
        %v1332 = vadd.f32 %v479, %v1331
        %v1333 = vpop.f32.mrf.mxu0
        %1334 = vmatprep.mubr.f32.mxu0 0.0
        %1335 = vmatmul.mubr.f32.gmra.mxu0 %v723
        %v1336 = vpop.f32.mrf.mxu0
        %v1337 = vadd.f32 %v479, %v1336
        %v1338 = vpop.f32.mrf.mxu0
        %1339 = vmatprep.mubr.f32.mxu0 0.0
        %1340 = vmatmul.mubr.f32.gmra.mxu0 %v726
        %v1341 = vpop.f32.mrf.mxu0
        %v1342 = vadd.f32 %v479, %v1341
        %v1343 = vpop.f32.mrf.mxu0
        %1344 = vmatprep.mubr.f32.mxu0 0.0
        %1345 = vmatmul.mubr.f32.gmra.mxu0 %v729
        %v1346 = vpop.f32.mrf.mxu0
        %v1347 = vadd.f32 %v479, %v1346
        %v1348 = vpop.f32.mrf.mxu0
        %1349 = vmatprep.mubr.f32.mxu0 0.0
        %1350 = vmatmul.mubr.f32.gmra.mxu0 %v732
        %v1351 = vpop.f32.mrf.mxu0
        %v1352 = vadd.f32 %v479, %v1351
        %v1353 = vpop.f32.mrf.mxu0
        %1354 = vmatprep.mubr.f32.mxu0 0.0
        %1355 = vmatmul.mubr.f32.gmra.mxu0 %v735
        %v1356 = vpop.f32.mrf.mxu0
        %v1357 = vadd.f32 %v479, %v1356
        %v1358 = vpop.f32.mrf.mxu0
        %1359 = vmatprep.mubr.f32.mxu0 0.0
        %1360 = vmatmul.mubr.f32.gmra.mxu0 %v738
        %v1361 = vpop.f32.mrf.mxu0
        %v1362 = vadd.f32 %v479, %v1361
        %v1363 = vpop.f32.mrf.mxu0
        %1364 = vmatprep.mubr.f32.mxu0 0.0
        %1365 = vmatmul.mubr.f32.gmra.mxu0 %v741
        %v1366 = vpop.f32.mrf.mxu0
        %v1367 = vadd.f32 %v479, %v1366
        %v1368 = vpop.f32.mrf.mxu0
        %1369 = vmatprep.mubr.f32.mxu0 0.0
        %1370 = vmatmul.mubr.f32.gmra.mxu0 %v744
        %v1371 = vpop.f32.mrf.mxu0
        %v1372 = vadd.f32 %v479, %v1371
        %v1373 = vpop.f32.mrf.mxu0
        %1374 = vmatprep.mubr.f32.mxu0 0.0
        %1375 = vmatmul.mubr.f32.gmra.mxu0 %v747
        %v1376 = vpop.f32.mrf.mxu0
        %v1377 = vadd.f32 %v479, %v1376
        %v1378 = vpop.f32.mrf.mxu0
        %1379 = vmatprep.mubr.f32.mxu0 0.0
        %1380 = vmatmul.mubr.f32.gmra.mxu0 %v750
        %v1381 = vpop.f32.mrf.mxu0
        %v1382 = vadd.f32 %v479, %v1381
        %v1383 = vpop.f32.mrf.mxu0
        %1384 = vmatprep.mubr.f32.mxu0 0.0
        %1385 = vmatmul.mubr.f32.gmra.mxu0 %v753
        %v1386 = vpop.f32.mrf.mxu0
        %v1387 = vadd.f32 %v479, %v1386
        %v1388 = vpop.f32.mrf.mxu0
        %1389 = vmatprep.mubr.f32.mxu0 0.0
        %1390 = vmatmul.mubr.f32.gmra.mxu0 %v756
        %v1391 = vpop.f32.mrf.mxu0
        %v1392 = vadd.f32 %v479, %v1391
        %v1393 = vpop.f32.mrf.mxu0
        %1394 = vmatprep.mubr.f32.mxu0 0.0
        %1395 = vmatmul.mubr.f32.gmra.mxu0 %v759
        %v1396 = vpop.f32.mrf.mxu0
        %v1397 = vadd.f32 %v479, %v1396
        %v1398 = vpop.f32.mrf.mxu0
        %1399 = vmatprep.mubr.f32.mxu0 0.0
        %1400 = vmatmul.mubr.f32.gmra.mxu0 %v762
        %v1401 = vpop.f32.mrf.mxu0
        %v1402 = vadd.f32 %v479, %v1401
        %v1403 = vpop.f32.mrf.mxu0
        %1404 = vmatprep.mubr.f32.mxu0 0.0
        %1405 = vmatmul.mubr.f32.gmra.mxu0 %v765
        %v1406 = vpop.f32.mrf.mxu0
        %v1407 = vadd.f32 %v479, %v1406
        %v1408 = vpop.f32.mrf.mxu0
        %1409 = vmatprep.mubr.f32.mxu0 0.0
        %1410 = vmatmul.mubr.f32.gmra.mxu0 %v768
        %v1411 = vpop.f32.mrf.mxu0
        %v1412 = vadd.f32 %v479, %v1411
        %v1413 = vpop.f32.mrf.mxu0
        %1414 = vmatprep.mubr.f32.mxu0 0.0
        %1415 = vmatmul.mubr.f32.gmra.mxu0 %v771
        %v1416 = vpop.f32.mrf.mxu0
        %v1417 = vadd.f32 %v479, %v1416
        %v1418 = vpop.f32.mrf.mxu0
        %1419 = vmatprep.mubr.f32.mxu0 0.0
        %1420 = vmatmul.mubr.f32.gmra.mxu0 %v774
        %v1421 = vpop.f32.mrf.mxu0
        %v1422 = vadd.f32 %v479, %v1421
        %v1423 = vpop.f32.mrf.mxu0
        %1424 = vmatprep.mubr.f32.mxu0 0.0
        %1425 = vmatmul.mubr.f32.gmra.mxu0 %v777
        %v1426 = vpop.f32.mrf.mxu0
        %v1427 = vadd.f32 %v479, %v1426
        %v1428 = vpop.f32.mrf.mxu0
        %1429 = vmatprep.mubr.f32.mxu0 0.0
        %1430 = vmatmul.mubr.f32.gmra.mxu0 %v780
        %v1431 = vpop.f32.mrf.mxu0
        %v1432 = vadd.f32 %v479, %v1431
        %v1433 = vpop.f32.mrf.mxu0
        %1434 = vmatprep.mubr.f32.mxu0 0.0
        %1435 = vmatmul.mubr.f32.gmra.mxu0 %v783
        %v1436 = vpop.f32.mrf.mxu0
        %v1437 = vadd.f32 %v479, %v1436
        %v1438 = vpop.f32.mrf.mxu0
        %1439 = vmatprep.mubr.f32.mxu0 0.0
        %1440 = vmatmul.mubr.f32.gmra.mxu0 %v786
        %v1441 = vpop.f32.mrf.mxu0
        %v1442 = vadd.f32 %v479, %v1441
        %v1443 = vpop.f32.mrf.mxu0
        %1444 = vmatprep.mubr.f32.mxu0 0.0
        %1445 = vmatmul.mubr.f32.gmra.mxu0 %v789
        %v1446 = vpop.f32.mrf.mxu0
        %v1447 = vadd.f32 %v479, %v1446
        %v1448 = vpop.f32.mrf.mxu0
        %1449 = vmatprep.mubr.f32.mxu0 0.0
        %1450 = vmatmul.mubr.f32.gmra.mxu0 %v792
        %v1451 = vpop.f32.mrf.mxu0
        %v1452 = vadd.f32 %v479, %v1451
        %v1453 = vpop.f32.mrf.mxu0
        %1454 = vmatprep.mubr.f32.mxu0 0.0
        %1455 = vmatmul.mubr.f32.gmra.mxu0 %v795
        %v1456 = vpop.f32.mrf.mxu0
        %v1457 = vadd.f32 %v479, %v1456
        %v1458 = vpop.f32.mrf.mxu0
        %1459 = vmatprep.mubr.f32.mxu0 0.0
        %1460 = vmatmul.mubr.f32.gmra.mxu0 %v798
        %v1461 = vpop.f32.mrf.mxu0
        %v1462 = vadd.f32 %v479, %v1461
        %v1463 = vpop.f32.mrf.mxu0
        %1464 = vmatprep.mubr.f32.mxu0 0.0
        %1465 = vmatmul.mubr.f32.gmra.mxu0 %v801
        %v1466 = vpop.f32.mrf.mxu0
        %v1467 = vadd.f32 %v479, %v1466
        %v1468 = vpop.f32.mrf.mxu0
        %1469 = vmatprep.mubr.f32.mxu0 0.0
        %1470 = vmatmul.mubr.f32.gmra.mxu0 %v804
        %v1471 = vpop.f32.mrf.mxu0
        %v1472 = vadd.f32 %v479, %v1471
        %v1473 = vpop.f32.mrf.mxu0
        %1474 = vmatprep.mubr.f32.mxu0 0.0
        %1475 = vmatmul.mubr.f32.gmra.mxu0 %v807
        %v1476 = vpop.f32.mrf.mxu0
        %v1477 = vadd.f32 %v479, %v1476
        %v1478 = vpop.f32.mrf.mxu0
        %1479 = vmatprep.mubr.f32.mxu0 0.0
        %1480 = vmatmul.mubr.f32.gmra.mxu0 %v810
        %v1481 = vpop.f32.mrf.mxu0
        %v1482 = vadd.f32 %v479, %v1481
        %v1483 = vpop.f32.mrf.mxu0
        %1484 = vmatprep.mubr.f32.mxu0 0.0
        %1485 = vmatmul.mubr.f32.gmra.mxu0 %v813
        %v1486 = vpop.f32.mrf.mxu0
        %v1487 = vadd.f32 %v479, %v1486
        %v1488 = vpop.f32.mrf.mxu0
        %1489 = vmatprep.mubr.f32.mxu0 0.0
        %1490 = vmatmul.mubr.f32.gmra.mxu0 %v816
        %v1491 = vpop.f32.mrf.mxu0
        %v1492 = vadd.f32 %v479, %v1491
        %v1493 = vpop.f32.mrf.mxu0
        %1494 = vmatprep.mubr.f32.mxu0 0.0
        %1495 = vmatmul.mubr.f32.gmra.mxu0 %v819
        %v1496 = vpop.f32.mrf.mxu0
        %v1497 = vadd.f32 %v479, %v1496
        %v1498 = vpop.f32.mrf.mxu0
        %1499 = vmatprep.mubr.f32.mxu0 0.0
        %1500 = vmatmul.mubr.f32.gmra.mxu0 %v822
        %v1501 = vpop.f32.mrf.mxu0
        %v1502 = vadd.f32 %v479, %v1501
        %v1503 = vpop.f32.mrf.mxu0
        %1504 = vmatprep.mubr.f32.mxu0 0.0
        %1505 = vmatmul.mubr.f32.gmra.mxu0 %v825
        %v1506 = vpop.f32.mrf.mxu0
        %v1507 = vadd.f32 %v479, %v1506
        %v1508 = vpop.f32.mrf.mxu0
        %1509 = vmatprep.mubr.f32.mxu0 0.0
        %1510 = vmatmul.mubr.f32.gmra.mxu0 %v828
        %v1511 = vpop.f32.mrf.mxu0
        %v1512 = vadd.f32 %v479, %v1511
        %v1513 = vpop.f32.mrf.mxu0
        %1514 = vmatprep.mubr.f32.mxu0 0.0
        %1515 = vmatmul.mubr.f32.gmra.mxu0 %v831
        %v1516 = vpop.f32.mrf.mxu0
        %v1517 = vadd.f32 %v479, %v1516
        %v1518 = vpop.f32.mrf.mxu0
        %1519 = vmatprep.mubr.f32.mxu0 0.0
        %1520 = vmatmul.mubr.f32.gmra.mxu0 %v834
        %v1521 = vpop.f32.mrf.mxu0
        %v1522 = vadd.f32 %v479, %v1521
        %v1523 = vpop.f32.mrf.mxu0
        %1524 = vmatprep.mubr.f32.mxu0 0.0
        %1525 = vmatmul.mubr.f32.gmra.mxu0 %v837
        %v1526 = vpop.f32.mrf.mxu0
        %v1527 = vadd.f32 %v479, %v1526
        %v1528 = vpop.f32.mrf.mxu0
        %1529 = vmatprep.mubr.f32.mxu0 0.0
        %1530 = vmatmul.mubr.f32.gmra.mxu0 %v840
        %v1531 = vpop.f32.mrf.mxu0
        %v1532 = vadd.f32 %v479, %v1531
        %v1533 = vpop.f32.mrf.mxu0
        %1534 = vmatprep.mubr.f32.mxu0 0.0
        %1535 = vmatmul.mubr.f32.gmra.mxu0 %v843
        %v1536 = vpop.f32.mrf.mxu0
        %v1537 = vadd.f32 %v479, %v1536
        %v1538 = vpop.f32.mrf.mxu0
        %1539 = vmatprep.mubr.f32.mxu0 0.0
        %1540 = vmatmul.mubr.f32.gmra.mxu0 %v846
        %v1541 = vpop.f32.mrf.mxu0
        %v1542 = vadd.f32 %v479, %v1541
        %v1543 = vpop.f32.mrf.mxu0
        %1544 = vmatprep.mubr.f32.mxu0 0.0
        %1545 = vmatmul.mubr.f32.gmra.mxu0 %v849
        %v1546 = vpop.f32.mrf.mxu0
        %v1547 = vadd.f32 %v479, %v1546
        %v1548 = vpop.f32.mrf.mxu0
        %1549 = vmatprep.mubr.f32.mxu0 0.0
        %1550 = vmatmul.mubr.f32.gmra.mxu0 %v852
        %v1551 = vpop.f32.mrf.mxu0
        %v1552 = vadd.f32 %v479, %v1551
        %v1553 = vpop.f32.mrf.mxu0
        %1554 = vmatprep.mubr.f32.mxu0 0.0
        %1555 = vmatmul.mubr.f32.gmra.mxu0 %v855
        %v1556 = vpop.f32.mrf.mxu0
        %v1557 = vadd.f32 %v479, %v1556
        %v1558 = vpop.f32.mrf.mxu0
        %1559 = vmatprep.mubr.f32.mxu0 0.0
        %1560 = vmatmul.mubr.f32.gmra.mxu0 %v858
        %v1561 = vpop.f32.mrf.mxu0
        %v1562 = vadd.f32 %v479, %v1561
        %v1563 = vpop.f32.mrf.mxu0
        %1564 = vmatprep.mubr.f32.mxu0 0.0
        %1565 = vmatmul.mubr.f32.gmra.mxu0 %v861
        %v1566 = vpop.f32.mrf.mxu0
        %v1567 = vadd.f32 %v479, %v1566
        %v1568 = vpop.f32.mrf.mxu0
        %1569 = vmatprep.mubr.f32.mxu0 0.0
        %1570 = vmatmul.mubr.f32.gmra.mxu0 %v864
        %v1571 = vpop.f32.mrf.mxu0
        %v1572 = vadd.f32 %v479, %v1571
        %v1573 = vpop.f32.mrf.mxu0
        %1574 = vdwg.mxu0
        %v1575 = vmax.f32 %v937, 0.0
        %v1576 = vmax.f32 %v942, 0.0
        %v1577 = vmax.f32 %v947, 0.0
        %v1578 = vmax.f32 %v952, 0.0
        %v1579 = vmax.f32 %v957, 0.0
        %v1580 = vmax.f32 %v962, 0.0
        %v1581 = vmax.f32 %v967, 0.0
        %v1582 = vmax.f32 %v972, 0.0
        %v1583 = vmax.f32 %v977, 0.0
        %v1584 = vmax.f32 %v982, 0.0
        %v1585 = vmax.f32 %v987, 0.0
        %v1586 = vmax.f32 %v992, 0.0
        %v1587 = vmax.f32 %v997, 0.0
        %v1588 = vmax.f32 %v1002, 0.0
        %v1589 = vmax.f32 %v1007, 0.0
        %v1590 = vmax.f32 %v1012, 0.0
        %v1591 = vmax.f32 %v1017, 0.0
        %v1592 = vmax.f32 %v1022, 0.0
        %v1593 = vmax.f32 %v1027, 0.0
        %v1594 = vmax.f32 %v1032, 0.0
        %v1595 = vmax.f32 %v1037, 0.0
        %v1596 = vmax.f32 %v1042, 0.0
        %v1597 = vmax.f32 %v1047, 0.0
        %v1598 = vmax.f32 %v1052, 0.0
        %v1599 = vmax.f32 %v1057, 0.0
        %v1600 = vmax.f32 %v1062, 0.0
        %v1601 = vmax.f32 %v1067, 0.0
        %v1602 = vmax.f32 %v1072, 0.0
        %v1603 = vmax.f32 %v1077, 0.0
        %v1604 = vmax.f32 %v1082, 0.0
        %v1605 = vmax.f32 %v1087, 0.0
        %v1606 = vmax.f32 %v1092, 0.0
        %v1607 = vmax.f32 %v1097, 0.0
        %v1608 = vmax.f32 %v1102, 0.0
        %v1609 = vmax.f32 %v1107, 0.0
        %v1610 = vmax.f32 %v1112, 0.0
        %v1611 = vmax.f32 %v1117, 0.0
        %v1612 = vmax.f32 %v1122, 0.0
        %v1613 = vmax.f32 %v1127, 0.0
        %v1614 = vmax.f32 %v1132, 0.0
        %v1615 = vmax.f32 %v1137, 0.0
        %v1616 = vmax.f32 %v1142, 0.0
        %v1617 = vmax.f32 %v1147, 0.0
        %v1618 = vmax.f32 %v1152, 0.0
        %v1619 = vmax.f32 %v1157, 0.0
        %v1620 = vmax.f32 %v1162, 0.0
        %v1621 = vmax.f32 %v1167, 0.0
        %v1622 = vmax.f32 %v1172, 0.0
        %v1623 = vmax.f32 %v1177, 0.0
        %v1624 = vmax.f32 %v1182, 0.0
        %v1625 = vmax.f32 %v1187, 0.0
        %v1626 = vmax.f32 %v1192, 0.0
        %v1627 = vmax.f32 %v1197, 0.0
        %v1628 = vmax.f32 %v1202, 0.0
        %v1629 = vmax.f32 %v1207, 0.0
        %v1630 = vmax.f32 %v1212, 0.0
        %v1631 = vmax.f32 %v1217, 0.0
        %v1632 = vmax.f32 %v1222, 0.0
        %v1633 = vmax.f32 %v1227, 0.0
        %v1634 = vmax.f32 %v1232, 0.0
        %v1635 = vmax.f32 %v1237, 0.0
        %v1636 = vmax.f32 %v1242, 0.0
        %v1637 = vmax.f32 %v1247, 0.0
        %v1638 = vmax.f32 %v1252, 0.0
        %v1639 = vmax.f32 %v1257, 0.0
        %v1640 = vmax.f32 %v1262, 0.0
        %v1641 = vmax.f32 %v1267, 0.0
        %v1642 = vmax.f32 %v1272, 0.0
        %v1643 = vmax.f32 %v1277, 0.0
        %v1644 = vmax.f32 %v1282, 0.0
        %v1645 = vmax.f32 %v1287, 0.0
        %v1646 = vmax.f32 %v1292, 0.0
        %v1647 = vmax.f32 %v1297, 0.0
        %v1648 = vmax.f32 %v1302, 0.0
        %v1649 = vmax.f32 %v1307, 0.0
        %v1650 = vmax.f32 %v1312, 0.0
        %v1651 = vmax.f32 %v1317, 0.0
        %v1652 = vmax.f32 %v1322, 0.0
        %v1653 = vmax.f32 %v1327, 0.0
        %v1654 = vmax.f32 %v1332, 0.0
        %v1655 = vmax.f32 %v1337, 0.0
        %v1656 = vmax.f32 %v1342, 0.0
        %v1657 = vmax.f32 %v1347, 0.0
        %v1658 = vmax.f32 %v1352, 0.0
        %v1659 = vmax.f32 %v1357, 0.0
        %v1660 = vmax.f32 %v1362, 0.0
        %v1661 = vmax.f32 %v1367, 0.0
        %v1662 = vmax.f32 %v1372, 0.0
        %v1663 = vmax.f32 %v1377, 0.0
        %v1664 = vmax.f32 %v1382, 0.0
        %v1665 = vmax.f32 %v1387, 0.0
        %v1666 = vmax.f32 %v1392, 0.0
        %v1667 = vmax.f32 %v1397, 0.0
        %v1668 = vmax.f32 %v1402, 0.0
        %v1669 = vmax.f32 %v1407, 0.0
        %v1670 = vmax.f32 %v1412, 0.0
        %v1671 = vmax.f32 %v1417, 0.0
        %v1672 = vmax.f32 %v1422, 0.0
        %v1673 = vmax.f32 %v1427, 0.0
        %v1674 = vmax.f32 %v1432, 0.0
        %v1675 = vmax.f32 %v1437, 0.0
        %v1676 = vmax.f32 %v1442, 0.0
        %v1677 = vmax.f32 %v1447, 0.0
        %v1678 = vmax.f32 %v1452, 0.0
        %v1679 = vmax.f32 %v1457, 0.0
        %v1680 = vmax.f32 %v1462, 0.0
        %v1681 = vmax.f32 %v1467, 0.0
        %v1682 = vmax.f32 %v1472, 0.0
        %v1683 = vmax.f32 %v1477, 0.0
        %v1684 = vmax.f32 %v1482, 0.0
        %v1685 = vmax.f32 %v1487, 0.0
        %v1686 = vmax.f32 %v1492, 0.0
        %v1687 = vmax.f32 %v1497, 0.0
        %v1688 = vmax.f32 %v1502, 0.0
        %v1689 = vmax.f32 %v1507, 0.0
        %v1690 = vmax.f32 %v1512, 0.0
        %v1691 = vmax.f32 %v1517, 0.0
        %v1692 = vmax.f32 %v1522, 0.0
        %v1693 = vmax.f32 %v1527, 0.0
        %v1694 = vmax.f32 %v1532, 0.0
        %v1695 = vmax.f32 %v1537, 0.0
        %v1696 = vmax.f32 %v1542, 0.0
        %v1697 = vmax.f32 %v1547, 0.0
        %v1698 = vmax.f32 %v1552, 0.0
        %v1699 = vmax.f32 %v1557, 0.0
        %v1700 = vmax.f32 %v1562, 0.0
        %v1701 = vmax.f32 %v1567, 0.0
        %v1702 = vmax.f32 %v1572, 0.0
        %v1703 = vld [vmem:[#allocation7] sm:$0xff]
        %v1704 = vld [vmem:[#allocation7 + $0x8] sm:$0xff]
        %v1705 = vld [vmem:[#allocation7 + $0x10] sm:$0xff]
        %v1706 = vld [vmem:[#allocation7 + $0x18] sm:$0xff]
        %v1707 = vld [vmem:[#allocation7 + $0x20] sm:$0xff]
        %v1708 = vld [vmem:[#allocation7 + $0x28] sm:$0xff]
        %v1709 = vld [vmem:[#allocation7 + $0x30] sm:$0xff]
        %v1710 = vld [vmem:[#allocation7 + $0x38] sm:$0xff]
        %v1711 = vld [vmem:[#allocation7 + $0x40] sm:$0xff]
        %v1712 = vld [vmem:[#allocation7 + $0x48] sm:$0xff]
        %v1713 = vld [vmem:[#allocation7 + $0x50] sm:$0xff]
        %v1714 = vld [vmem:[#allocation7 + $0x58] sm:$0xff]
        %v1715 = vld [vmem:[#allocation7 + $0x60] sm:$0xff]
        %v1716 = vld [vmem:[#allocation7 + $0x68] sm:$0xff]
        %v1717 = vld [vmem:[#allocation7 + $0x70] sm:$0xff]
        %v1718 = vld [vmem:[#allocation7 + $0x78] sm:$0xff]
        %v1719 = vld [vmem:[#allocation7 + $0x80] sm:$0xff]
        %v1720 = vld [vmem:[#allocation7 + $0x88] sm:$0xff]
        %v1721 = vld [vmem:[#allocation7 + $0x90] sm:$0xff]
        %v1722 = vld [vmem:[#allocation7 + $0x98] sm:$0xff]
        %v1723 = vld [vmem:[#allocation7 + $0xa0] sm:$0xff]
        %v1724 = vld [vmem:[#allocation7 + $0xa8] sm:$0xff]
        %v1725 = vld [vmem:[#allocation7 + $0xb0] sm:$0xff]
        %v1726 = vld [vmem:[#allocation7 + $0xb8] sm:$0xff]
        %v1727 = vld [vmem:[#allocation7 + $0xc0] sm:$0xff]
        %v1728 = vld [vmem:[#allocation7 + $0xc8] sm:$0xff]
        %v1729 = vld [vmem:[#allocation7 + $0xd0] sm:$0xff]
        %v1730 = vld [vmem:[#allocation7 + $0xd8] sm:$0xff]
        %v1731 = vld [vmem:[#allocation7 + $0xe0] sm:$0xff]
        %v1732 = vld [vmem:[#allocation7 + $0xe8] sm:$0xff]
        %v1733 = vld [vmem:[#allocation7 + $0xf0] sm:$0xff]
        %v1734 = vld [vmem:[#allocation7 + $0xf8] sm:$0xff]
        %v1735 = vld [vmem:[#allocation8] sm:$0x3]
        %v1737 = vlaneseq
        %v1738 = vshrl.u32 %v1737, 7
        %v1739 = vsub.s32 0, %v1738
        %v1740 = vrot.slane %v1735, %v1739
        %v1741 = vlaneseq
        %v1742 = vshrl.u32 %v1741, 7
        %v1743 = vsub.s32 1, %v1742
        %v1744 = vrot.slane %v1735, %v1743
        %1747 = vmatprep.subr.mxu0 %v1734
        %1748 = vmatpush1.msra.mxu0 %v1733
        %1749 = vmatprep.subr.mxu0 %v1732
        %1750 = vmatpush1.msra.mxu0 %v1731
        %1751 = vmatprep.subr.mxu0 %v1730
        %1752 = vmatpush1.msra.mxu0 %v1729
        %1753 = vmatprep.subr.mxu0 %v1728
        %1754 = vmatpush1.msra.mxu0 %v1727
        %1755 = vmatprep.subr.mxu0 %v1726
        %1756 = vmatpush1.msra.mxu0 %v1725
        %1757 = vmatprep.subr.mxu0 %v1724
        %1758 = vmatpush1.msra.mxu0 %v1723
        %1759 = vmatprep.subr.mxu0 %v1722
        %1760 = vmatpush1.msra.mxu0 %v1721
        %1761 = vmatprep.subr.mxu0 %v1720
        %1762 = vmatpush1.msra.mxu0 %v1719
        %1763 = vmatprep.subr.mxu0 %v1718
        %1764 = vmatpush1.msra.mxu0 %v1717
        %1765 = vmatprep.subr.mxu0 %v1716
        %1766 = vmatpush1.msra.mxu0 %v1715
        %1767 = vmatprep.subr.mxu0 %v1714
        %1768 = vmatpush1.msra.mxu0 %v1713
        %1769 = vmatprep.subr.mxu0 %v1712
        %1770 = vmatpush1.msra.mxu0 %v1711
        %1771 = vmatprep.subr.mxu0 %v1710
        %1772 = vmatpush1.msra.mxu0 %v1709
        %1773 = vmatprep.subr.mxu0 %v1708
        %1774 = vmatpush1.msra.mxu0 %v1707
        %1775 = vmatprep.subr.mxu0 %v1706
        %1776 = vmatpush1.msra.mxu0 %v1705
        %1777 = vmatprep.subr.mxu0 %v1704
        %1778 = vmatpush1.msra.mxu0 %v1703
        %1779 = vmatprep.subr.mxu0 0.0
        %1780 = vmatpush2.msra.mxu0 0.0
        %1781 = vmatprep.subr.mxu0 0.0
        %1782 = vmatpush2.msra.mxu0 0.0
        %1783 = vmatprep.subr.mxu0 0.0
        %1784 = vmatpush2.msra.mxu0 0.0
        %1785 = vmatprep.subr.mxu0 0.0
        %1786 = vmatpush2.msra.mxu0 0.0
        %1787 = vmatprep.subr.mxu0 0.0
        %1788 = vmatpush2.msra.mxu0 0.0
        %1789 = vmatprep.subr.mxu0 0.0
        %1790 = vmatpush2.msra.mxu0 0.0
        %1791 = vmatprep.subr.mxu0 0.0
        %1792 = vmatpush2.msra.mxu0 0.0
        %1793 = vmatprep.subr.mxu0 0.0
        %1794 = vmatpush2.msra.mxu0 0.0
        %1795 = vmatprep.subr.mxu0 0.0
        %1796 = vmatpush2.msra.mxu0 0.0
        %1797 = vmatprep.subr.mxu0 0.0
        %1798 = vmatpush2.msra.mxu0 0.0
        %1799 = vmatprep.subr.mxu0 0.0
        %1800 = vmatpush2.msra.mxu0 0.0
        %1801 = vmatprep.subr.mxu0 0.0
        %1802 = vmatpush2.msra.mxu0 0.0
        %1803 = vmatprep.subr.mxu0 0.0
        %1804 = vmatpush2.msra.mxu0 0.0
        %1805 = vmatprep.subr.mxu0 0.0
        %1806 = vmatpush2.msra.mxu0 0.0
        %1807 = vmatprep.subr.mxu0 0.0
        %1808 = vmatpush2.msra.mxu0 0.0
        %1809 = vmatprep.subr.mxu0 0.0
        %1810 = vmatpush2.msra.mxu0 0.0
        %1811 = vmatprep.mubr.f32.mxu0 0.0
        %1812 = vmatmul.mubr.f32.gmra.mxu0 %v1575
        %v1813 = vpop.f32.mrf.mxu0
        %v1814 = vadd.f32 %v1740, %v1813
        %v1815 = vpop.f32.mrf.mxu0
        %v1816 = vadd.f32 %v1744, %v1815
        %1817 = vmatprep.mubr.f32.mxu0 0.0
        %1818 = vmatmul.mubr.f32.gmra.mxu0 %v1576
        %v1819 = vpop.f32.mrf.mxu0
        %v1820 = vadd.f32 %v1740, %v1819
        %v1821 = vpop.f32.mrf.mxu0
        %v1822 = vadd.f32 %v1744, %v1821
        %1823 = vmatprep.mubr.f32.mxu0 0.0
        %1824 = vmatmul.mubr.f32.gmra.mxu0 %v1577
        %v1825 = vpop.f32.mrf.mxu0
        %v1826 = vadd.f32 %v1740, %v1825
        %v1827 = vpop.f32.mrf.mxu0
        %v1828 = vadd.f32 %v1744, %v1827
        %1829 = vmatprep.mubr.f32.mxu0 0.0
        %1830 = vmatmul.mubr.f32.gmra.mxu0 %v1578
        %v1831 = vpop.f32.mrf.mxu0
        %v1832 = vadd.f32 %v1740, %v1831
        %v1833 = vpop.f32.mrf.mxu0
        %v1834 = vadd.f32 %v1744, %v1833
        %1835 = vmatprep.mubr.f32.mxu0 0.0
        %1836 = vmatmul.mubr.f32.gmra.mxu0 %v1579
        %v1837 = vpop.f32.mrf.mxu0
        %v1838 = vadd.f32 %v1740, %v1837
        %v1839 = vpop.f32.mrf.mxu0
        %v1840 = vadd.f32 %v1744, %v1839
        %1841 = vmatprep.mubr.f32.mxu0 0.0
        %1842 = vmatmul.mubr.f32.gmra.mxu0 %v1580
        %v1843 = vpop.f32.mrf.mxu0
        %v1844 = vadd.f32 %v1740, %v1843
        %v1845 = vpop.f32.mrf.mxu0
        %v1846 = vadd.f32 %v1744, %v1845
        %1847 = vmatprep.mubr.f32.mxu0 0.0
        %1848 = vmatmul.mubr.f32.gmra.mxu0 %v1581
        %v1849 = vpop.f32.mrf.mxu0
        %v1850 = vadd.f32 %v1740, %v1849
        %v1851 = vpop.f32.mrf.mxu0
        %v1852 = vadd.f32 %v1744, %v1851
        %1853 = vmatprep.mubr.f32.mxu0 0.0
        %1854 = vmatmul.mubr.f32.gmra.mxu0 %v1582
        %v1855 = vpop.f32.mrf.mxu0
        %v1856 = vadd.f32 %v1740, %v1855
        %v1857 = vpop.f32.mrf.mxu0
        %v1858 = vadd.f32 %v1744, %v1857
        %1859 = vmatprep.mubr.f32.mxu0 0.0
        %1860 = vmatmul.mubr.f32.gmra.mxu0 %v1583
        %v1861 = vpop.f32.mrf.mxu0
        %v1862 = vadd.f32 %v1740, %v1861
        %v1863 = vpop.f32.mrf.mxu0
        %v1864 = vadd.f32 %v1744, %v1863
        %1865 = vmatprep.mubr.f32.mxu0 0.0
        %1866 = vmatmul.mubr.f32.gmra.mxu0 %v1584
        %v1867 = vpop.f32.mrf.mxu0
        %v1868 = vadd.f32 %v1740, %v1867
        %v1869 = vpop.f32.mrf.mxu0
        %v1870 = vadd.f32 %v1744, %v1869
        %1871 = vmatprep.mubr.f32.mxu0 0.0
        %1872 = vmatmul.mubr.f32.gmra.mxu0 %v1585
        %v1873 = vpop.f32.mrf.mxu0
        %v1874 = vadd.f32 %v1740, %v1873
        %v1875 = vpop.f32.mrf.mxu0
        %v1876 = vadd.f32 %v1744, %v1875
        %1877 = vmatprep.mubr.f32.mxu0 0.0
        %1878 = vmatmul.mubr.f32.gmra.mxu0 %v1586
        %v1879 = vpop.f32.mrf.mxu0
        %v1880 = vadd.f32 %v1740, %v1879
        %v1881 = vpop.f32.mrf.mxu0
        %v1882 = vadd.f32 %v1744, %v1881
        %1883 = vmatprep.mubr.f32.mxu0 0.0
        %1884 = vmatmul.mubr.f32.gmra.mxu0 %v1587
        %v1885 = vpop.f32.mrf.mxu0
        %v1886 = vadd.f32 %v1740, %v1885
        %v1887 = vpop.f32.mrf.mxu0
        %v1888 = vadd.f32 %v1744, %v1887
        %1889 = vmatprep.mubr.f32.mxu0 0.0
        %1890 = vmatmul.mubr.f32.gmra.mxu0 %v1588
        %v1891 = vpop.f32.mrf.mxu0
        %v1892 = vadd.f32 %v1740, %v1891
        %v1893 = vpop.f32.mrf.mxu0
        %v1894 = vadd.f32 %v1744, %v1893
        %1895 = vmatprep.mubr.f32.mxu0 0.0
        %1896 = vmatmul.mubr.f32.gmra.mxu0 %v1589
        %v1897 = vpop.f32.mrf.mxu0
        %v1898 = vadd.f32 %v1740, %v1897
        %v1899 = vpop.f32.mrf.mxu0
        %v1900 = vadd.f32 %v1744, %v1899
        %1901 = vmatprep.mubr.f32.mxu0 0.0
        %1902 = vmatmul.mubr.f32.gmra.mxu0 %v1590
        %v1903 = vpop.f32.mrf.mxu0
        %v1904 = vadd.f32 %v1740, %v1903
        %v1905 = vpop.f32.mrf.mxu0
        %v1906 = vadd.f32 %v1744, %v1905
        %1907 = vmatprep.mubr.f32.mxu0 0.0
        %1908 = vmatmul.mubr.f32.gmra.mxu0 %v1591
        %v1909 = vpop.f32.mrf.mxu0
        %v1910 = vadd.f32 %v1740, %v1909
        %v1911 = vpop.f32.mrf.mxu0
        %v1912 = vadd.f32 %v1744, %v1911
        %1913 = vmatprep.mubr.f32.mxu0 0.0
        %1914 = vmatmul.mubr.f32.gmra.mxu0 %v1592
        %v1915 = vpop.f32.mrf.mxu0
        %v1916 = vadd.f32 %v1740, %v1915
        %v1917 = vpop.f32.mrf.mxu0
        %v1918 = vadd.f32 %v1744, %v1917
        %1919 = vmatprep.mubr.f32.mxu0 0.0
        %1920 = vmatmul.mubr.f32.gmra.mxu0 %v1593
        %v1921 = vpop.f32.mrf.mxu0
        %v1922 = vadd.f32 %v1740, %v1921
        %v1923 = vpop.f32.mrf.mxu0
        %v1924 = vadd.f32 %v1744, %v1923
        %1925 = vmatprep.mubr.f32.mxu0 0.0
        %1926 = vmatmul.mubr.f32.gmra.mxu0 %v1594
        %v1927 = vpop.f32.mrf.mxu0
        %v1928 = vadd.f32 %v1740, %v1927
        %v1929 = vpop.f32.mrf.mxu0
        %v1930 = vadd.f32 %v1744, %v1929
        %1931 = vmatprep.mubr.f32.mxu0 0.0
        %1932 = vmatmul.mubr.f32.gmra.mxu0 %v1595
        %v1933 = vpop.f32.mrf.mxu0
        %v1934 = vadd.f32 %v1740, %v1933
        %v1935 = vpop.f32.mrf.mxu0
        %v1936 = vadd.f32 %v1744, %v1935
        %1937 = vmatprep.mubr.f32.mxu0 0.0
        %1938 = vmatmul.mubr.f32.gmra.mxu0 %v1596
        %v1939 = vpop.f32.mrf.mxu0
        %v1940 = vadd.f32 %v1740, %v1939
        %v1941 = vpop.f32.mrf.mxu0
        %v1942 = vadd.f32 %v1744, %v1941
        %1943 = vmatprep.mubr.f32.mxu0 0.0
        %1944 = vmatmul.mubr.f32.gmra.mxu0 %v1597
        %v1945 = vpop.f32.mrf.mxu0
        %v1946 = vadd.f32 %v1740, %v1945
        %v1947 = vpop.f32.mrf.mxu0
        %v1948 = vadd.f32 %v1744, %v1947
        %1949 = vmatprep.mubr.f32.mxu0 0.0
        %1950 = vmatmul.mubr.f32.gmra.mxu0 %v1598
        %v1951 = vpop.f32.mrf.mxu0
        %v1952 = vadd.f32 %v1740, %v1951
        %v1953 = vpop.f32.mrf.mxu0
        %v1954 = vadd.f32 %v1744, %v1953
        %1955 = vmatprep.mubr.f32.mxu0 0.0
        %1956 = vmatmul.mubr.f32.gmra.mxu0 %v1599
        %v1957 = vpop.f32.mrf.mxu0
        %v1958 = vadd.f32 %v1740, %v1957
        %v1959 = vpop.f32.mrf.mxu0
        %v1960 = vadd.f32 %v1744, %v1959
        %1961 = vmatprep.mubr.f32.mxu0 0.0
        %1962 = vmatmul.mubr.f32.gmra.mxu0 %v1600
        %v1963 = vpop.f32.mrf.mxu0
        %v1964 = vadd.f32 %v1740, %v1963
        %v1965 = vpop.f32.mrf.mxu0
        %v1966 = vadd.f32 %v1744, %v1965
        %1967 = vmatprep.mubr.f32.mxu0 0.0
        %1968 = vmatmul.mubr.f32.gmra.mxu0 %v1601
        %v1969 = vpop.f32.mrf.mxu0
        %v1970 = vadd.f32 %v1740, %v1969
        %v1971 = vpop.f32.mrf.mxu0
        %v1972 = vadd.f32 %v1744, %v1971
        %1973 = vmatprep.mubr.f32.mxu0 0.0
        %1974 = vmatmul.mubr.f32.gmra.mxu0 %v1602
        %v1975 = vpop.f32.mrf.mxu0
        %v1976 = vadd.f32 %v1740, %v1975
        %v1977 = vpop.f32.mrf.mxu0
        %v1978 = vadd.f32 %v1744, %v1977
        %1979 = vmatprep.mubr.f32.mxu0 0.0
        %1980 = vmatmul.mubr.f32.gmra.mxu0 %v1603
        %v1981 = vpop.f32.mrf.mxu0
        %v1982 = vadd.f32 %v1740, %v1981
        %v1983 = vpop.f32.mrf.mxu0
        %v1984 = vadd.f32 %v1744, %v1983
        %1985 = vmatprep.mubr.f32.mxu0 0.0
        %1986 = vmatmul.mubr.f32.gmra.mxu0 %v1604
        %v1987 = vpop.f32.mrf.mxu0
        %v1988 = vadd.f32 %v1740, %v1987
        %v1989 = vpop.f32.mrf.mxu0
        %v1990 = vadd.f32 %v1744, %v1989
        %1991 = vmatprep.mubr.f32.mxu0 0.0
        %1992 = vmatmul.mubr.f32.gmra.mxu0 %v1605
        %v1993 = vpop.f32.mrf.mxu0
        %v1994 = vadd.f32 %v1740, %v1993
        %v1995 = vpop.f32.mrf.mxu0
        %v1996 = vadd.f32 %v1744, %v1995
        %1997 = vmatprep.mubr.f32.mxu0 0.0
        %1998 = vmatmul.mubr.f32.gmra.mxu0 %v1606
        %v1999 = vpop.f32.mrf.mxu0
        %v2000 = vadd.f32 %v1740, %v1999
        %v2001 = vpop.f32.mrf.mxu0
        %v2002 = vadd.f32 %v1744, %v2001
        %2003 = vmatprep.mubr.f32.mxu0 0.0
        %2004 = vmatmul.mubr.f32.gmra.mxu0 %v1607
        %v2005 = vpop.f32.mrf.mxu0
        %v2006 = vadd.f32 %v1740, %v2005
        %v2007 = vpop.f32.mrf.mxu0
        %v2008 = vadd.f32 %v1744, %v2007
        %2009 = vmatprep.mubr.f32.mxu0 0.0
        %2010 = vmatmul.mubr.f32.gmra.mxu0 %v1608
        %v2011 = vpop.f32.mrf.mxu0
        %v2012 = vadd.f32 %v1740, %v2011
        %v2013 = vpop.f32.mrf.mxu0
        %v2014 = vadd.f32 %v1744, %v2013
        %2015 = vmatprep.mubr.f32.mxu0 0.0
        %2016 = vmatmul.mubr.f32.gmra.mxu0 %v1609
        %v2017 = vpop.f32.mrf.mxu0
        %v2018 = vadd.f32 %v1740, %v2017
        %v2019 = vpop.f32.mrf.mxu0
        %v2020 = vadd.f32 %v1744, %v2019
        %2021 = vmatprep.mubr.f32.mxu0 0.0
        %2022 = vmatmul.mubr.f32.gmra.mxu0 %v1610
        %v2023 = vpop.f32.mrf.mxu0
        %v2024 = vadd.f32 %v1740, %v2023
        %v2025 = vpop.f32.mrf.mxu0
        %v2026 = vadd.f32 %v1744, %v2025
        %2027 = vmatprep.mubr.f32.mxu0 0.0
        %2028 = vmatmul.mubr.f32.gmra.mxu0 %v1611
        %v2029 = vpop.f32.mrf.mxu0
        %v2030 = vadd.f32 %v1740, %v2029
        %v2031 = vpop.f32.mrf.mxu0
        %v2032 = vadd.f32 %v1744, %v2031
        %2033 = vmatprep.mubr.f32.mxu0 0.0
        %2034 = vmatmul.mubr.f32.gmra.mxu0 %v1612
        %v2035 = vpop.f32.mrf.mxu0
        %v2036 = vadd.f32 %v1740, %v2035
        %v2037 = vpop.f32.mrf.mxu0
        %v2038 = vadd.f32 %v1744, %v2037
        %2039 = vmatprep.mubr.f32.mxu0 0.0
        %2040 = vmatmul.mubr.f32.gmra.mxu0 %v1613
        %v2041 = vpop.f32.mrf.mxu0
        %v2042 = vadd.f32 %v1740, %v2041
        %v2043 = vpop.f32.mrf.mxu0
        %v2044 = vadd.f32 %v1744, %v2043
        %2045 = vmatprep.mubr.f32.mxu0 0.0
        %2046 = vmatmul.mubr.f32.gmra.mxu0 %v1614
        %v2047 = vpop.f32.mrf.mxu0
        %v2048 = vadd.f32 %v1740, %v2047
        %v2049 = vpop.f32.mrf.mxu0
        %v2050 = vadd.f32 %v1744, %v2049
        %2051 = vmatprep.mubr.f32.mxu0 0.0
        %2052 = vmatmul.mubr.f32.gmra.mxu0 %v1615
        %v2053 = vpop.f32.mrf.mxu0
        %v2054 = vadd.f32 %v1740, %v2053
        %v2055 = vpop.f32.mrf.mxu0
        %v2056 = vadd.f32 %v1744, %v2055
        %2057 = vmatprep.mubr.f32.mxu0 0.0
        %2058 = vmatmul.mubr.f32.gmra.mxu0 %v1616
        %v2059 = vpop.f32.mrf.mxu0
        %v2060 = vadd.f32 %v1740, %v2059
        %v2061 = vpop.f32.mrf.mxu0
        %v2062 = vadd.f32 %v1744, %v2061
        %2063 = vmatprep.mubr.f32.mxu0 0.0
        %2064 = vmatmul.mubr.f32.gmra.mxu0 %v1617
        %v2065 = vpop.f32.mrf.mxu0
        %v2066 = vadd.f32 %v1740, %v2065
        %v2067 = vpop.f32.mrf.mxu0
        %v2068 = vadd.f32 %v1744, %v2067
        %2069 = vmatprep.mubr.f32.mxu0 0.0
        %2070 = vmatmul.mubr.f32.gmra.mxu0 %v1618
        %v2071 = vpop.f32.mrf.mxu0
        %v2072 = vadd.f32 %v1740, %v2071
        %v2073 = vpop.f32.mrf.mxu0
        %v2074 = vadd.f32 %v1744, %v2073
        %2075 = vmatprep.mubr.f32.mxu0 0.0
        %2076 = vmatmul.mubr.f32.gmra.mxu0 %v1619
        %v2077 = vpop.f32.mrf.mxu0
        %v2078 = vadd.f32 %v1740, %v2077
        %v2079 = vpop.f32.mrf.mxu0
        %v2080 = vadd.f32 %v1744, %v2079
        %2081 = vmatprep.mubr.f32.mxu0 0.0
        %2082 = vmatmul.mubr.f32.gmra.mxu0 %v1620
        %v2083 = vpop.f32.mrf.mxu0
        %v2084 = vadd.f32 %v1740, %v2083
        %v2085 = vpop.f32.mrf.mxu0
        %v2086 = vadd.f32 %v1744, %v2085
        %2087 = vmatprep.mubr.f32.mxu0 0.0
        %2088 = vmatmul.mubr.f32.gmra.mxu0 %v1621
        %v2089 = vpop.f32.mrf.mxu0
        %v2090 = vadd.f32 %v1740, %v2089
        %v2091 = vpop.f32.mrf.mxu0
        %v2092 = vadd.f32 %v1744, %v2091
        %2093 = vmatprep.mubr.f32.mxu0 0.0
        %2094 = vmatmul.mubr.f32.gmra.mxu0 %v1622
        %v2095 = vpop.f32.mrf.mxu0
        %v2096 = vadd.f32 %v1740, %v2095
        %v2097 = vpop.f32.mrf.mxu0
        %v2098 = vadd.f32 %v1744, %v2097
        %2099 = vmatprep.mubr.f32.mxu0 0.0
        %2100 = vmatmul.mubr.f32.gmra.mxu0 %v1623
        %v2101 = vpop.f32.mrf.mxu0
        %v2102 = vadd.f32 %v1740, %v2101
        %v2103 = vpop.f32.mrf.mxu0
        %v2104 = vadd.f32 %v1744, %v2103
        %2105 = vmatprep.mubr.f32.mxu0 0.0
        %2106 = vmatmul.mubr.f32.gmra.mxu0 %v1624
        %v2107 = vpop.f32.mrf.mxu0
        %v2108 = vadd.f32 %v1740, %v2107
        %v2109 = vpop.f32.mrf.mxu0
        %v2110 = vadd.f32 %v1744, %v2109
        %2111 = vmatprep.mubr.f32.mxu0 0.0
        %2112 = vmatmul.mubr.f32.gmra.mxu0 %v1625
        %v2113 = vpop.f32.mrf.mxu0
        %v2114 = vadd.f32 %v1740, %v2113
        %v2115 = vpop.f32.mrf.mxu0
        %v2116 = vadd.f32 %v1744, %v2115
        %2117 = vmatprep.mubr.f32.mxu0 0.0
        %2118 = vmatmul.mubr.f32.gmra.mxu0 %v1626
        %v2119 = vpop.f32.mrf.mxu0
        %v2120 = vadd.f32 %v1740, %v2119
        %v2121 = vpop.f32.mrf.mxu0
        %v2122 = vadd.f32 %v1744, %v2121
        %2123 = vmatprep.mubr.f32.mxu0 0.0
        %2124 = vmatmul.mubr.f32.gmra.mxu0 %v1627
        %v2125 = vpop.f32.mrf.mxu0
        %v2126 = vadd.f32 %v1740, %v2125
        %v2127 = vpop.f32.mrf.mxu0
        %v2128 = vadd.f32 %v1744, %v2127
        %2129 = vmatprep.mubr.f32.mxu0 0.0
        %2130 = vmatmul.mubr.f32.gmra.mxu0 %v1628
        %v2131 = vpop.f32.mrf.mxu0
        %v2132 = vadd.f32 %v1740, %v2131
        %v2133 = vpop.f32.mrf.mxu0
        %v2134 = vadd.f32 %v1744, %v2133
        %2135 = vmatprep.mubr.f32.mxu0 0.0
        %2136 = vmatmul.mubr.f32.gmra.mxu0 %v1629
        %v2137 = vpop.f32.mrf.mxu0
        %v2138 = vadd.f32 %v1740, %v2137
        %v2139 = vpop.f32.mrf.mxu0
        %v2140 = vadd.f32 %v1744, %v2139
        %2141 = vmatprep.mubr.f32.mxu0 0.0
        %2142 = vmatmul.mubr.f32.gmra.mxu0 %v1630
        %v2143 = vpop.f32.mrf.mxu0
        %v2144 = vadd.f32 %v1740, %v2143
        %v2145 = vpop.f32.mrf.mxu0
        %v2146 = vadd.f32 %v1744, %v2145
        %2147 = vmatprep.mubr.f32.mxu0 0.0
        %2148 = vmatmul.mubr.f32.gmra.mxu0 %v1631
        %v2149 = vpop.f32.mrf.mxu0
        %v2150 = vadd.f32 %v1740, %v2149
        %v2151 = vpop.f32.mrf.mxu0
        %v2152 = vadd.f32 %v1744, %v2151
        %2153 = vmatprep.mubr.f32.mxu0 0.0
        %2154 = vmatmul.mubr.f32.gmra.mxu0 %v1632
        %v2155 = vpop.f32.mrf.mxu0
        %v2156 = vadd.f32 %v1740, %v2155
        %v2157 = vpop.f32.mrf.mxu0
        %v2158 = vadd.f32 %v1744, %v2157
        %2159 = vmatprep.mubr.f32.mxu0 0.0
        %2160 = vmatmul.mubr.f32.gmra.mxu0 %v1633
        %v2161 = vpop.f32.mrf.mxu0
        %v2162 = vadd.f32 %v1740, %v2161
        %v2163 = vpop.f32.mrf.mxu0
        %v2164 = vadd.f32 %v1744, %v2163
        %2165 = vmatprep.mubr.f32.mxu0 0.0
        %2166 = vmatmul.mubr.f32.gmra.mxu0 %v1634
        %v2167 = vpop.f32.mrf.mxu0
        %v2168 = vadd.f32 %v1740, %v2167
        %v2169 = vpop.f32.mrf.mxu0
        %v2170 = vadd.f32 %v1744, %v2169
        %2171 = vmatprep.mubr.f32.mxu0 0.0
        %2172 = vmatmul.mubr.f32.gmra.mxu0 %v1635
        %v2173 = vpop.f32.mrf.mxu0
        %v2174 = vadd.f32 %v1740, %v2173
        %v2175 = vpop.f32.mrf.mxu0
        %v2176 = vadd.f32 %v1744, %v2175
        %2177 = vmatprep.mubr.f32.mxu0 0.0
        %2178 = vmatmul.mubr.f32.gmra.mxu0 %v1636
        %v2179 = vpop.f32.mrf.mxu0
        %v2180 = vadd.f32 %v1740, %v2179
        %v2181 = vpop.f32.mrf.mxu0
        %v2182 = vadd.f32 %v1744, %v2181
        %2183 = vmatprep.mubr.f32.mxu0 0.0
        %2184 = vmatmul.mubr.f32.gmra.mxu0 %v1637
        %v2185 = vpop.f32.mrf.mxu0
        %v2186 = vadd.f32 %v1740, %v2185
        %v2187 = vpop.f32.mrf.mxu0
        %v2188 = vadd.f32 %v1744, %v2187
        %2189 = vmatprep.mubr.f32.mxu0 0.0
        %2190 = vmatmul.mubr.f32.gmra.mxu0 %v1638
        %v2191 = vpop.f32.mrf.mxu0
        %v2192 = vadd.f32 %v1740, %v2191
        %v2193 = vpop.f32.mrf.mxu0
        %v2194 = vadd.f32 %v1744, %v2193
        %2195 = vmatprep.mubr.f32.mxu0 0.0
        %2196 = vmatmul.mubr.f32.gmra.mxu0 %v1639
        %v2197 = vpop.f32.mrf.mxu0
        %v2198 = vadd.f32 %v1740, %v2197
        %v2199 = vpop.f32.mrf.mxu0
        %v2200 = vadd.f32 %v1744, %v2199
        %2201 = vmatprep.mubr.f32.mxu0 0.0
        %2202 = vmatmul.mubr.f32.gmra.mxu0 %v1640
        %v2203 = vpop.f32.mrf.mxu0
        %v2204 = vadd.f32 %v1740, %v2203
        %v2205 = vpop.f32.mrf.mxu0
        %v2206 = vadd.f32 %v1744, %v2205
        %2207 = vmatprep.mubr.f32.mxu0 0.0
        %2208 = vmatmul.mubr.f32.gmra.mxu0 %v1641
        %v2209 = vpop.f32.mrf.mxu0
        %v2210 = vadd.f32 %v1740, %v2209
        %v2211 = vpop.f32.mrf.mxu0
        %v2212 = vadd.f32 %v1744, %v2211
        %2213 = vmatprep.mubr.f32.mxu0 0.0
        %2214 = vmatmul.mubr.f32.gmra.mxu0 %v1642
        %v2215 = vpop.f32.mrf.mxu0
        %v2216 = vadd.f32 %v1740, %v2215
        %v2217 = vpop.f32.mrf.mxu0
        %v2218 = vadd.f32 %v1744, %v2217
        %2219 = vmatprep.mubr.f32.mxu0 0.0
        %2220 = vmatmul.mubr.f32.gmra.mxu0 %v1643
        %v2221 = vpop.f32.mrf.mxu0
        %v2222 = vadd.f32 %v1740, %v2221
        %v2223 = vpop.f32.mrf.mxu0
        %v2224 = vadd.f32 %v1744, %v2223
        %2225 = vmatprep.mubr.f32.mxu0 0.0
        %2226 = vmatmul.mubr.f32.gmra.mxu0 %v1644
        %v2227 = vpop.f32.mrf.mxu0
        %v2228 = vadd.f32 %v1740, %v2227
        %v2229 = vpop.f32.mrf.mxu0
        %v2230 = vadd.f32 %v1744, %v2229
        %2231 = vmatprep.mubr.f32.mxu0 0.0
        %2232 = vmatmul.mubr.f32.gmra.mxu0 %v1645
        %v2233 = vpop.f32.mrf.mxu0
        %v2234 = vadd.f32 %v1740, %v2233
        %v2235 = vpop.f32.mrf.mxu0
        %v2236 = vadd.f32 %v1744, %v2235
        %2237 = vmatprep.mubr.f32.mxu0 0.0
        %2238 = vmatmul.mubr.f32.gmra.mxu0 %v1646
        %v2239 = vpop.f32.mrf.mxu0
        %v2240 = vadd.f32 %v1740, %v2239
        %v2241 = vpop.f32.mrf.mxu0
        %v2242 = vadd.f32 %v1744, %v2241
        %2243 = vmatprep.mubr.f32.mxu0 0.0
        %2244 = vmatmul.mubr.f32.gmra.mxu0 %v1647
        %v2245 = vpop.f32.mrf.mxu0
        %v2246 = vadd.f32 %v1740, %v2245
        %v2247 = vpop.f32.mrf.mxu0
        %v2248 = vadd.f32 %v1744, %v2247
        %2249 = vmatprep.mubr.f32.mxu0 0.0
        %2250 = vmatmul.mubr.f32.gmra.mxu0 %v1648
        %v2251 = vpop.f32.mrf.mxu0
        %v2252 = vadd.f32 %v1740, %v2251
        %v2253 = vpop.f32.mrf.mxu0
        %v2254 = vadd.f32 %v1744, %v2253
        %2255 = vmatprep.mubr.f32.mxu0 0.0
        %2256 = vmatmul.mubr.f32.gmra.mxu0 %v1649
        %v2257 = vpop.f32.mrf.mxu0
        %v2258 = vadd.f32 %v1740, %v2257
        %v2259 = vpop.f32.mrf.mxu0
        %v2260 = vadd.f32 %v1744, %v2259
        %2261 = vmatprep.mubr.f32.mxu0 0.0
        %2262 = vmatmul.mubr.f32.gmra.mxu0 %v1650
        %v2263 = vpop.f32.mrf.mxu0
        %v2264 = vadd.f32 %v1740, %v2263
        %v2265 = vpop.f32.mrf.mxu0
        %v2266 = vadd.f32 %v1744, %v2265
        %2267 = vmatprep.mubr.f32.mxu0 0.0
        %2268 = vmatmul.mubr.f32.gmra.mxu0 %v1651
        %v2269 = vpop.f32.mrf.mxu0
        %v2270 = vadd.f32 %v1740, %v2269
        %v2271 = vpop.f32.mrf.mxu0
        %v2272 = vadd.f32 %v1744, %v2271
        %2273 = vmatprep.mubr.f32.mxu0 0.0
        %2274 = vmatmul.mubr.f32.gmra.mxu0 %v1652
        %v2275 = vpop.f32.mrf.mxu0
        %v2276 = vadd.f32 %v1740, %v2275
        %v2277 = vpop.f32.mrf.mxu0
        %v2278 = vadd.f32 %v1744, %v2277
        %2279 = vmatprep.mubr.f32.mxu0 0.0
        %2280 = vmatmul.mubr.f32.gmra.mxu0 %v1653
        %v2281 = vpop.f32.mrf.mxu0
        %v2282 = vadd.f32 %v1740, %v2281
        %v2283 = vpop.f32.mrf.mxu0
        %v2284 = vadd.f32 %v1744, %v2283
        %2285 = vmatprep.mubr.f32.mxu0 0.0
        %2286 = vmatmul.mubr.f32.gmra.mxu0 %v1654
        %v2287 = vpop.f32.mrf.mxu0
        %v2288 = vadd.f32 %v1740, %v2287
        %v2289 = vpop.f32.mrf.mxu0
        %v2290 = vadd.f32 %v1744, %v2289
        %2291 = vmatprep.mubr.f32.mxu0 0.0
        %2292 = vmatmul.mubr.f32.gmra.mxu0 %v1655
        %v2293 = vpop.f32.mrf.mxu0
        %v2294 = vadd.f32 %v1740, %v2293
        %v2295 = vpop.f32.mrf.mxu0
        %v2296 = vadd.f32 %v1744, %v2295
        %2297 = vmatprep.mubr.f32.mxu0 0.0
        %2298 = vmatmul.mubr.f32.gmra.mxu0 %v1656
        %v2299 = vpop.f32.mrf.mxu0
        %v2300 = vadd.f32 %v1740, %v2299
        %v2301 = vpop.f32.mrf.mxu0
        %v2302 = vadd.f32 %v1744, %v2301
        %2303 = vmatprep.mubr.f32.mxu0 0.0
        %2304 = vmatmul.mubr.f32.gmra.mxu0 %v1657
        %v2305 = vpop.f32.mrf.mxu0
        %v2306 = vadd.f32 %v1740, %v2305
        %v2307 = vpop.f32.mrf.mxu0
        %v2308 = vadd.f32 %v1744, %v2307
        %2309 = vmatprep.mubr.f32.mxu0 0.0
        %2310 = vmatmul.mubr.f32.gmra.mxu0 %v1658
        %v2311 = vpop.f32.mrf.mxu0
        %v2312 = vadd.f32 %v1740, %v2311
        %v2313 = vpop.f32.mrf.mxu0
        %v2314 = vadd.f32 %v1744, %v2313
        %2315 = vmatprep.mubr.f32.mxu0 0.0
        %2316 = vmatmul.mubr.f32.gmra.mxu0 %v1659
        %v2317 = vpop.f32.mrf.mxu0
        %v2318 = vadd.f32 %v1740, %v2317
        %v2319 = vpop.f32.mrf.mxu0
        %v2320 = vadd.f32 %v1744, %v2319
        %2321 = vmatprep.mubr.f32.mxu0 0.0
        %2322 = vmatmul.mubr.f32.gmra.mxu0 %v1660
        %v2323 = vpop.f32.mrf.mxu0
        %v2324 = vadd.f32 %v1740, %v2323
        %v2325 = vpop.f32.mrf.mxu0
        %v2326 = vadd.f32 %v1744, %v2325
        %2327 = vmatprep.mubr.f32.mxu0 0.0
        %2328 = vmatmul.mubr.f32.gmra.mxu0 %v1661
        %v2329 = vpop.f32.mrf.mxu0
        %v2330 = vadd.f32 %v1740, %v2329
        %v2331 = vpop.f32.mrf.mxu0
        %v2332 = vadd.f32 %v1744, %v2331
        %2333 = vmatprep.mubr.f32.mxu0 0.0
        %2334 = vmatmul.mubr.f32.gmra.mxu0 %v1662
        %v2335 = vpop.f32.mrf.mxu0
        %v2336 = vadd.f32 %v1740, %v2335
        %v2337 = vpop.f32.mrf.mxu0
        %v2338 = vadd.f32 %v1744, %v2337
        %2339 = vmatprep.mubr.f32.mxu0 0.0
        %2340 = vmatmul.mubr.f32.gmra.mxu0 %v1663
        %v2341 = vpop.f32.mrf.mxu0
        %v2342 = vadd.f32 %v1740, %v2341
        %v2343 = vpop.f32.mrf.mxu0
        %v2344 = vadd.f32 %v1744, %v2343
        %2345 = vmatprep.mubr.f32.mxu0 0.0
        %2346 = vmatmul.mubr.f32.gmra.mxu0 %v1664
        %v2347 = vpop.f32.mrf.mxu0
        %v2348 = vadd.f32 %v1740, %v2347
        %v2349 = vpop.f32.mrf.mxu0
        %v2350 = vadd.f32 %v1744, %v2349
        %2351 = vmatprep.mubr.f32.mxu0 0.0
        %2352 = vmatmul.mubr.f32.gmra.mxu0 %v1665
        %v2353 = vpop.f32.mrf.mxu0
        %v2354 = vadd.f32 %v1740, %v2353
        %v2355 = vpop.f32.mrf.mxu0
        %v2356 = vadd.f32 %v1744, %v2355
        %2357 = vmatprep.mubr.f32.mxu0 0.0
        %2358 = vmatmul.mubr.f32.gmra.mxu0 %v1666
        %v2359 = vpop.f32.mrf.mxu0
        %v2360 = vadd.f32 %v1740, %v2359
        %v2361 = vpop.f32.mrf.mxu0
        %v2362 = vadd.f32 %v1744, %v2361
        %2363 = vmatprep.mubr.f32.mxu0 0.0
        %2364 = vmatmul.mubr.f32.gmra.mxu0 %v1667
        %v2365 = vpop.f32.mrf.mxu0
        %v2366 = vadd.f32 %v1740, %v2365
        %v2367 = vpop.f32.mrf.mxu0
        %v2368 = vadd.f32 %v1744, %v2367
        %2369 = vmatprep.mubr.f32.mxu0 0.0
        %2370 = vmatmul.mubr.f32.gmra.mxu0 %v1668
        %v2371 = vpop.f32.mrf.mxu0
        %v2372 = vadd.f32 %v1740, %v2371
        %v2373 = vpop.f32.mrf.mxu0
        %v2374 = vadd.f32 %v1744, %v2373
        %2375 = vmatprep.mubr.f32.mxu0 0.0
        %2376 = vmatmul.mubr.f32.gmra.mxu0 %v1669
        %v2377 = vpop.f32.mrf.mxu0
        %v2378 = vadd.f32 %v1740, %v2377
        %v2379 = vpop.f32.mrf.mxu0
        %v2380 = vadd.f32 %v1744, %v2379
        %2381 = vmatprep.mubr.f32.mxu0 0.0
        %2382 = vmatmul.mubr.f32.gmra.mxu0 %v1670
        %v2383 = vpop.f32.mrf.mxu0
        %v2384 = vadd.f32 %v1740, %v2383
        %v2385 = vpop.f32.mrf.mxu0
        %v2386 = vadd.f32 %v1744, %v2385
        %2387 = vmatprep.mubr.f32.mxu0 0.0
        %2388 = vmatmul.mubr.f32.gmra.mxu0 %v1671
        %v2389 = vpop.f32.mrf.mxu0
        %v2390 = vadd.f32 %v1740, %v2389
        %v2391 = vpop.f32.mrf.mxu0
        %v2392 = vadd.f32 %v1744, %v2391
        %2393 = vmatprep.mubr.f32.mxu0 0.0
        %2394 = vmatmul.mubr.f32.gmra.mxu0 %v1672
        %v2395 = vpop.f32.mrf.mxu0
        %v2396 = vadd.f32 %v1740, %v2395
        %v2397 = vpop.f32.mrf.mxu0
        %v2398 = vadd.f32 %v1744, %v2397
        %2399 = vmatprep.mubr.f32.mxu0 0.0
        %2400 = vmatmul.mubr.f32.gmra.mxu0 %v1673
        %v2401 = vpop.f32.mrf.mxu0
        %v2402 = vadd.f32 %v1740, %v2401
        %v2403 = vpop.f32.mrf.mxu0
        %v2404 = vadd.f32 %v1744, %v2403
        %2405 = vmatprep.mubr.f32.mxu0 0.0
        %2406 = vmatmul.mubr.f32.gmra.mxu0 %v1674
        %v2407 = vpop.f32.mrf.mxu0
        %v2408 = vadd.f32 %v1740, %v2407
        %v2409 = vpop.f32.mrf.mxu0
        %v2410 = vadd.f32 %v1744, %v2409
        %2411 = vmatprep.mubr.f32.mxu0 0.0
        %2412 = vmatmul.mubr.f32.gmra.mxu0 %v1675
        %v2413 = vpop.f32.mrf.mxu0
        %v2414 = vadd.f32 %v1740, %v2413
        %v2415 = vpop.f32.mrf.mxu0
        %v2416 = vadd.f32 %v1744, %v2415
        %2417 = vmatprep.mubr.f32.mxu0 0.0
        %2418 = vmatmul.mubr.f32.gmra.mxu0 %v1676
        %v2419 = vpop.f32.mrf.mxu0
        %v2420 = vadd.f32 %v1740, %v2419
        %v2421 = vpop.f32.mrf.mxu0
        %v2422 = vadd.f32 %v1744, %v2421
        %2423 = vmatprep.mubr.f32.mxu0 0.0
        %2424 = vmatmul.mubr.f32.gmra.mxu0 %v1677
        %v2425 = vpop.f32.mrf.mxu0
        %v2426 = vadd.f32 %v1740, %v2425
        %v2427 = vpop.f32.mrf.mxu0
        %v2428 = vadd.f32 %v1744, %v2427
        %2429 = vmatprep.mubr.f32.mxu0 0.0
        %2430 = vmatmul.mubr.f32.gmra.mxu0 %v1678
        %v2431 = vpop.f32.mrf.mxu0
        %v2432 = vadd.f32 %v1740, %v2431
        %v2433 = vpop.f32.mrf.mxu0
        %v2434 = vadd.f32 %v1744, %v2433
        %2435 = vmatprep.mubr.f32.mxu0 0.0
        %2436 = vmatmul.mubr.f32.gmra.mxu0 %v1679
        %v2437 = vpop.f32.mrf.mxu0
        %v2438 = vadd.f32 %v1740, %v2437
        %v2439 = vpop.f32.mrf.mxu0
        %v2440 = vadd.f32 %v1744, %v2439
        %2441 = vmatprep.mubr.f32.mxu0 0.0
        %2442 = vmatmul.mubr.f32.gmra.mxu0 %v1680
        %v2443 = vpop.f32.mrf.mxu0
        %v2444 = vadd.f32 %v1740, %v2443
        %v2445 = vpop.f32.mrf.mxu0
        %v2446 = vadd.f32 %v1744, %v2445
        %2447 = vmatprep.mubr.f32.mxu0 0.0
        %2448 = vmatmul.mubr.f32.gmra.mxu0 %v1681
        %v2449 = vpop.f32.mrf.mxu0
        %v2450 = vadd.f32 %v1740, %v2449
        %v2451 = vpop.f32.mrf.mxu0
        %v2452 = vadd.f32 %v1744, %v2451
        %2453 = vmatprep.mubr.f32.mxu0 0.0
        %2454 = vmatmul.mubr.f32.gmra.mxu0 %v1682
        %v2455 = vpop.f32.mrf.mxu0
        %v2456 = vadd.f32 %v1740, %v2455
        %v2457 = vpop.f32.mrf.mxu0
        %v2458 = vadd.f32 %v1744, %v2457
        %2459 = vmatprep.mubr.f32.mxu0 0.0
        %2460 = vmatmul.mubr.f32.gmra.mxu0 %v1683
        %v2461 = vpop.f32.mrf.mxu0
        %v2462 = vadd.f32 %v1740, %v2461
        %v2463 = vpop.f32.mrf.mxu0
        %v2464 = vadd.f32 %v1744, %v2463
        %2465 = vmatprep.mubr.f32.mxu0 0.0
        %2466 = vmatmul.mubr.f32.gmra.mxu0 %v1684
        %v2467 = vpop.f32.mrf.mxu0
        %v2468 = vadd.f32 %v1740, %v2467
        %v2469 = vpop.f32.mrf.mxu0
        %v2470 = vadd.f32 %v1744, %v2469
        %2471 = vmatprep.mubr.f32.mxu0 0.0
        %2472 = vmatmul.mubr.f32.gmra.mxu0 %v1685
        %v2473 = vpop.f32.mrf.mxu0
        %v2474 = vadd.f32 %v1740, %v2473
        %v2475 = vpop.f32.mrf.mxu0
        %v2476 = vadd.f32 %v1744, %v2475
        %2477 = vmatprep.mubr.f32.mxu0 0.0
        %2478 = vmatmul.mubr.f32.gmra.mxu0 %v1686
        %v2479 = vpop.f32.mrf.mxu0
        %v2480 = vadd.f32 %v1740, %v2479
        %v2481 = vpop.f32.mrf.mxu0
        %v2482 = vadd.f32 %v1744, %v2481
        %2483 = vmatprep.mubr.f32.mxu0 0.0
        %2484 = vmatmul.mubr.f32.gmra.mxu0 %v1687
        %v2485 = vpop.f32.mrf.mxu0
        %v2486 = vadd.f32 %v1740, %v2485
        %v2487 = vpop.f32.mrf.mxu0
        %v2488 = vadd.f32 %v1744, %v2487
        %2489 = vmatprep.mubr.f32.mxu0 0.0
        %2490 = vmatmul.mubr.f32.gmra.mxu0 %v1688
        %v2491 = vpop.f32.mrf.mxu0
        %v2492 = vadd.f32 %v1740, %v2491
        %v2493 = vpop.f32.mrf.mxu0
        %v2494 = vadd.f32 %v1744, %v2493
        %2495 = vmatprep.mubr.f32.mxu0 0.0
        %2496 = vmatmul.mubr.f32.gmra.mxu0 %v1689
        %v2497 = vpop.f32.mrf.mxu0
        %v2498 = vadd.f32 %v1740, %v2497
        %v2499 = vpop.f32.mrf.mxu0
        %v2500 = vadd.f32 %v1744, %v2499
        %2501 = vmatprep.mubr.f32.mxu0 0.0
        %2502 = vmatmul.mubr.f32.gmra.mxu0 %v1690
        %v2503 = vpop.f32.mrf.mxu0
        %v2504 = vadd.f32 %v1740, %v2503
        %v2505 = vpop.f32.mrf.mxu0
        %v2506 = vadd.f32 %v1744, %v2505
        %2507 = vmatprep.mubr.f32.mxu0 0.0
        %2508 = vmatmul.mubr.f32.gmra.mxu0 %v1691
        %v2509 = vpop.f32.mrf.mxu0
        %v2510 = vadd.f32 %v1740, %v2509
        %v2511 = vpop.f32.mrf.mxu0
        %v2512 = vadd.f32 %v1744, %v2511
        %2513 = vmatprep.mubr.f32.mxu0 0.0
        %2514 = vmatmul.mubr.f32.gmra.mxu0 %v1692
        %v2515 = vpop.f32.mrf.mxu0
        %v2516 = vadd.f32 %v1740, %v2515
        %v2517 = vpop.f32.mrf.mxu0
        %v2518 = vadd.f32 %v1744, %v2517
        %2519 = vmatprep.mubr.f32.mxu0 0.0
        %2520 = vmatmul.mubr.f32.gmra.mxu0 %v1693
        %v2521 = vpop.f32.mrf.mxu0
        %v2522 = vadd.f32 %v1740, %v2521
        %v2523 = vpop.f32.mrf.mxu0
        %v2524 = vadd.f32 %v1744, %v2523
        %2525 = vmatprep.mubr.f32.mxu0 0.0
        %2526 = vmatmul.mubr.f32.gmra.mxu0 %v1694
        %v2527 = vpop.f32.mrf.mxu0
        %v2528 = vadd.f32 %v1740, %v2527
        %v2529 = vpop.f32.mrf.mxu0
        %v2530 = vadd.f32 %v1744, %v2529
        %2531 = vmatprep.mubr.f32.mxu0 0.0
        %2532 = vmatmul.mubr.f32.gmra.mxu0 %v1695
        %v2533 = vpop.f32.mrf.mxu0
        %v2534 = vadd.f32 %v1740, %v2533
        %v2535 = vpop.f32.mrf.mxu0
        %v2536 = vadd.f32 %v1744, %v2535
        %2537 = vmatprep.mubr.f32.mxu0 0.0
        %2538 = vmatmul.mubr.f32.gmra.mxu0 %v1696
        %v2539 = vpop.f32.mrf.mxu0
        %v2540 = vadd.f32 %v1740, %v2539
        %v2541 = vpop.f32.mrf.mxu0
        %v2542 = vadd.f32 %v1744, %v2541
        %2543 = vmatprep.mubr.f32.mxu0 0.0
        %2544 = vmatmul.mubr.f32.gmra.mxu0 %v1697
        %v2545 = vpop.f32.mrf.mxu0
        %v2546 = vadd.f32 %v1740, %v2545
        %v2547 = vpop.f32.mrf.mxu0
        %v2548 = vadd.f32 %v1744, %v2547
        %2549 = vmatprep.mubr.f32.mxu0 0.0
        %2550 = vmatmul.mubr.f32.gmra.mxu0 %v1698
        %v2551 = vpop.f32.mrf.mxu0
        %v2552 = vadd.f32 %v1740, %v2551
        %v2553 = vpop.f32.mrf.mxu0
        %v2554 = vadd.f32 %v1744, %v2553
        %2555 = vmatprep.mubr.f32.mxu0 0.0
        %2556 = vmatmul.mubr.f32.gmra.mxu0 %v1699
        %v2557 = vpop.f32.mrf.mxu0
        %v2558 = vadd.f32 %v1740, %v2557
        %v2559 = vpop.f32.mrf.mxu0
        %v2560 = vadd.f32 %v1744, %v2559
        %2561 = vmatprep.mubr.f32.mxu0 0.0
        %2562 = vmatmul.mubr.f32.gmra.mxu0 %v1700
        %v2563 = vpop.f32.mrf.mxu0
        %v2564 = vadd.f32 %v1740, %v2563
        %v2565 = vpop.f32.mrf.mxu0
        %v2566 = vadd.f32 %v1744, %v2565
        %2567 = vmatprep.mubr.f32.mxu0 0.0
        %2568 = vmatmul.mubr.f32.gmra.mxu0 %v1701
        %v2569 = vpop.f32.mrf.mxu0
        %v2570 = vadd.f32 %v1740, %v2569
        %v2571 = vpop.f32.mrf.mxu0
        %v2572 = vadd.f32 %v1744, %v2571
        %2573 = vmatprep.mubr.f32.mxu0 0.0
        %2574 = vmatmul.mubr.f32.gmra.mxu0 %v1702
        %v2575 = vpop.f32.mrf.mxu0
        %v2576 = vadd.f32 %v1740, %v2575
        %v2577 = vpop.f32.mrf.mxu0
        %v2578 = vadd.f32 %v1744, %v2577
        %2579 = vdwg.mxu0
        %2580 = vst [vmem:[%s326] sm:$0xff] %v1814
        %2581 = vst [vmem:[%s326 + $0x8] sm:$0xff] %v1816
        %2582 = vst [vmem:[%s326 + $0x10] sm:$0xff] %v1820
        %2583 = vst [vmem:[%s326 + $0x18] sm:$0xff] %v1822
        %2584 = vst [vmem:[%s326 + $0x20] sm:$0xff] %v1826
        %2585 = vst [vmem:[%s326 + $0x28] sm:$0xff] %v1828
        %2586 = vst [vmem:[%s326 + $0x30] sm:$0xff] %v1832
        %2587 = vst [vmem:[%s326 + $0x38] sm:$0xff] %v1834
        %2588 = vst [vmem:[%s326 + $0x40] sm:$0xff] %v1838
        %2589 = vst [vmem:[%s326 + $0x48] sm:$0xff] %v1840
        %2590 = vst [vmem:[%s326 + $0x50] sm:$0xff] %v1844
        %2591 = vst [vmem:[%s326 + $0x58] sm:$0xff] %v1846
        %2592 = vst [vmem:[%s326 + $0x60] sm:$0xff] %v1850
        %2593 = vst [vmem:[%s326 + $0x68] sm:$0xff] %v1852
        %2594 = vst [vmem:[%s326 + $0x70] sm:$0xff] %v1856
        %2595 = vst [vmem:[%s326 + $0x78] sm:$0xff] %v1858
        %2596 = vst [vmem:[%s326 + $0x80] sm:$0xff] %v1862
        %2597 = vst [vmem:[%s326 + $0x88] sm:$0xff] %v1864
        %2598 = vst [vmem:[%s326 + $0x90] sm:$0xff] %v1868
        %2599 = vst [vmem:[%s326 + $0x98] sm:$0xff] %v1870
        %2600 = vst [vmem:[%s326 + $0xa0] sm:$0xff] %v1874
        %2601 = vst [vmem:[%s326 + $0xa8] sm:$0xff] %v1876
        %2602 = vst [vmem:[%s326 + $0xb0] sm:$0xff] %v1880
        %2603 = vst [vmem:[%s326 + $0xb8] sm:$0xff] %v1882
        %2604 = vst [vmem:[%s326 + $0xc0] sm:$0xff] %v1886
        %2605 = vst [vmem:[%s326 + $0xc8] sm:$0xff] %v1888
        %2606 = vst [vmem:[%s326 + $0xd0] sm:$0xff] %v1892
        %2607 = vst [vmem:[%s326 + $0xd8] sm:$0xff] %v1894
        %2608 = vst [vmem:[%s326 + $0xe0] sm:$0xff] %v1898
        %2609 = vst [vmem:[%s326 + $0xe8] sm:$0xff] %v1900
        %2610 = vst [vmem:[%s326 + $0xf0] sm:$0xff] %v1904
        %2611 = vst [vmem:[%s326 + $0xf8] sm:$0xff] %v1906
        %2612 = vst [vmem:[%s326 + $0x100] sm:$0xff] %v1910
        %2613 = vst [vmem:[%s326 + $0x108] sm:$0xff] %v1912
        %2614 = vst [vmem:[%s326 + $0x110] sm:$0xff] %v1916
        %2615 = vst [vmem:[%s326 + $0x118] sm:$0xff] %v1918
        %2616 = vst [vmem:[%s326 + $0x120] sm:$0xff] %v1922
        %2617 = vst [vmem:[%s326 + $0x128] sm:$0xff] %v1924
        %2618 = vst [vmem:[%s326 + $0x130] sm:$0xff] %v1928
        %2619 = vst [vmem:[%s326 + $0x138] sm:$0xff] %v1930
        %2620 = vst [vmem:[%s326 + $0x140] sm:$0xff] %v1934
        %2621 = vst [vmem:[%s326 + $0x148] sm:$0xff] %v1936
        %2622 = vst [vmem:[%s326 + $0x150] sm:$0xff] %v1940
        %2623 = vst [vmem:[%s326 + $0x158] sm:$0xff] %v1942
        %2624 = vst [vmem:[%s326 + $0x160] sm:$0xff] %v1946
        %2625 = vst [vmem:[%s326 + $0x168] sm:$0xff] %v1948
        %2626 = vst [vmem:[%s326 + $0x170] sm:$0xff] %v1952
        %2627 = vst [vmem:[%s326 + $0x178] sm:$0xff] %v1954
        %2628 = vst [vmem:[%s326 + $0x180] sm:$0xff] %v1958
        %2629 = vst [vmem:[%s326 + $0x188] sm:$0xff] %v1960
        %2630 = vst [vmem:[%s326 + $0x190] sm:$0xff] %v1964
        %2631 = vst [vmem:[%s326 + $0x198] sm:$0xff] %v1966
        %2632 = vst [vmem:[%s326 + $0x1a0] sm:$0xff] %v1970
        %2633 = vst [vmem:[%s326 + $0x1a8] sm:$0xff] %v1972
        %2634 = vst [vmem:[%s326 + $0x1b0] sm:$0xff] %v1976
        %2635 = vst [vmem:[%s326 + $0x1b8] sm:$0xff] %v1978
        %2636 = vst [vmem:[%s326 + $0x1c0] sm:$0xff] %v1982
        %2637 = vst [vmem:[%s326 + $0x1c8] sm:$0xff] %v1984
        %2638 = vst [vmem:[%s326 + $0x1d0] sm:$0xff] %v1988
        %2639 = vst [vmem:[%s326 + $0x1d8] sm:$0xff] %v1990
        %2640 = vst [vmem:[%s326 + $0x1e0] sm:$0xff] %v1994
        %2641 = vst [vmem:[%s326 + $0x1e8] sm:$0xff] %v1996
        %2642 = vst [vmem:[%s326 + $0x1f0] sm:$0xff] %v2000
        %2643 = vst [vmem:[%s326 + $0x1f8] sm:$0xff] %v2002
        %2644 = vst [vmem:[%s326 + $0x200] sm:$0xff] %v2006
        %2645 = vst [vmem:[%s326 + $0x208] sm:$0xff] %v2008
        %2646 = vst [vmem:[%s326 + $0x210] sm:$0xff] %v2012
        %2647 = vst [vmem:[%s326 + $0x218] sm:$0xff] %v2014
        %2648 = vst [vmem:[%s326 + $0x220] sm:$0xff] %v2018
        %2649 = vst [vmem:[%s326 + $0x228] sm:$0xff] %v2020
        %2650 = vst [vmem:[%s326 + $0x230] sm:$0xff] %v2024
        %2651 = vst [vmem:[%s326 + $0x238] sm:$0xff] %v2026
        %2652 = vst [vmem:[%s326 + $0x240] sm:$0xff] %v2030
        %2653 = vst [vmem:[%s326 + $0x248] sm:$0xff] %v2032
        %2654 = vst [vmem:[%s326 + $0x250] sm:$0xff] %v2036
        %2655 = vst [vmem:[%s326 + $0x258] sm:$0xff] %v2038
        %2656 = vst [vmem:[%s326 + $0x260] sm:$0xff] %v2042
        %2657 = vst [vmem:[%s326 + $0x268] sm:$0xff] %v2044
        %2658 = vst [vmem:[%s326 + $0x270] sm:$0xff] %v2048
        %2659 = vst [vmem:[%s326 + $0x278] sm:$0xff] %v2050
        %2660 = vst [vmem:[%s326 + $0x280] sm:$0xff] %v2054
        %2661 = vst [vmem:[%s326 + $0x288] sm:$0xff] %v2056
        %2662 = vst [vmem:[%s326 + $0x290] sm:$0xff] %v2060
        %2663 = vst [vmem:[%s326 + $0x298] sm:$0xff] %v2062
        %2664 = vst [vmem:[%s326 + $0x2a0] sm:$0xff] %v2066
        %2665 = vst [vmem:[%s326 + $0x2a8] sm:$0xff] %v2068
        %2666 = vst [vmem:[%s326 + $0x2b0] sm:$0xff] %v2072
        %2667 = vst [vmem:[%s326 + $0x2b8] sm:$0xff] %v2074
        %2668 = vst [vmem:[%s326 + $0x2c0] sm:$0xff] %v2078
        %2669 = vst [vmem:[%s326 + $0x2c8] sm:$0xff] %v2080
        %2670 = vst [vmem:[%s326 + $0x2d0] sm:$0xff] %v2084
        %2671 = vst [vmem:[%s326 + $0x2d8] sm:$0xff] %v2086
        %2672 = vst [vmem:[%s326 + $0x2e0] sm:$0xff] %v2090
        %2673 = vst [vmem:[%s326 + $0x2e8] sm:$0xff] %v2092
        %2674 = vst [vmem:[%s326 + $0x2f0] sm:$0xff] %v2096
        %2675 = vst [vmem:[%s326 + $0x2f8] sm:$0xff] %v2098
        %2676 = vst [vmem:[%s326 + $0x300] sm:$0xff] %v2102
        %2677 = vst [vmem:[%s326 + $0x308] sm:$0xff] %v2104
        %2678 = vst [vmem:[%s326 + $0x310] sm:$0xff] %v2108
        %2679 = vst [vmem:[%s326 + $0x318] sm:$0xff] %v2110
        %2680 = vst [vmem:[%s326 + $0x320] sm:$0xff] %v2114
        %2681 = vst [vmem:[%s326 + $0x328] sm:$0xff] %v2116
        %2682 = vst [vmem:[%s326 + $0x330] sm:$0xff] %v2120
        %2683 = vst [vmem:[%s326 + $0x338] sm:$0xff] %v2122
        %2684 = vst [vmem:[%s326 + $0x340] sm:$0xff] %v2126
        %2685 = vst [vmem:[%s326 + $0x348] sm:$0xff] %v2128
        %2686 = vst [vmem:[%s326 + $0x350] sm:$0xff] %v2132
        %2687 = vst [vmem:[%s326 + $0x358] sm:$0xff] %v2134
        %2688 = vst [vmem:[%s326 + $0x360] sm:$0xff] %v2138
        %2689 = vst [vmem:[%s326 + $0x368] sm:$0xff] %v2140
        %2690 = vst [vmem:[%s326 + $0x370] sm:$0xff] %v2144
        %2691 = vst [vmem:[%s326 + $0x378] sm:$0xff] %v2146
        %2692 = vst [vmem:[%s326 + $0x380] sm:$0xff] %v2150
        %2693 = vst [vmem:[%s326 + $0x388] sm:$0xff] %v2152
        %2694 = vst [vmem:[%s326 + $0x390] sm:$0xff] %v2156
        %2695 = vst [vmem:[%s326 + $0x398] sm:$0xff] %v2158
        %2696 = vst [vmem:[%s326 + $0x3a0] sm:$0xff] %v2162
        %2697 = vst [vmem:[%s326 + $0x3a8] sm:$0xff] %v2164
        %2698 = vst [vmem:[%s326 + $0x3b0] sm:$0xff] %v2168
        %2699 = vst [vmem:[%s326 + $0x3b8] sm:$0xff] %v2170
        %2700 = vst [vmem:[%s326 + $0x3c0] sm:$0xff] %v2174
        %2701 = vst [vmem:[%s326 + $0x3c8] sm:$0xff] %v2176
        %2702 = vst [vmem:[%s326 + $0x3d0] sm:$0xff] %v2180
        %2703 = vst [vmem:[%s326 + $0x3d8] sm:$0xff] %v2182
        %2704 = vst [vmem:[%s326 + $0x3e0] sm:$0xff] %v2186
        %2705 = vst [vmem:[%s326 + $0x3e8] sm:$0xff] %v2188
        %2706 = vst [vmem:[%s326 + $0x3f0] sm:$0xff] %v2192
        %2707 = vst [vmem:[%s326 + $0x3f8] sm:$0xff] %v2194
        %2708 = vst [vmem:[%s326 + $0x400] sm:$0xff] %v2198
        %2709 = vst [vmem:[%s326 + $0x408] sm:$0xff] %v2200
        %2710 = vst [vmem:[%s326 + $0x410] sm:$0xff] %v2204
        %2711 = vst [vmem:[%s326 + $0x418] sm:$0xff] %v2206
        %2712 = vst [vmem:[%s326 + $0x420] sm:$0xff] %v2210
        %2713 = vst [vmem:[%s326 + $0x428] sm:$0xff] %v2212
        %2714 = vst [vmem:[%s326 + $0x430] sm:$0xff] %v2216
        %2715 = vst [vmem:[%s326 + $0x438] sm:$0xff] %v2218
        %2716 = vst [vmem:[%s326 + $0x440] sm:$0xff] %v2222
        %2717 = vst [vmem:[%s326 + $0x448] sm:$0xff] %v2224
        %2718 = vst [vmem:[%s326 + $0x450] sm:$0xff] %v2228
        %2719 = vst [vmem:[%s326 + $0x458] sm:$0xff] %v2230
        %2720 = vst [vmem:[%s326 + $0x460] sm:$0xff] %v2234
        %2721 = vst [vmem:[%s326 + $0x468] sm:$0xff] %v2236
        %2722 = vst [vmem:[%s326 + $0x470] sm:$0xff] %v2240
        %2723 = vst [vmem:[%s326 + $0x478] sm:$0xff] %v2242
        %2724 = vst [vmem:[%s326 + $0x480] sm:$0xff] %v2246
        %2725 = vst [vmem:[%s326 + $0x488] sm:$0xff] %v2248
        %2726 = vst [vmem:[%s326 + $0x490] sm:$0xff] %v2252
        %2727 = vst [vmem:[%s326 + $0x498] sm:$0xff] %v2254
        %2728 = vst [vmem:[%s326 + $0x4a0] sm:$0xff] %v2258
        %2729 = vst [vmem:[%s326 + $0x4a8] sm:$0xff] %v2260
        %2730 = vst [vmem:[%s326 + $0x4b0] sm:$0xff] %v2264
        %2731 = vst [vmem:[%s326 + $0x4b8] sm:$0xff] %v2266
        %2732 = vst [vmem:[%s326 + $0x4c0] sm:$0xff] %v2270
        %2733 = vst [vmem:[%s326 + $0x4c8] sm:$0xff] %v2272
        %2734 = vst [vmem:[%s326 + $0x4d0] sm:$0xff] %v2276
        %2735 = vst [vmem:[%s326 + $0x4d8] sm:$0xff] %v2278
        %2736 = vst [vmem:[%s326 + $0x4e0] sm:$0xff] %v2282
        %2737 = vst [vmem:[%s326 + $0x4e8] sm:$0xff] %v2284
        %2738 = vst [vmem:[%s326 + $0x4f0] sm:$0xff] %v2288
        %2739 = vst [vmem:[%s326 + $0x4f8] sm:$0xff] %v2290
        %2740 = vst [vmem:[%s326 + $0x500] sm:$0xff] %v2294
        %2741 = vst [vmem:[%s326 + $0x508] sm:$0xff] %v2296
        %2742 = vst [vmem:[%s326 + $0x510] sm:$0xff] %v2300
        %2743 = vst [vmem:[%s326 + $0x518] sm:$0xff] %v2302
        %2744 = vst [vmem:[%s326 + $0x520] sm:$0xff] %v2306
        %2745 = vst [vmem:[%s326 + $0x528] sm:$0xff] %v2308
        %2746 = vst [vmem:[%s326 + $0x530] sm:$0xff] %v2312
        %2747 = vst [vmem:[%s326 + $0x538] sm:$0xff] %v2314
        %2748 = vst [vmem:[%s326 + $0x540] sm:$0xff] %v2318
        %2749 = vst [vmem:[%s326 + $0x548] sm:$0xff] %v2320
        %2750 = vst [vmem:[%s326 + $0x550] sm:$0xff] %v2324
        %2751 = vst [vmem:[%s326 + $0x558] sm:$0xff] %v2326
        %2752 = vst [vmem:[%s326 + $0x560] sm:$0xff] %v2330
        %2753 = vst [vmem:[%s326 + $0x568] sm:$0xff] %v2332
        %2754 = vst [vmem:[%s326 + $0x570] sm:$0xff] %v2336
        %2755 = vst [vmem:[%s326 + $0x578] sm:$0xff] %v2338
        %2756 = vst [vmem:[%s326 + $0x580] sm:$0xff] %v2342
        %2757 = vst [vmem:[%s326 + $0x588] sm:$0xff] %v2344
        %2758 = vst [vmem:[%s326 + $0x590] sm:$0xff] %v2348
        %2759 = vst [vmem:[%s326 + $0x598] sm:$0xff] %v2350
        %2760 = vst [vmem:[%s326 + $0x5a0] sm:$0xff] %v2354
        %2761 = vst [vmem:[%s326 + $0x5a8] sm:$0xff] %v2356
        %2762 = vst [vmem:[%s326 + $0x5b0] sm:$0xff] %v2360
        %2763 = vst [vmem:[%s326 + $0x5b8] sm:$0xff] %v2362
        %2764 = vst [vmem:[%s326 + $0x5c0] sm:$0xff] %v2366
        %2765 = vst [vmem:[%s326 + $0x5c8] sm:$0xff] %v2368
        %2766 = vst [vmem:[%s326 + $0x5d0] sm:$0xff] %v2372
        %2767 = vst [vmem:[%s326 + $0x5d8] sm:$0xff] %v2374
        %2768 = vst [vmem:[%s326 + $0x5e0] sm:$0xff] %v2378
        %2769 = vst [vmem:[%s326 + $0x5e8] sm:$0xff] %v2380
        %2770 = vst [vmem:[%s326 + $0x5f0] sm:$0xff] %v2384
        %2771 = vst [vmem:[%s326 + $0x5f8] sm:$0xff] %v2386
        %2772 = vst [vmem:[%s326 + $0x600] sm:$0xff] %v2390
        %2773 = vst [vmem:[%s326 + $0x608] sm:$0xff] %v2392
        %2774 = vst [vmem:[%s326 + $0x610] sm:$0xff] %v2396
        %2775 = vst [vmem:[%s326 + $0x618] sm:$0xff] %v2398
        %2776 = vst [vmem:[%s326 + $0x620] sm:$0xff] %v2402
        %2777 = vst [vmem:[%s326 + $0x628] sm:$0xff] %v2404
        %2778 = vst [vmem:[%s326 + $0x630] sm:$0xff] %v2408
        %2779 = vst [vmem:[%s326 + $0x638] sm:$0xff] %v2410
        %2780 = vst [vmem:[%s326 + $0x640] sm:$0xff] %v2414
        %2781 = vst [vmem:[%s326 + $0x648] sm:$0xff] %v2416
        %2782 = vst [vmem:[%s326 + $0x650] sm:$0xff] %v2420
        %2783 = vst [vmem:[%s326 + $0x658] sm:$0xff] %v2422
        %2784 = vst [vmem:[%s326 + $0x660] sm:$0xff] %v2426
        %2785 = vst [vmem:[%s326 + $0x668] sm:$0xff] %v2428
        %2786 = vst [vmem:[%s326 + $0x670] sm:$0xff] %v2432
        %2787 = vst [vmem:[%s326 + $0x678] sm:$0xff] %v2434
        %2788 = vst [vmem:[%s326 + $0x680] sm:$0xff] %v2438
        %2789 = vst [vmem:[%s326 + $0x688] sm:$0xff] %v2440
        %2790 = vst [vmem:[%s326 + $0x690] sm:$0xff] %v2444
        %2791 = vst [vmem:[%s326 + $0x698] sm:$0xff] %v2446
        %2792 = vst [vmem:[%s326 + $0x6a0] sm:$0xff] %v2450
        %2793 = vst [vmem:[%s326 + $0x6a8] sm:$0xff] %v2452
        %2794 = vst [vmem:[%s326 + $0x6b0] sm:$0xff] %v2456
        %2795 = vst [vmem:[%s326 + $0x6b8] sm:$0xff] %v2458
        %2796 = vst [vmem:[%s326 + $0x6c0] sm:$0xff] %v2462
        %2797 = vst [vmem:[%s326 + $0x6c8] sm:$0xff] %v2464
        %2798 = vst [vmem:[%s326 + $0x6d0] sm:$0xff] %v2468
        %2799 = vst [vmem:[%s326 + $0x6d8] sm:$0xff] %v2470
        %2800 = vst [vmem:[%s326 + $0x6e0] sm:$0xff] %v2474
        %2801 = vst [vmem:[%s326 + $0x6e8] sm:$0xff] %v2476
        %2802 = vst [vmem:[%s326 + $0x6f0] sm:$0xff] %v2480
        %2803 = vst [vmem:[%s326 + $0x6f8] sm:$0xff] %v2482
        %2804 = vst [vmem:[%s326 + $0x700] sm:$0xff] %v2486
        %2805 = vst [vmem:[%s326 + $0x708] sm:$0xff] %v2488
        %2806 = vst [vmem:[%s326 + $0x710] sm:$0xff] %v2492
        %2807 = vst [vmem:[%s326 + $0x718] sm:$0xff] %v2494
        %2808 = vst [vmem:[%s326 + $0x720] sm:$0xff] %v2498
        %2809 = vst [vmem:[%s326 + $0x728] sm:$0xff] %v2500
        %2810 = vst [vmem:[%s326 + $0x730] sm:$0xff] %v2504
        %2811 = vst [vmem:[%s326 + $0x738] sm:$0xff] %v2506
        %2812 = vst [vmem:[%s326 + $0x740] sm:$0xff] %v2510
        %2813 = vst [vmem:[%s326 + $0x748] sm:$0xff] %v2512
        %2814 = vst [vmem:[%s326 + $0x750] sm:$0xff] %v2516
        %2815 = vst [vmem:[%s326 + $0x758] sm:$0xff] %v2518
        %2816 = vst [vmem:[%s326 + $0x760] sm:$0xff] %v2522
        %2817 = vst [vmem:[%s326 + $0x768] sm:$0xff] %v2524
        %2818 = vst [vmem:[%s326 + $0x770] sm:$0xff] %v2528
        %2819 = vst [vmem:[%s326 + $0x778] sm:$0xff] %v2530
        %2820 = vst [vmem:[%s326 + $0x780] sm:$0xff] %v2534
        %2821 = vst [vmem:[%s326 + $0x788] sm:$0xff] %v2536
        %2822 = vst [vmem:[%s326 + $0x790] sm:$0xff] %v2540
        %2823 = vst [vmem:[%s326 + $0x798] sm:$0xff] %v2542
        %2824 = vst [vmem:[%s326 + $0x7a0] sm:$0xff] %v2546
        %2825 = vst [vmem:[%s326 + $0x7a8] sm:$0xff] %v2548
        %2826 = vst [vmem:[%s326 + $0x7b0] sm:$0xff] %v2552
        %2827 = vst [vmem:[%s326 + $0x7b8] sm:$0xff] %v2554
        %2828 = vst [vmem:[%s326 + $0x7c0] sm:$0xff] %v2558
        %2829 = vst [vmem:[%s326 + $0x7c8] sm:$0xff] %v2560
        %2830 = vst [vmem:[%s326 + $0x7d0] sm:$0xff] %v2564
        %2831 = vst [vmem:[%s326 + $0x7d8] sm:$0xff] %v2566
        %2832 = vst [vmem:[%s326 + $0x7e0] sm:$0xff] %v2570
        %2833 = vst [vmem:[%s326 + $0x7e8] sm:$0xff] %v2572
        %2834 = vst [vmem:[%s326 + $0x7f0] sm:$0xff] %v2576
        %2835 = vst [vmem:[%s326 + $0x7f8] sm:$0xff] %v2578
        %v2836 = vmax.f32 %v1814, %v1826
        %v2837 = vmax.f32 %v1820, %v1832
        %v2838 = vmax.f32 %v2836, %v1838
        %v2839 = vmax.f32 %v2837, %v1844
        %v2840 = vmax.f32 %v2838, %v1850
        %v2841 = vmax.f32 %v2839, %v1856
        %v2842 = vmax.f32 %v2840, %v1862
        %v2843 = vmax.f32 %v2841, %v1868
        %v2844 = vmax.f32 %v2842, %v1874
        %v2845 = vmax.f32 %v2843, %v1880
        %v2846 = vmax.f32 %v2844, %v1886
        %v2847 = vmax.f32 %v2845, %v1892
        %v2848 = vmax.f32 %v2846, %v1898
        %v2849 = vmax.f32 %v2847, %v1904
        %v2850 = vmax.f32 %v2848, %v1910
        %v2851 = vmax.f32 %v2849, %v1916
        %v2852 = vmax.f32 %v2850, %v1922
        %v2853 = vmax.f32 %v2851, %v1928
        %v2854 = vmax.f32 %v2852, %v1934
        %v2855 = vmax.f32 %v2853, %v1940
        %v2856 = vmax.f32 %v2854, %v1946
        %v2857 = vmax.f32 %v2855, %v1952
        %v2858 = vmax.f32 %v2856, %v1958
        %v2859 = vmax.f32 %v2857, %v1964
        %v2860 = vmax.f32 %v2858, %v1970
        %v2861 = vmax.f32 %v2859, %v1976
        %v2862 = vmax.f32 %v2860, %v1982
        %v2863 = vmax.f32 %v2861, %v1988
        %v2864 = vmax.f32 %v2862, %v1994
        %v2865 = vmax.f32 %v2863, %v2000
        %v2866 = vmax.f32 %v2864, %v2006
        %v2867 = vmax.f32 %v2865, %v2012
        %v2868 = vmax.f32 %v2866, %v2018
        %v2869 = vmax.f32 %v2867, %v2024
        %v2870 = vmax.f32 %v2868, %v2030
        %v2871 = vmax.f32 %v2869, %v2036
        %v2872 = vmax.f32 %v2870, %v2042
        %v2873 = vmax.f32 %v2871, %v2048
        %v2874 = vmax.f32 %v2872, %v2054
        %v2875 = vmax.f32 %v2873, %v2060
        %v2876 = vmax.f32 %v2874, %v2066
        %v2877 = vmax.f32 %v2875, %v2072
        %v2878 = vmax.f32 %v2876, %v2078
        %v2879 = vmax.f32 %v2877, %v2084
        %v2880 = vmax.f32 %v2878, %v2090
        %v2881 = vmax.f32 %v2879, %v2096
        %v2882 = vmax.f32 %v2880, %v2102
        %v2883 = vmax.f32 %v2881, %v2108
        %v2884 = vmax.f32 %v2882, %v2114
        %v2885 = vmax.f32 %v2883, %v2120
        %v2886 = vmax.f32 %v2884, %v2126
        %v2887 = vmax.f32 %v2885, %v2132
        %v2888 = vmax.f32 %v2886, %v2138
        %v2889 = vmax.f32 %v2887, %v2144
        %v2890 = vmax.f32 %v2888, %v2150
        %v2891 = vmax.f32 %v2889, %v2156
        %v2892 = vmax.f32 %v2890, %v2162
        %v2893 = vmax.f32 %v2891, %v2168
        %v2894 = vmax.f32 %v2892, %v2174
        %v2895 = vmax.f32 %v2893, %v2180
        %v2896 = vmax.f32 %v2894, %v2186
        %v2897 = vmax.f32 %v2895, %v2192
        %v2898 = vmax.f32 %v2896, %v2198
        %v2899 = vmax.f32 %v2897, %v2204
        %v2900 = vmax.f32 %v2898, %v2210
        %v2901 = vmax.f32 %v2899, %v2216
        %v2902 = vmax.f32 %v2900, %v2222
        %v2903 = vmax.f32 %v2901, %v2228
        %v2904 = vmax.f32 %v2902, %v2234
        %v2905 = vmax.f32 %v2903, %v2240
        %v2906 = vmax.f32 %v2904, %v2246
        %v2907 = vmax.f32 %v2905, %v2252
        %v2908 = vmax.f32 %v2906, %v2258
        %v2909 = vmax.f32 %v2907, %v2264
        %v2910 = vmax.f32 %v2908, %v2270
        %v2911 = vmax.f32 %v2909, %v2276
        %v2912 = vmax.f32 %v2910, %v2282
        %v2913 = vmax.f32 %v2911, %v2288
        %v2914 = vmax.f32 %v2912, %v2294
        %v2915 = vmax.f32 %v2913, %v2300
        %v2916 = vmax.f32 %v2914, %v2306
        %v2917 = vmax.f32 %v2915, %v2312
        %v2918 = vmax.f32 %v2916, %v2318
        %v2919 = vmax.f32 %v2917, %v2324
        %v2920 = vmax.f32 %v2918, %v2330
        %v2921 = vmax.f32 %v2919, %v2336
        %v2922 = vmax.f32 %v2920, %v2342
        %v2923 = vmax.f32 %v2921, %v2348
        %v2924 = vmax.f32 %v2922, %v2354
        %v2925 = vmax.f32 %v2923, %v2360
        %v2926 = vmax.f32 %v2924, %v2366
        %v2927 = vmax.f32 %v2925, %v2372
        %v2928 = vmax.f32 %v2926, %v2378
        %v2929 = vmax.f32 %v2927, %v2384
        %v2930 = vmax.f32 %v2928, %v2390
        %v2931 = vmax.f32 %v2929, %v2396
        %v2932 = vmax.f32 %v2930, %v2402
        %v2933 = vmax.f32 %v2931, %v2408
        %v2934 = vmax.f32 %v2932, %v2414
        %v2935 = vmax.f32 %v2933, %v2420
        %v2936 = vmax.f32 %v2934, %v2426
        %v2937 = vmax.f32 %v2935, %v2432
        %v2938 = vmax.f32 %v2936, %v2438
        %v2939 = vmax.f32 %v2937, %v2444
        %v2940 = vmax.f32 %v2938, %v2450
        %v2941 = vmax.f32 %v2939, %v2456
        %v2942 = vmax.f32 %v2940, %v2462
        %v2943 = vmax.f32 %v2941, %v2468
        %v2944 = vmax.f32 %v2942, %v2474
        %v2945 = vmax.f32 %v2943, %v2480
        %v2946 = vmax.f32 %v2944, %v2486
        %v2947 = vmax.f32 %v2945, %v2492
        %v2948 = vmax.f32 %v2946, %v2498
        %v2949 = vmax.f32 %v2947, %v2504
        %v2950 = vmax.f32 %v2948, %v2510
        %v2951 = vmax.f32 %v2949, %v2516
        %v2952 = vmax.f32 %v2950, %v2522
        %v2953 = vmax.f32 %v2951, %v2528
        %v2954 = vmax.f32 %v2952, %v2534
        %v2955 = vmax.f32 %v2953, %v2540
        %v2956 = vmax.f32 %v2954, %v2546
        %v2957 = vmax.f32 %v2955, %v2552
        %v2958 = vmax.f32 %v2956, %v2558
        %v2959 = vmax.f32 %v2957, %v2564
        %v2960 = vmax.f32 %v2958, %v2570
        %v2961 = vmax.f32 %v2959, %v2576
        %v2962 = vmax.f32 %v2960, %v2961
        %v2963 = vrot.slane %v2962, 4
        %v2964 = vmax.f32 %v2962, %v2963
        %v2965 = vrot.slane %v2964, 2
        %v2966 = vmax.f32 %v2964, %v2965
        %v2967 = vrot.slane %v2966, 1
        %v2968 = vmax.f32 %v2966, %v2967
        %v2969 = vmax.f32 %v1816, %v1828
        %v2970 = vmax.f32 %v1822, %v1834
        %v2971 = vmax.f32 %v2969, %v1840
        %v2972 = vmax.f32 %v2970, %v1846
        %v2973 = vmax.f32 %v2971, %v1852
        %v2974 = vmax.f32 %v2972, %v1858
        %v2975 = vmax.f32 %v2973, %v1864
        %v2976 = vmax.f32 %v2974, %v1870
        %v2977 = vmax.f32 %v2975, %v1876
        %v2978 = vmax.f32 %v2976, %v1882
        %v2979 = vmax.f32 %v2977, %v1888
        %v2980 = vmax.f32 %v2978, %v1894
        %v2981 = vmax.f32 %v2979, %v1900
        %v2982 = vmax.f32 %v2980, %v1906
        %v2983 = vmax.f32 %v2981, %v1912
        %v2984 = vmax.f32 %v2982, %v1918
        %v2985 = vmax.f32 %v2983, %v1924
        %v2986 = vmax.f32 %v2984, %v1930
        %v2987 = vmax.f32 %v2985, %v1936
        %v2988 = vmax.f32 %v2986, %v1942
        %v2989 = vmax.f32 %v2987, %v1948
        %v2990 = vmax.f32 %v2988, %v1954
        %v2991 = vmax.f32 %v2989, %v1960
        %v2992 = vmax.f32 %v2990, %v1966
        %v2993 = vmax.f32 %v2991, %v1972
        %v2994 = vmax.f32 %v2992, %v1978
        %v2995 = vmax.f32 %v2993, %v1984
        %v2996 = vmax.f32 %v2994, %v1990
        %v2997 = vmax.f32 %v2995, %v1996
        %v2998 = vmax.f32 %v2996, %v2002
        %v2999 = vmax.f32 %v2997, %v2008
        %v3000 = vmax.f32 %v2998, %v2014
        %v3001 = vmax.f32 %v2999, %v2020
        %v3002 = vmax.f32 %v3000, %v2026
        %v3003 = vmax.f32 %v3001, %v2032
        %v3004 = vmax.f32 %v3002, %v2038
        %v3005 = vmax.f32 %v3003, %v2044
        %v3006 = vmax.f32 %v3004, %v2050
        %v3007 = vmax.f32 %v3005, %v2056
        %v3008 = vmax.f32 %v3006, %v2062
        %v3009 = vmax.f32 %v3007, %v2068
        %v3010 = vmax.f32 %v3008, %v2074
        %v3011 = vmax.f32 %v3009, %v2080
        %v3012 = vmax.f32 %v3010, %v2086
        %v3013 = vmax.f32 %v3011, %v2092
        %v3014 = vmax.f32 %v3012, %v2098
        %v3015 = vmax.f32 %v3013, %v2104
        %v3016 = vmax.f32 %v3014, %v2110
        %v3017 = vmax.f32 %v3015, %v2116
        %v3018 = vmax.f32 %v3016, %v2122
        %v3019 = vmax.f32 %v3017, %v2128
        %v3020 = vmax.f32 %v3018, %v2134
        %v3021 = vmax.f32 %v3019, %v2140
        %v3022 = vmax.f32 %v3020, %v2146
        %v3023 = vmax.f32 %v3021, %v2152
        %v3024 = vmax.f32 %v3022, %v2158
        %v3025 = vmax.f32 %v3023, %v2164
        %v3026 = vmax.f32 %v3024, %v2170
        %v3027 = vmax.f32 %v3025, %v2176
        %v3028 = vmax.f32 %v3026, %v2182
        %v3029 = vmax.f32 %v3027, %v2188
        %v3030 = vmax.f32 %v3028, %v2194
        %v3031 = vmax.f32 %v3029, %v2200
        %v3032 = vmax.f32 %v3030, %v2206
        %v3033 = vmax.f32 %v3031, %v2212
        %v3034 = vmax.f32 %v3032, %v2218
        %v3035 = vmax.f32 %v3033, %v2224
        %v3036 = vmax.f32 %v3034, %v2230
        %v3037 = vmax.f32 %v3035, %v2236
        %v3038 = vmax.f32 %v3036, %v2242
        %v3039 = vmax.f32 %v3037, %v2248
        %v3040 = vmax.f32 %v3038, %v2254
        %v3041 = vmax.f32 %v3039, %v2260
        %v3042 = vmax.f32 %v3040, %v2266
        %v3043 = vmax.f32 %v3041, %v2272
        %v3044 = vmax.f32 %v3042, %v2278
        %v3045 = vmax.f32 %v3043, %v2284
        %v3046 = vmax.f32 %v3044, %v2290
        %v3047 = vmax.f32 %v3045, %v2296
        %v3048 = vmax.f32 %v3046, %v2302
        %v3049 = vmax.f32 %v3047, %v2308
        %v3050 = vmax.f32 %v3048, %v2314
        %v3051 = vmax.f32 %v3049, %v2320
        %v3052 = vmax.f32 %v3050, %v2326
        %v3053 = vmax.f32 %v3051, %v2332
        %v3054 = vmax.f32 %v3052, %v2338
        %v3055 = vmax.f32 %v3053, %v2344
        %v3056 = vmax.f32 %v3054, %v2350
        %v3057 = vmax.f32 %v3055, %v2356
        %v3058 = vmax.f32 %v3056, %v2362
        %v3059 = vmax.f32 %v3057, %v2368
        %v3060 = vmax.f32 %v3058, %v2374
        %v3061 = vmax.f32 %v3059, %v2380
        %v3062 = vmax.f32 %v3060, %v2386
        %v3063 = vmax.f32 %v3061, %v2392
        %v3064 = vmax.f32 %v3062, %v2398
        %v3065 = vmax.f32 %v3063, %v2404
        %v3066 = vmax.f32 %v3064, %v2410
        %v3067 = vmax.f32 %v3065, %v2416
        %v3068 = vmax.f32 %v3066, %v2422
        %v3069 = vmax.f32 %v3067, %v2428
        %v3070 = vmax.f32 %v3068, %v2434
        %v3071 = vmax.f32 %v3069, %v2440
        %v3072 = vmax.f32 %v3070, %v2446
        %v3073 = vmax.f32 %v3071, %v2452
        %v3074 = vmax.f32 %v3072, %v2458
        %v3075 = vmax.f32 %v3073, %v2464
        %v3076 = vmax.f32 %v3074, %v2470
        %v3077 = vmax.f32 %v3075, %v2476
        %v3078 = vmax.f32 %v3076, %v2482
        %v3079 = vmax.f32 %v3077, %v2488
        %v3080 = vmax.f32 %v3078, %v2494
        %v3081 = vmax.f32 %v3079, %v2500
        %v3082 = vmax.f32 %v3080, %v2506
        %v3083 = vmax.f32 %v3081, %v2512
        %v3084 = vmax.f32 %v3082, %v2518
        %v3085 = vmax.f32 %v3083, %v2524
        %v3086 = vmax.f32 %v3084, %v2530
        %v3087 = vmax.f32 %v3085, %v2536
        %v3088 = vmax.f32 %v3086, %v2542
        %v3089 = vmax.f32 %v3087, %v2548
        %v3090 = vmax.f32 %v3088, %v2554
        %v3091 = vmax.f32 %v3089, %v2560
        %v3092 = vmax.f32 %v3090, %v2566
        %v3093 = vmax.f32 %v3091, %v2572
        %v3094 = vmax.f32 %v3092, %v2578
        %v3095 = vmax.f32 %v3093, %v3094
        %v3096 = vrot.slane %v3095, 4
        %v3097 = vmax.f32 %v3095, %v3096
        %v3098 = vrot.slane %v3097, 2
        %v3099 = vmax.f32 %v3097, %v3098
        %v3100 = vrot.slane %v3099, 1
        %v3101 = vmax.f32 %v3099, %v3100
        %p3102 = scmp.eq.s32.totalorder %s32, 0
        // Predicated region
        $region57: #{tpu_custom_call.1} parent=39 // pred_check
          %p3103 = pneg %p3102
        $region58: #{tpu_custom_call.1} parent=39 // pred_check_branch
          %3105 = sbr.rel (%p3103) target = $region60
        $region59: #{tpu_custom_call.1} parent=39 // pred_region
          %v3108 = vcombine.low %v2968, %v3101
          %v3110 = vunpack.c.l.s4 1966171168
          %v3111 = vunpack.c.0.s8 %v3110
          %v3112 = vlaneseq
          %v3113 = vshrl.u32 %v3112, 7
          %v3114 = vsub.s32 %v3111, %v3113
          %v3115 = vrot.slane %v3108, %v3114
          %v3117 = vunpack.c.l.s4 1966171168
          %v3118 = vunpack.c.0.s8 %v3117
          %v3119 = vlaneseq
          %v3120 = vshrl.u32 %v3119, 7
          %v3121 = vsub.s32 %v3118, %v3120
          %v3122 = vrot.slane %v3115, %v3121
          %v3124 = vlaneseq
          %vm3125 = vcmp.ge.s32.totalorder %v3124, 0
          %vm3126 = vcmp.lt.s32.totalorder %v3124, 256
          %vm3127 = vmand %vm3125, %vm3126
          %3128 = vst.msk [vmem:[%s333] sm:$0x3] %vm3127, %v3122
        $region60: #{tpu_custom_call.1} parent=39 // pred_fallthru
          _
        %p3129 = scmp.gt.s32.totalorder %s32, 0
        // Predicated region
        $region61: #{tpu_custom_call.1} parent=39 // pred_check
          %p3130 = pneg %p3129
        $region62: #{tpu_custom_call.1} parent=39 // pred_check_branch
          %3132 = sbr.rel (%p3130) target = $region64
        $region63: #{tpu_custom_call.1} parent=39 // pred_region
          %v3133 = vld [vmem:[%s333] sm:$0x3]
          %v3136 = vcombine.low %v2968, %v3101
          %v3138 = vunpack.c.l.s4 1966171168
          %v3139 = vunpack.c.0.s8 %v3138
          %v3140 = vlaneseq
          %v3141 = vshrl.u32 %v3140, 7
          %v3142 = vsub.s32 %v3139, %v3141
          %v3143 = vrot.slane %v3136, %v3142
          %v3145 = vunpack.c.l.s4 1966171168
          %v3146 = vunpack.c.0.s8 %v3145
          %v3147 = vlaneseq
          %v3148 = vshrl.u32 %v3147, 7
          %v3149 = vsub.s32 %v3146, %v3148
          %v3150 = vrot.slane %v3143, %v3149
          %v3152 = vmax.f32 %v3133, %v3150
          %v3153 = vlaneseq
          %vm3154 = vcmp.ge.s32.totalorder %v3153, 0
          %vm3155 = vcmp.lt.s32.totalorder %v3153, 256
          %vm3156 = vmand %vm3154, %vm3155
          %3157 = vst.msk [vmem:[%s333] sm:$0x3] %vm3156, %v3152
        $region64: #{tpu_custom_call.1} parent=39 // pred_fallthru
          _
        %s3158 = sand.u32 %s161, 1
        %s3159 = scalar_lea.sflag [#allocation4], %s3158
        %s3160 = sand.u32 %s161, 1
        %s3161 = smul.addr %s3160, 2048
        %s3162 = scalar_lea.vmem [#allocation10], %s3161
        %s3163 = sand.u32 %s187, 1
        %s3164 = scalar_lea.sflag [#allocation12], %s3163
        %s3165 = sand.u32 %s187, 1
        %s3166 = smul.addr %s3165, 2
        %s3167 = scalar_lea.vmem [#allocation11], %s3166
        // Predicated region
        $region65: #{tpu_custom_call.1} parent=39 // pred_check
          %p3168 = pneg %p171
        $region66: #{tpu_custom_call.1} parent=39 // pred_check_branch
          %3170 = sbr.rel (%p3168) target = $region68
        $region67: #{tpu_custom_call.1} parent=39 // pred_region
          %s3171 = smul.u32 128, %s32
          %s3173 = ssub.s32 32768, 32768
          %3174 = vsyncadd %s3159, %s3173
          %s3175 = smul.addr %s3171, 2
          %s3176 = smul.addr %s31, 512
          %s3177 = sadd.s32 %s3175, %s3176
          %s3178 = smul.addr %s3177, 128
          %s3179 = scalar_lea.hbm %s5, %s3178
          %s3180 = sshll.u32 %s3162, 4
          %s3181 = int_to_ptr.vmem [resolvable:$true] %s3180
          %3186 = dma.vmem_to_hbm [thread:$0]  %s3181, 32768, %s3179, %s3159, 256, 256, 16
        $region68: #{tpu_custom_call.1} parent=39 // pred_fallthru
          _
        // Predicated region
        $region69: #{tpu_custom_call.1} parent=39 // pred_check
          %p3187 = pneg %p197
        $region70: #{tpu_custom_call.1} parent=39 // pred_check_branch
          %3189 = sbr.rel (%p3187) target = $region72
        $region71: #{tpu_custom_call.1} parent=39 // pred_region
          %s3191 = ssub.s32 32, 32
          %3192 = vsyncadd %s3164, %s3191
          %s3193 = smul.addr %s31, 2
          %s3194 = smul.addr %s3193, 16
          %s3195 = scalar_lea.hbm %s6, %s3194
          %s3197 = sshll.u32 %s3167, 4
          %s3198 = int_to_ptr.vmem [resolvable:$true] %s3197
          %3200 = dma.vmem_to_hbm [thread:$0]  %s3198, 32, %s3195, %s3164
        $region72: #{tpu_custom_call.1} parent=39 // pred_fallthru
          _
      $region40: #{tpu_custom_call.1} parent=5 // pred_fallthru
        _
      %p3201 = scmp.le.s32.totalorder 2, %s22
      // Predicated region
      $region73: #{tpu_custom_call.1} parent=5 // pred_check
        %p3202 = pneg %p3201
      $region74: #{tpu_custom_call.1} parent=5 // pred_check_branch
        %3204 = sbr.rel (%p3202) target = $region76
      $region75: #{tpu_custom_call.1} parent=5 // pred_region
        %s3205 = ssub.s32 %s22, 2
        // Predicated region
        $region77: #{tpu_custom_call.1} parent=75 // pred_check
          %p3206 = pneg %p177
        $region78: #{tpu_custom_call.1} parent=75 // pred_check_branch
          %3208 = sbr.rel (%p3206) target = $region80
        $region79: #{tpu_custom_call.1} parent=75 // pred_region
          %s3209 = sand.u32 %s162, 1
          %s3210 = scalar_lea.sflag [#allocation4], %s3209
          %s3211 = sand.u32 %s162, 1
          %s3212 = smul.addr %s3211, 2048
          %s3213 = scalar_lea.vmem [#allocation10], %s3212
          %3214 = dma.done %s3210, 32768
        $region80: #{tpu_custom_call.1} parent=75 // pred_fallthru
          _
        // Predicated region
        $region81: #{tpu_custom_call.1} parent=75 // pred_check
          %p3215 = pneg %p203
        $region82: #{tpu_custom_call.1} parent=75 // pred_check_branch
          %3217 = sbr.rel (%p3215) target = $region84
        $region83: #{tpu_custom_call.1} parent=75 // pred_region
          %s3218 = sand.u32 %s188, 1
          %s3219 = scalar_lea.sflag [#allocation12], %s3218
          %s3220 = sand.u32 %s188, 1
          %s3221 = smul.addr %s3220, 2
          %s3222 = scalar_lea.vmem [#allocation11], %s3221
          %3223 = dma.done %s3219, 32
        $region84: #{tpu_custom_call.1} parent=75 // pred_fallthru
          _
      $region76: #{tpu_custom_call.1} parent=5 // pred_fallthru
        _
    $region6: #{tpu_custom_call.1} parent=1 // loop_footer
      %s26 = sadd.s32 1, %s22
    $region7: #{tpu_custom_call.1} parent=1 // loop_footer_branch
      %21 = sbr.rel target = $region3
    $region8: #{tpu_custom_call.1} parent=1 // loop_exit
      _
    %3224 = vsyncpa [#allocation3], 1
    %s3225 = scalar_lea.sflag [#allocation3], 1
    %3226 = vsyncpa %s3225, 1
    %3227 = vsyncpa [#allocation6], 1
    %3228 = vsyncpa [#allocation9], 1
    %3229 = vsyncpa [#allocation4], 1
    %s3230 = scalar_lea.sflag [#allocation4], 1
    %3231 = vsyncpa %s3230, 1
    %3232 = vsyncpa [#allocation12], 1
    %s3233 = scalar_lea.sflag [#allocation12], 1
    %3234 = vsyncpa %s3233, 1

</llo_original>
